<compile_context>
chip_gen: v7x
topology: tpu7x:2x2x1
jax: 0.10.0
libtpu: 0.0.40
codegen_flags: <defaults>
</compile_context>

<pallas_src>
import numpy as np
import jax
import jax.numpy as jnp
from jax.experimental import pallas as pl
from jax.experimental.pallas import tpu as pltpu

# ----- small, module-consistent configuration ---------------------------------
NUM_CLASSES = 10
DIMS = 32                        # latent noise dimension
IMG_SHAPE = (1, 8, 8)            # (C, H, W) -> prod = 64
BATCH = 8
LRELU_SLOPE = 0.2
BN_EPS = 0.8                     # BatchNorm1d(features, 0.8) -> 0.8 is eps

D_IN = DIMS + NUM_CLASSES        # 42
D_IN_PAD = 128                   # zero-padded K for a lane-dense first matmul
P_OUT = int(np.prod(IMG_SHAPE))  # 64
P_OUT_PAD = 128                  # zero-padded head width for unmasked stores

# Packed side-parameter layout: every boundary is a multiple of 128 lanes, so
# the in-kernel static slices are lane-aligned zero-cost views.
SIDE_LAYOUT = (("b1", 128), ("b2", 256), ("g2", 256), ("be2", 256),
               ("b3", 512), ("g3", 512), ("be3", 512),
               ("b4", 1024), ("g4", 1024), ("be4", 1024),
               ("b5", P_OUT_PAD))
SIDE_OFF = {}
_off = 0
for _name, _n in SIDE_LAYOUT:
    SIDE_OFF[_name] = (_off, _off + _n)
    _off += _n
SIDE_TOTAL = _off                # 5632 = 44 * 128


# ----- kernel ------------------------------------------------------------------
def generator_kernel(x_ref, w1_ref, w2_ref, w3_ref, w4_ref, w5_ref,
                     side_ref, out_ref):
    def side(name):
        lo, hi = SIDE_OFF[name]
        return side_ref[:, lo:hi]          # (1, n) static lane-aligned view

    def dot_bf16(a_f32, w_ref):
        # bf16 x bf16 -> f32: down-cast only at the MXU input; activation
        # chain (LeakyReLU / BatchNorm / Tanh) stays f32.
        return jnp.dot(a_f32.astype(jnp.bfloat16), w_ref[...],
                       preferred_element_type=jnp.float32)

    def lrelu(x):
        return jnp.where(x > 0, x, LRELU_SLOPE * x)

    def bn_lrelu(x, gamma, beta):
        # training-mode BatchNorm1d over the (full) batch of this grid step:
        # single reduction pass, gamma*rsqrt(var+eps) folded into one scale.
        mean = jnp.mean(x, axis=0, keepdims=True)
        ex2 = jnp.mean(x * x, axis=0, keepdims=True)
        var = ex2 - mean * mean
        scale = gamma * jax.lax.rsqrt(var + BN_EPS)
        y = x * scale + (beta - mean * scale)
        return lrelu(y)

    # --- block 1: Linear(dims+nc, 128) (input pre-concatenated & zero-padded) -
    h = lrelu(dot_bf16(x_ref[...], w1_ref) + side("b1"))
    # --- block 2: Linear(128, 256) + BN + LeakyReLU ---------------------------
    h = bn_lrelu(dot_bf16(h, w2_ref) + side("b2"), side("g2"), side("be2"))
    # --- block 3: Linear(256, 512) + BN + LeakyReLU ---------------------------
    h = bn_lrelu(dot_bf16(h, w3_ref) + side("b3"), side("g3"), side("be3"))
    # --- block 4: Linear(512, 1024) + BN + LeakyReLU --------------------------
    h = bn_lrelu(dot_bf16(h, w4_ref) + side("b4"), side("g4"), side("be4"))
    # --- head: Linear(1024, prod(shape)) + Tanh (padded lane-dense to 128) ----
    out_ref[...] = jnp.tanh(dot_bf16(h, w5_ref) + side("b5"))


# ----- parameters ---------------------------------------------------------------
def make_params(key):
    """Deterministic synthetic f32 parameters, shapes match nn.Module __init__."""
    def linear(k, fan_in, fan_out):
        k1, k2 = jax.random.split(k)
        bound = 1.0 / np.sqrt(fan_in)
        w = jax.random.uniform(k1, (fan_in, fan_out), jnp.float32, -bound, bound)
        b = jax.random.uniform(k2, (1, fan_out), jnp.float32, -bound, bound)
        return w, b

    keys = jax.random.split(key, 6)
    p = {}
    p["emb"] = jax.random.normal(keys[0], (NUM_CLASSES, NUM_CLASSES), jnp.float32)
    p["w1"], p["b1"] = linear(keys[1], D_IN, 128)
    p["w2"], p["b2"] = linear(keys[2], 128, 256)
    p["w3"], p["b3"] = linear(keys[3], 256, 512)
    p["w4"], p["b4"] = linear(keys[4], 512, 1024)
    p["w5"], p["b5"] = linear(keys[5], 1024, P_OUT)
    # BatchNorm affine params (PyTorch default init: gamma=1, beta=0)
    for name, n in (("2", 256), ("3", 512), ("4", 1024)):
        p["g" + name] = jnp.ones((1, n), jnp.float32)
        p["be" + name] = jnp.zeros((1, n), jnp.float32)
    return p


def prep_params(p):
    """Kernel-side params: bf16 weights (w1/w5 zero-padded lane-dense) and one
    packed f32 side array holding all biases / BN gammas / betas."""
    dp = {"emb": p["emb"]}

    w1p = jnp.zeros((D_IN_PAD, 128), jnp.float32).at[:D_IN, :].set(p["w1"])
    dp["w1"] = w1p.astype(jnp.bfloat16)
    dp["w2"] = p["w2"].astype(jnp.bfloat16)
    dp["w3"] = p["w3"].astype(jnp.bfloat16)
    dp["w4"] = p["w4"].astype(jnp.bfloat16)
    w5p = jnp.zeros((1024, P_OUT_PAD), jnp.float32).at[:, :P_OUT].set(p["w5"])
    dp["w5"] = w5p.astype(jnp.bfloat16)

    b5p = jnp.zeros((1, P_OUT_PAD), jnp.float32).at[:, :P_OUT].set(p["b5"])
    side_src = {"b1": p["b1"], "b2": p["b2"], "g2": p["g2"], "be2": p["be2"],
                "b3": p["b3"], "g3": p["g3"], "be3": p["be3"],
                "b4": p["b4"], "g4": p["g4"], "be4": p["be4"], "b5": b5p}
    dp["side"] = jnp.concatenate([side_src[name] for name, _ in SIDE_LAYOUT],
                                 axis=-1)                      # (1, SIDE_TOTAL)
    return dp


# ----- forward ------------------------------------------------------------------
def _forward_grouped_impl(noise_g, labels_g, dp):
    """noise_g: (G, B, DIMS), labels_g: (G, B) -> (G, B, *IMG_SHAPE).
    Each of the G groups is an independent batch (BN statistics per group)."""
    G, B, _ = noise_g.shape

    # glue (fused under jit): embedding gather + concat + zero-pad K to 128.
    emb = jnp.take(dp["emb"], labels_g.astype(jnp.int32), axis=0)   # (G, B, nc)
    gen_input = jnp.concatenate([emb, noise_g], axis=-1)            # (G, B, 42)
    x = jnp.pad(gen_input, ((0, 0), (0, 0), (0, D_IN_PAD - D_IN)))  # (G, B, 128)

    def const_spec(shape):
        # weights / packed side params: same block every grid step -> resident
        return pl.BlockSpec(shape, lambda g: (0, 0))

    in_specs = [
        pl.BlockSpec((None, B, D_IN_PAD), lambda g: (g, 0, 0)),     # x (per group)
        const_spec((D_IN_PAD, 128)),
        const_spec((128, 256)),
        const_spec((256, 512)),
        const_spec((512, 1024)),
        const_spec((1024, P_OUT_PAD)),
        const_spec((1, SIDE_TOTAL)),
    ]
    out_spec = pl.BlockSpec((None, B, P_OUT_PAD), lambda g: (g, 0, 0))

    out_pad = pl.pallas_call(
        generator_kernel,
        out_shape=jax.ShapeDtypeStruct((G, B, P_OUT_PAD), jnp.float32),
        grid=(G,),
        in_specs=in_specs,
        out_specs=out_spec,
        compiler_params=pltpu.CompilerParams(
            dimension_semantics=("parallel",),      # megacore split on v7x
            vmem_limit_bytes=16 << 20),
    )(x, dp["w1"], dp["w2"], dp["w3"], dp["w4"], dp["w5"], dp["side"])

    # glue: drop zero-padded lanes, reshape to NCHW (img.view(B, *shape)).
    return out_pad[:, :, :P_OUT].reshape(G, B, *IMG_SHAPE)


generator_forward_grouped = jax.jit(_forward_grouped_impl)


@jax.jit
def generator_forward(noise, labels, dp):
    """Module-style forward: one batch, BN over the whole batch."""
    return _forward_grouped_impl(noise[None], labels[None], dp)[0]


# ----- demo ----------------------------------------------------------------------
if __name__ == "__main__":
    key = jax.random.PRNGKey(0)
    k_params, k_noise, k_labels = jax.random.split(key, 3)

    params = make_params(k_params)
    dparams = prep_params(params)

    # module-consistent single-batch forward (B = 8)
    noise = jax.random.normal(k_noise, (BATCH, DIMS), jnp.float32)
    labels = jax.random.randint(k_labels, (BATCH,), 0, NUM_CLASSES, jnp.int32)
    img = generator_forward(noise, labels, dparams)
    jax.block_until_ready(img)
    assert img.shape == (BATCH, *IMG_SHAPE)
    assert bool(jnp.all(jnp.isfinite(img)))
    assert bool(jnp.all(jnp.abs(img) <= 1.0))   # tanh output range

    # throughput path: G independent batches of 8 in a single pallas_call
    G = 4
    noise_g = jax.random.normal(k_noise, (G, BATCH, DIMS), jnp.float32)
    labels_g = jax.random.randint(k_labels, (G, BATCH), 0, NUM_CLASSES, jnp.int32)
    imgs = generator_forward_grouped(noise_g, labels_g, dparams)
    jax.block_until_ready(imgs)
    assert imgs.shape == (G, BATCH, *IMG_SHAPE)
    assert bool(jnp.all(jnp.isfinite(imgs)))
    assert bool(jnp.all(jnp.abs(imgs) <= 1.0))

    # group 0 of the grouped call must match the single-batch forward
    img0 = generator_forward(noise_g[0], labels_g[0], dparams)
    assert bool(jnp.allclose(imgs[0], img0, atol=1e-5, rtol=1e-5))

    print("KERNEL_OK")
</pallas_src>

<mosaic_0001>
module attributes {stable_mosaic.version = 11 : i64} {
  func.func @generator_kernel(%arg0: i32, %arg1: memref<1x8x128xf32, #tpu.memory_space<vmem>>, %arg2: memref<128x128xbf16, #tpu.memory_space<vmem>>, %arg3: memref<128x256xbf16, #tpu.memory_space<vmem>>, %arg4: memref<256x512xbf16, #tpu.memory_space<vmem>>, %arg5: memref<512x1024xbf16, #tpu.memory_space<vmem>>, %arg6: memref<1024x128xbf16, #tpu.memory_space<vmem>>, %arg7: memref<1x5632xf32, #tpu.memory_space<vmem>>, %arg8: memref<1x8x128xf32, #tpu.memory_space<vmem>>) attributes {dimension_semantics = [#tpu.dimension_semantics<parallel>], iteration_bounds = array<i64: 1>, scalar_prefetch = 0 : i64, scratch_operands = 0 : i64, tpu.core_type = #tpu.core_type<tc>, window_params = [{transform_indices = @transform_0, window_bounds = array<i64: 1, 8, 128>}, {pipeline_mode = #tpu.pipeline_mode<synchronous>, transform_indices = @transform_1, window_bounds = array<i64: 128, 128>}, {pipeline_mode = #tpu.pipeline_mode<synchronous>, transform_indices = @transform_2, window_bounds = array<i64: 128, 256>}, {pipeline_mode = #tpu.pipeline_mode<synchronous>, transform_indices = @transform_3, window_bounds = array<i64: 256, 512>}, {pipeline_mode = #tpu.pipeline_mode<synchronous>, transform_indices = @transform_4, window_bounds = array<i64: 512, 1024>}, {pipeline_mode = #tpu.pipeline_mode<synchronous>, transform_indices = @transform_5, window_bounds = array<i64: 1024, 128>}, {pipeline_mode = #tpu.pipeline_mode<synchronous>, transform_indices = @transform_6, window_bounds = array<i64: 1, 5632>}, {transform_indices = @transform_7, window_bounds = array<i64: 1, 8, 128>}]} {
    %c0 = arith.constant 0 : index
    %c0_0 = arith.constant 0 : index
    %c0_1 = arith.constant 0 : index
    %0 = vector.load %arg1[%c0, %c0_0, %c0_1] : memref<1x8x128xf32, #tpu.memory_space<vmem>>, vector<1x8x128xf32>
    %1 = vector.shape_cast %0 : vector<1x8x128xf32> to vector<8x128xf32>
    %2 = arith.truncf %1 : vector<8x128xf32> to vector<8x128xbf16>
    %c0_2 = arith.constant 0 : index
    %c0_3 = arith.constant 0 : index
    %3 = vector.load %arg2[%c0_2, %c0_3] : memref<128x128xbf16, #tpu.memory_space<vmem>>, vector<128x128xbf16>
    %cst = arith.constant dense<0.000000e+00> : vector<8x128xf32>
    %4 = tpu.matmul %2, %3, %cst {dimension_numbers = #tpu.dot_dimension_numbers<[1], [0], [0], [1], [0, 0, 1, 1], [], []>} : vector<8x128xbf16>, vector<128x128xbf16>, vector<8x128xf32> -> vector<8x128xf32>
    %c0_4 = arith.constant 0 : index
    %c0_5 = arith.constant 0 : index
    %5 = vector.load %arg7[%c0_4, %c0_5] : memref<1x5632xf32, #tpu.memory_space<vmem>>, vector<1x128xf32>
    %6 = vector.broadcast %5 : vector<1x128xf32> to vector<8x128xf32>
    %7 = arith.addf %4, %6 : vector<8x128xf32>
    %cst_6 = arith.constant 0.000000e+00 : f32
    %8 = vector.broadcast %cst_6 : f32 to vector<8x128xf32>
    %9 = arith.cmpf ogt, %7, %8 : vector<8x128xf32>
    %cst_7 = arith.constant 2.000000e-01 : f32
    %10 = vector.broadcast %cst_7 : f32 to vector<8x128xf32>
    %11 = arith.mulf %10, %7 : vector<8x128xf32>
    %12 = arith.select %9, %7, %11 : vector<8x128xi1>, vector<8x128xf32>
    %13 = arith.truncf %12 : vector<8x128xf32> to vector<8x128xbf16>
    %c0_8 = arith.constant 0 : index
    %c0_9 = arith.constant 0 : index
    %14 = vector.load %arg3[%c0_8, %c0_9] : memref<128x256xbf16, #tpu.memory_space<vmem>>, vector<128x256xbf16>
    %cst_10 = arith.constant dense<0.000000e+00> : vector<8x256xf32>
    %15 = tpu.matmul %13, %14, %cst_10 {dimension_numbers = #tpu.dot_dimension_numbers<[1], [0], [0], [1], [0, 0, 1, 1], [], []>} : vector<8x128xbf16>, vector<128x256xbf16>, vector<8x256xf32> -> vector<8x256xf32>
    %c0_11 = arith.constant 0 : index
    %c128 = arith.constant 128 : index
    %16 = vector.load %arg7[%c0_11, %c128] : memref<1x5632xf32, #tpu.memory_space<vmem>>, vector<1x256xf32>
    %17 = vector.broadcast %16 : vector<1x256xf32> to vector<8x256xf32>
    %18 = arith.addf %15, %17 : vector<8x256xf32>
    %c0_12 = arith.constant 0 : index
    %c384 = arith.constant 384 : index
    %19 = vector.load %arg7[%c0_12, %c384] : memref<1x5632xf32, #tpu.memory_space<vmem>>, vector<1x256xf32>
    %c0_13 = arith.constant 0 : index
    %c640 = arith.constant 640 : index
    %20 = vector.load %arg7[%c0_13, %c640] : memref<1x5632xf32, #tpu.memory_space<vmem>>, vector<1x256xf32>
    %cst_14 = arith.constant dense<0.000000e+00> : vector<256xf32>
    %21 = vector.multi_reduction <add>, %18, %cst_14 [0] : vector<8x256xf32> to vector<256xf32>
    %22 = vector.shape_cast %21 : vector<256xf32> to vector<1x256xf32>
    %cst_15 = arith.constant 8.000000e+00 : f32
    %23 = vector.broadcast %cst_15 : f32 to vector<1x256xf32>
    %24 = arith.divf %22, %23 : vector<1x256xf32>
    %25 = arith.mulf %18, %18 : vector<8x256xf32>
    %cst_16 = arith.constant dense<0.000000e+00> : vector<256xf32>
    %26 = vector.multi_reduction <add>, %25, %cst_16 [0] : vector<8x256xf32> to vector<256xf32>
    %27 = vector.shape_cast %26 : vector<256xf32> to vector<1x256xf32>
    %cst_17 = arith.constant 8.000000e+00 : f32
    %28 = vector.broadcast %cst_17 : f32 to vector<1x256xf32>
    %29 = arith.divf %27, %28 : vector<1x256xf32>
    %30 = arith.mulf %24, %24 : vector<1x256xf32>
    %31 = arith.subf %29, %30 : vector<1x256xf32>
    %cst_18 = arith.constant 8.000000e-01 : f32
    %32 = vector.broadcast %cst_18 : f32 to vector<1x256xf32>
    %33 = arith.addf %31, %32 : vector<1x256xf32>
    %34 = math.rsqrt %33 : vector<1x256xf32>
    %35 = arith.mulf %19, %34 : vector<1x256xf32>
    %36 = vector.broadcast %35 : vector<1x256xf32> to vector<8x256xf32>
    %37 = arith.mulf %18, %36 : vector<8x256xf32>
    %38 = arith.mulf %24, %35 : vector<1x256xf32>
    %39 = arith.subf %20, %38 : vector<1x256xf32>
    %40 = vector.broadcast %39 : vector<1x256xf32> to vector<8x256xf32>
    %41 = arith.addf %37, %40 : vector<8x256xf32>
    %cst_19 = arith.constant 0.000000e+00 : f32
    %42 = vector.broadcast %cst_19 : f32 to vector<8x256xf32>
    %43 = arith.cmpf ogt, %41, %42 : vector<8x256xf32>
    %cst_20 = arith.constant 2.000000e-01 : f32
    %44 = vector.broadcast %cst_20 : f32 to vector<8x256xf32>
    %45 = arith.mulf %44, %41 : vector<8x256xf32>
    %46 = arith.select %43, %41, %45 : vector<8x256xi1>, vector<8x256xf32>
    %47 = arith.truncf %46 : vector<8x256xf32> to vector<8x256xbf16>
    %c0_21 = arith.constant 0 : index
    %c0_22 = arith.constant 0 : index
    %48 = vector.load %arg4[%c0_21, %c0_22] : memref<256x512xbf16, #tpu.memory_space<vmem>>, vector<256x512xbf16>
    %cst_23 = arith.constant dense<0.000000e+00> : vector<8x512xf32>
    %49 = tpu.matmul %47, %48, %cst_23 {dimension_numbers = #tpu.dot_dimension_numbers<[1], [0], [0], [1], [0, 0, 1, 1], [], []>} : vector<8x256xbf16>, vector<256x512xbf16>, vector<8x512xf32> -> vector<8x512xf32>
    %c0_24 = arith.constant 0 : index
    %c896 = arith.constant 896 : index
    %50 = vector.load %arg7[%c0_24, %c896] : memref<1x5632xf32, #tpu.memory_space<vmem>>, vector<1x512xf32>
    %51 = vector.broadcast %50 : vector<1x512xf32> to vector<8x512xf32>
    %52 = arith.addf %49, %51 : vector<8x512xf32>
    %c0_25 = arith.constant 0 : index
    %c1408 = arith.constant 1408 : index
    %53 = vector.load %arg7[%c0_25, %c1408] : memref<1x5632xf32, #tpu.memory_space<vmem>>, vector<1x512xf32>
    %c0_26 = arith.constant 0 : index
    %c1920 = arith.constant 1920 : index
    %54 = vector.load %arg7[%c0_26, %c1920] : memref<1x5632xf32, #tpu.memory_space<vmem>>, vector<1x512xf32>
    %cst_27 = arith.constant dense<0.000000e+00> : vector<512xf32>
    %55 = vector.multi_reduction <add>, %52, %cst_27 [0] : vector<8x512xf32> to vector<512xf32>
    %56 = vector.shape_cast %55 : vector<512xf32> to vector<1x512xf32>
    %cst_28 = arith.constant 8.000000e+00 : f32
    %57 = vector.broadcast %cst_28 : f32 to vector<1x512xf32>
    %58 = arith.divf %56, %57 : vector<1x512xf32>
    %59 = arith.mulf %52, %52 : vector<8x512xf32>
    %cst_29 = arith.constant dense<0.000000e+00> : vector<512xf32>
    %60 = vector.multi_reduction <add>, %59, %cst_29 [0] : vector<8x512xf32> to vector<512xf32>
    %61 = vector.shape_cast %60 : vector<512xf32> to vector<1x512xf32>
    %cst_30 = arith.constant 8.000000e+00 : f32
    %62 = vector.broadcast %cst_30 : f32 to vector<1x512xf32>
    %63 = arith.divf %61, %62 : vector<1x512xf32>
    %64 = arith.mulf %58, %58 : vector<1x512xf32>
    %65 = arith.subf %63, %64 : vector<1x512xf32>
    %cst_31 = arith.constant 8.000000e-01 : f32
    %66 = vector.broadcast %cst_31 : f32 to vector<1x512xf32>
    %67 = arith.addf %65, %66 : vector<1x512xf32>
    %68 = math.rsqrt %67 : vector<1x512xf32>
    %69 = arith.mulf %53, %68 : vector<1x512xf32>
    %70 = vector.broadcast %69 : vector<1x512xf32> to vector<8x512xf32>
    %71 = arith.mulf %52, %70 : vector<8x512xf32>
    %72 = arith.mulf %58, %69 : vector<1x512xf32>
    %73 = arith.subf %54, %72 : vector<1x512xf32>
    %74 = vector.broadcast %73 : vector<1x512xf32> to vector<8x512xf32>
    %75 = arith.addf %71, %74 : vector<8x512xf32>
    %cst_32 = arith.constant 0.000000e+00 : f32
    %76 = vector.broadcast %cst_32 : f32 to vector<8x512xf32>
    %77 = arith.cmpf ogt, %75, %76 : vector<8x512xf32>
    %cst_33 = arith.constant 2.000000e-01 : f32
    %78 = vector.broadcast %cst_33 : f32 to vector<8x512xf32>
    %79 = arith.mulf %78, %75 : vector<8x512xf32>
    %80 = arith.select %77, %75, %79 : vector<8x512xi1>, vector<8x512xf32>
    %81 = arith.truncf %80 : vector<8x512xf32> to vector<8x512xbf16>
    %c0_34 = arith.constant 0 : index
    %c0_35 = arith.constant 0 : index
    %82 = vector.load %arg5[%c0_34, %c0_35] : memref<512x1024xbf16, #tpu.memory_space<vmem>>, vector<512x1024xbf16>
    %cst_36 = arith.constant dense<0.000000e+00> : vector<8x1024xf32>
    %83 = tpu.matmul %81, %82, %cst_36 {dimension_numbers = #tpu.dot_dimension_numbers<[1], [0], [0], [1], [0, 0, 1, 1], [], []>} : vector<8x512xbf16>, vector<512x1024xbf16>, vector<8x1024xf32> -> vector<8x1024xf32>
    %c0_37 = arith.constant 0 : index
    %c2432 = arith.constant 2432 : index
    %84 = vector.load %arg7[%c0_37, %c2432] : memref<1x5632xf32, #tpu.memory_space<vmem>>, vector<1x1024xf32>
    %85 = vector.broadcast %84 : vector<1x1024xf32> to vector<8x1024xf32>
    %86 = arith.addf %83, %85 : vector<8x1024xf32>
    %c0_38 = arith.constant 0 : index
    %c3456 = arith.constant 3456 : index
    %87 = vector.load %arg7[%c0_38, %c3456] : memref<1x5632xf32, #tpu.memory_space<vmem>>, vector<1x1024xf32>
    %c0_39 = arith.constant 0 : index
    %c4480 = arith.constant 4480 : index
    %88 = vector.load %arg7[%c0_39, %c4480] : memref<1x5632xf32, #tpu.memory_space<vmem>>, vector<1x1024xf32>
    %cst_40 = arith.constant dense<0.000000e+00> : vector<1024xf32>
    %89 = vector.multi_reduction <add>, %86, %cst_40 [0] : vector<8x1024xf32> to vector<1024xf32>
    %90 = vector.shape_cast %89 : vector<1024xf32> to vector<1x1024xf32>
    %cst_41 = arith.constant 8.000000e+00 : f32
    %91 = vector.broadcast %cst_41 : f32 to vector<1x1024xf32>
    %92 = arith.divf %90, %91 : vector<1x1024xf32>
    %93 = arith.mulf %86, %86 : vector<8x1024xf32>
    %cst_42 = arith.constant dense<0.000000e+00> : vector<1024xf32>
    %94 = vector.multi_reduction <add>, %93, %cst_42 [0] : vector<8x1024xf32> to vector<1024xf32>
    %95 = vector.shape_cast %94 : vector<1024xf32> to vector<1x1024xf32>
    %cst_43 = arith.constant 8.000000e+00 : f32
    %96 = vector.broadcast %cst_43 : f32 to vector<1x1024xf32>
    %97 = arith.divf %95, %96 : vector<1x1024xf32>
    %98 = arith.mulf %92, %92 : vector<1x1024xf32>
    %99 = arith.subf %97, %98 : vector<1x1024xf32>
    %cst_44 = arith.constant 8.000000e-01 : f32
    %100 = vector.broadcast %cst_44 : f32 to vector<1x1024xf32>
    %101 = arith.addf %99, %100 : vector<1x1024xf32>
    %102 = math.rsqrt %101 : vector<1x1024xf32>
    %103 = arith.mulf %87, %102 : vector<1x1024xf32>
    %104 = vector.broadcast %103 : vector<1x1024xf32> to vector<8x1024xf32>
    %105 = arith.mulf %86, %104 : vector<8x1024xf32>
    %106 = arith.mulf %92, %103 : vector<1x1024xf32>
    %107 = arith.subf %88, %106 : vector<1x1024xf32>
    %108 = vector.broadcast %107 : vector<1x1024xf32> to vector<8x1024xf32>
    %109 = arith.addf %105, %108 : vector<8x1024xf32>
    %cst_45 = arith.constant 0.000000e+00 : f32
    %110 = vector.broadcast %cst_45 : f32 to vector<8x1024xf32>
    %111 = arith.cmpf ogt, %109, %110 : vector<8x1024xf32>
    %cst_46 = arith.constant 2.000000e-01 : f32
    %112 = vector.broadcast %cst_46 : f32 to vector<8x1024xf32>
    %113 = arith.mulf %112, %109 : vector<8x1024xf32>
    %114 = arith.select %111, %109, %113 : vector<8x1024xi1>, vector<8x1024xf32>
    %115 = arith.truncf %114 : vector<8x1024xf32> to vector<8x1024xbf16>
    %c0_47 = arith.constant 0 : index
    %c0_48 = arith.constant 0 : index
    %116 = vector.load %arg6[%c0_47, %c0_48] : memref<1024x128xbf16, #tpu.memory_space<vmem>>, vector<1024x128xbf16>
    %cst_49 = arith.constant dense<0.000000e+00> : vector<8x128xf32>
    %117 = tpu.matmul %115, %116, %cst_49 {dimension_numbers = #tpu.dot_dimension_numbers<[1], [0], [0], [1], [0, 0, 1, 1], [], []>} : vector<8x1024xbf16>, vector<1024x128xbf16>, vector<8x128xf32> -> vector<8x128xf32>
    %c0_50 = arith.constant 0 : index
    %c5504 = arith.constant 5504 : index
    %118 = vector.load %arg7[%c0_50, %c5504] : memref<1x5632xf32, #tpu.memory_space<vmem>>, vector<1x128xf32>
    %119 = vector.broadcast %118 : vector<1x128xf32> to vector<8x128xf32>
    %120 = arith.addf %117, %119 : vector<8x128xf32>
    %121 = math.tanh %120 : vector<8x128xf32>
    %c0_51 = arith.constant 0 : index
    %c0_52 = arith.constant 0 : index
    %c0_53 = arith.constant 0 : index
    %122 = vector.load %arg8[%c0_51, %c0_52, %c0_53] : memref<1x8x128xf32, #tpu.memory_space<vmem>>, vector<1x8x128xf32>
    %123 = vector.shape_cast %122 : vector<1x8x128xf32> to vector<8x128xf32>
    %124 = vector.shape_cast %121 : vector<8x128xf32> to vector<1x8x128xf32>
    tpu.vector_store %arg8[%c0_51, %c0_52, %c0_53], %124 {strides = array<i32>} : memref<1x8x128xf32, #tpu.memory_space<vmem>>, vector<1x8x128xf32>,
    return
  }
  func.func @transform_0(%arg0: i32) -> (i32, i32, i32) {
    %c0_i32 = arith.constant 0 : i32
    %c0_i32_0 = arith.constant 0 : i32
    %c0_i32_1 = arith.constant 0 : i32
    return %arg0, %c0_i32, %c0_i32_0 : i32, i32, i32
  }
  func.func @transform_1(%arg0: i32) -> (i32, i32) {
    %c0_i32 = arith.constant 0 : i32
    %c0_i32_0 = arith.constant 0 : i32
    %c0_i32_1 = arith.constant 0 : i32
    return %c0_i32, %c0_i32_0 : i32, i32
  }
  func.func @transform_2(%arg0: i32) -> (i32, i32) {
    %c0_i32 = arith.constant 0 : i32
    %c0_i32_0 = arith.constant 0 : i32
    %c0_i32_1 = arith.constant 0 : i32
    return %c0_i32, %c0_i32_0 : i32, i32
  }
  func.func @transform_3(%arg0: i32) -> (i32, i32) {
    %c0_i32 = arith.constant 0 : i32
    %c0_i32_0 = arith.constant 0 : i32
    %c0_i32_1 = arith.constant 0 : i32
    return %c0_i32, %c0_i32_0 : i32, i32
  }
  func.func @transform_4(%arg0: i32) -> (i32, i32) {
    %c0_i32 = arith.constant 0 : i32
    %c0_i32_0 = arith.constant 0 : i32
    %c0_i32_1 = arith.constant 0 : i32
    return %c0_i32, %c0_i32_0 : i32, i32
  }
  func.func @transform_5(%arg0: i32) -> (i32, i32) {
    %c0_i32 = arith.constant 0 : i32
    %c0_i32_0 = arith.constant 0 : i32
    %c0_i32_1 = arith.constant 0 : i32
    return %c0_i32, %c0_i32_0 : i32, i32
  }
  func.func @transform_6(%arg0: i32) -> (i32, i32) {
    %c0_i32 = arith.constant 0 : i32
    %c0_i32_0 = arith.constant 0 : i32
    %c0_i32_1 = arith.constant 0 : i32
    return %c0_i32, %c0_i32_0 : i32, i32
  }
  func.func @transform_7(%arg0: i32) -> (i32, i32, i32) {
    %c0_i32 = arith.constant 0 : i32
    %c0_i32_0 = arith.constant 0 : i32
    %c0_i32_1 = arith.constant 0 : i32
    return %arg0, %c0_i32, %c0_i32_0 : i32, i32, i32
  }
}

</mosaic_0001>

<llo_original>
// kernel: generator_forward.1
$region0: #{generator_forward.1}
  #allocation0 [shape = 'u32[]', space=smem, size = 0x4, offset = 0x4, fixed_abs, tag = 'smem constant byte address 0x4 - core index']
  #allocation1 [shape = 'u32[144,128]{1,0:T(1,128)}', space=vmem, size = 0x12000, scoped, tag = 'internal scratch']
  %s0 = inlined_call_operand.vmem [shape: f32[1,8,128], index: 0, kind: input, shape index: {}]
  %s1 = inlined_call_operand.hbm [shape: bf16[128,128], index: 1, kind: input, shape index: {}]
  %s2 = inlined_call_operand.vmem [shape: bf16[128,256], index: 2, kind: input, shape index: {}]
  %s3 = inlined_call_operand.hbm [shape: bf16[256,512], index: 3, kind: input, shape index: {}]
  %s4 = inlined_call_operand.hbm [shape: bf16[512,1024], index: 4, kind: input, shape index: {}]
  %s5 = inlined_call_operand.hbm [shape: bf16[1024,128], index: 5, kind: input, shape index: {}]
  %s6 = inlined_call_operand.hbm [shape: f32[1,5632], index: 6, kind: input, shape index: {}]
  %s7 = inlined_call_operand.vmem [shape: f32[1,8,128], index: 7, kind: output, shape index: {}]
  %s8 = sld [smem:[#allocation0]]
  $region58: #{generator_forward.1} parent=0
    _
  %s10 = ssub.s32 1, %s8
  %s11 = scalar_select 0, %s10, %s8
  $region1: #{generator_forward.1} parent=0
    #allocation2 [shape = 'u8[32768]{0}', space=vmem, size = 0x8000, scoped, tag = 'input window, operand 1, single buffered']
    #allocation3 [shape = 's32[1]{0}', space=sflag, size = 0x4, scoped, tag = 'scoped memory for generator_forward.1']
    #allocation4 [shape = 'u8[262144]{0}', space=vmem, size = 0x40000, scoped, tag = 'input window, operand 3, single buffered']
    #allocation5 [shape = 's32[1]{0}', space=sflag, size = 0x4, scoped, tag = 'scoped memory for generator_forward.1']
    #allocation6 [shape = 'u8[1048576]{0}', space=vmem, size = 0x100000, scoped, tag = 'input window, operand 4, single buffered']
    #allocation7 [shape = 'u8[262144]{0}', space=vmem, size = 0x40000, scoped, tag = 'input window, operand 5, single buffered']
    #allocation8 [shape = 's32[1]{0}', space=sflag, size = 0x4, scoped, tag = 'scoped memory for generator_forward.1']
    #allocation9 [shape = 'u8[22528]{0}', space=vmem, size = 0x5800, scoped, tag = 'input window, operand 6, single buffered']
    %12 = vsyncpa [#allocation3], 0
    %13 = vsyncpa [#allocation5], 0
    %14 = vsyncpa [#allocation8], 0
    // Predicated region
    $region2: #{generator_forward.1} parent=1 // pred_check
      _
    $region3: #{generator_forward.1} parent=1 // pred_check_branch
      %16 = sbr.rel (0) target = $region5
    $region4: #{generator_forward.1} parent=1 // pred_region
      _
    $region5: #{generator_forward.1} parent=1 // pred_fallthru
      _
    // Predicated region
    $region6: #{generator_forward.1} parent=1 // pred_check
      _
    $region7: #{generator_forward.1} parent=1 // pred_check_branch
      %18 = sbr.rel (0) target = $region9
    $region8: #{generator_forward.1} parent=1 // pred_region
      %s20 = ssub.s32 1024, 1024
      %21 = vsyncadd [#allocation3], %s20
      %s22 = sshll.u32 [#allocation2], 4
      %s23 = int_to_ptr.vmem [resolvable:$true] %s22
      %28 = dma.hbm_to_vmem [thread:$0]  %s1, 1024, %s23, [#allocation3], 64, 64, 4
    $region9: #{generator_forward.1} parent=1 // pred_fallthru
      _
    // Predicated region
    $region10: #{generator_forward.1} parent=1 // pred_check
      _
    $region11: #{generator_forward.1} parent=1 // pred_check_branch
      %30 = sbr.rel (0) target = $region13
    $region12: #{generator_forward.1} parent=1 // pred_region
      _
    $region13: #{generator_forward.1} parent=1 // pred_fallthru
      _
    // Predicated region
    $region14: #{generator_forward.1} parent=1 // pred_check
      _
    $region15: #{generator_forward.1} parent=1 // pred_check_branch
      %32 = sbr.rel (0) target = $region17
    $region16: #{generator_forward.1} parent=1 // pred_region
      %s34 = ssub.s32 8192, 8192
      %35 = vsyncadd [#allocation5], %s34
      %s36 = sshll.u32 [#allocation4], 4
      %s37 = int_to_ptr.vmem [resolvable:$true] %s36
      %42 = dma.hbm_to_vmem [thread:$0]  %s3, 8192, %s37, [#allocation5], 256, 256, 16
    $region17: #{generator_forward.1} parent=1 // pred_fallthru
      _
    // Predicated region
    $region18: #{generator_forward.1} parent=1 // pred_check
      _
    $region19: #{generator_forward.1} parent=1 // pred_check_branch
      %44 = sbr.rel (0) target = $region21
    $region20: #{generator_forward.1} parent=1 // pred_region
      %s46 = ssub.s32 32768, 32768
      %47 = vsyncadd [#allocation5], %s46
      %s48 = sshll.u32 [#allocation6], 4
      %s49 = int_to_ptr.vmem [resolvable:$true] %s48
      %54 = dma.hbm_to_vmem [thread:$0]  %s4, 32768, %s49, [#allocation5], 512, 512, 32
    $region21: #{generator_forward.1} parent=1 // pred_fallthru
      _
    // Predicated region
    $region22: #{generator_forward.1} parent=1 // pred_check
      _
    $region23: #{generator_forward.1} parent=1 // pred_check_branch
      %56 = sbr.rel (0) target = $region25
    $region24: #{generator_forward.1} parent=1 // pred_region
      %s58 = ssub.s32 8192, 8192
      %59 = vsyncadd [#allocation8], %s58
      %s60 = sshll.u32 [#allocation7], 4
      %s61 = int_to_ptr.vmem [resolvable:$true] %s60
      %66 = dma.hbm_to_vmem [thread:$0]  %s5, 8192, %s61, [#allocation8], 64, 64, 4
    $region25: #{generator_forward.1} parent=1 // pred_fallthru
      _
    // Predicated region
    $region26: #{generator_forward.1} parent=1 // pred_check
      _
    $region27: #{generator_forward.1} parent=1 // pred_check_branch
      %68 = sbr.rel (0) target = $region29
    $region28: #{generator_forward.1} parent=1 // pred_region
      %s70 = ssub.s32 704, 704
      %71 = vsyncadd [#allocation8], %s70
      %s73 = sshll.u32 [#allocation9], 4
      %s74 = int_to_ptr.vmem [resolvable:$true] %s73
      %76 = dma.hbm_to_vmem [thread:$0]  %s6, 704, %s74, [#allocation8]
    $region29: #{generator_forward.1} parent=1 // pred_fallthru
      _
    // Predicated region
    $region30: #{generator_forward.1} parent=1 // pred_check
      _
    $region31: #{generator_forward.1} parent=1 // pred_check_branch
      %78 = sbr.rel (0) target = $region33
    $region32: #{generator_forward.1} parent=1 // pred_region
      %79 = dma.done [#allocation3], 1024
    $region33: #{generator_forward.1} parent=1 // pred_fallthru
      _
    // Predicated region
    $region34: #{generator_forward.1} parent=1 // pred_check
      _
    $region35: #{generator_forward.1} parent=1 // pred_check_branch
      %81 = sbr.rel (0) target = $region37
    $region36: #{generator_forward.1} parent=1 // pred_region
      %82 = dma.done [#allocation5], 8192
    $region37: #{generator_forward.1} parent=1 // pred_fallthru
      _
    // Predicated region
    $region38: #{generator_forward.1} parent=1 // pred_check
      _
    $region39: #{generator_forward.1} parent=1 // pred_check_branch
      %84 = sbr.rel (0) target = $region41
    $region40: #{generator_forward.1} parent=1 // pred_region
      %85 = dma.done [#allocation5], 32768
    $region41: #{generator_forward.1} parent=1 // pred_fallthru
      _
    // Predicated region
    $region42: #{generator_forward.1} parent=1 // pred_check
      _
    $region43: #{generator_forward.1} parent=1 // pred_check_branch
      %87 = sbr.rel (0) target = $region45
    $region44: #{generator_forward.1} parent=1 // pred_region
      %88 = dma.done [#allocation8], 8192
    $region45: #{generator_forward.1} parent=1 // pred_fallthru
      _
    // Predicated region
    $region46: #{generator_forward.1} parent=1 // pred_check
      _
    $region47: #{generator_forward.1} parent=1 // pred_check_branch
      %90 = sbr.rel (0) target = $region49
    $region48: #{generator_forward.1} parent=1 // pred_region
      %91 = dma.done [#allocation8], 704
    $region49: #{generator_forward.1} parent=1 // pred_fallthru
      _
    %v93 = vld [vmem:[%s0] sm:$0xff]
    %v94 = vpack.c.bf16 %v93, %v93
    %v95 = vld [vmem:[#allocation2] sm:$0xf]
    %v96 = vld [vmem:[#allocation2 + $0x4] sm:$0xf]
    %v97 = vld [vmem:[#allocation2 + $0x8] sm:$0xf]
    %v98 = vld [vmem:[#allocation2 + $0xc] sm:$0xf]
    %v99 = vld [vmem:[#allocation2 + $0x10] sm:$0xf]
    %v100 = vld [vmem:[#allocation2 + $0x14] sm:$0xf]
    %v101 = vld [vmem:[#allocation2 + $0x18] sm:$0xf]
    %v102 = vld [vmem:[#allocation2 + $0x1c] sm:$0xf]
    %v103 = vld [vmem:[#allocation2 + $0x20] sm:$0xf]
    %v104 = vld [vmem:[#allocation2 + $0x24] sm:$0xf]
    %v105 = vld [vmem:[#allocation2 + $0x28] sm:$0xf]
    %v106 = vld [vmem:[#allocation2 + $0x2c] sm:$0xf]
    %v107 = vld [vmem:[#allocation2 + $0x30] sm:$0xf]
    %v108 = vld [vmem:[#allocation2 + $0x34] sm:$0xf]
    %v109 = vld [vmem:[#allocation2 + $0x38] sm:$0xf]
    %v110 = vld [vmem:[#allocation2 + $0x3c] sm:$0xf]
    %v111 = vld [vmem:[#allocation9] sm:$0x1]
    %v113 = vlaneseq
    %v114 = vshrl.u32 %v113, 7
    %v115 = vsub.s32 0, %v114
    %v116 = vrot.slane %v111, %v115
    %v134 = vunpack.c.l.b16 %v95
    %v135 = vunpack.c.l.b16 %v96
    %v136 = vunpack.c.l.b16 %v97
    %v137 = vunpack.c.l.b16 %v98
    %v138 = vunpack.c.l.b16 %v99
    %v139 = vunpack.c.l.b16 %v100
    %v140 = vunpack.c.l.b16 %v101
    %v141 = vunpack.c.l.b16 %v102
    %v142 = vunpack.c.l.b16 %v103
    %v143 = vunpack.c.l.b16 %v104
    %v144 = vunpack.c.l.b16 %v105
    %v145 = vunpack.c.l.b16 %v106
    %v146 = vunpack.c.l.b16 %v107
    %v147 = vunpack.c.l.b16 %v108
    %v148 = vunpack.c.l.b16 %v109
    %v149 = vunpack.c.l.b16 %v110
    %v150 = vpack.c.b16 %v135, %v134
    %v151 = vpack.c.b16 %v137, %v136
    %v152 = vpack.c.b16 %v139, %v138
    %v153 = vpack.c.b16 %v141, %v140
    %v154 = vpack.c.b16 %v143, %v142
    %v155 = vpack.c.b16 %v145, %v144
    %v156 = vpack.c.b16 %v147, %v146
    %v157 = vpack.c.b16 %v149, %v148
    %166 = vmatprep.subr.bf16.mxu0 0
    %167 = vmatpush1.bf16.msra.mxu0 %v150
    %168 = vmatprep.subr.bf16.mxu0 0
    %169 = vmatpush1.bf16.msra.mxu0 %v151
    %170 = vmatprep.subr.bf16.mxu0 0
    %171 = vmatpush1.bf16.msra.mxu0 %v152
    %172 = vmatprep.subr.bf16.mxu0 0
    %173 = vmatpush1.bf16.msra.mxu0 %v153
    %174 = vmatprep.subr.bf16.mxu0 0
    %175 = vmatpush1.bf16.msra.mxu0 %v154
    %176 = vmatprep.subr.bf16.mxu0 0
    %177 = vmatpush1.bf16.msra.mxu0 %v155
    %178 = vmatprep.subr.bf16.mxu0 0
    %179 = vmatpush1.bf16.msra.mxu0 %v156
    %180 = vmatprep.subr.bf16.mxu0 0
    %181 = vmatpush1.bf16.msra.mxu0 %v157
    %182 = vmatprep.subr.bf16.mxu0 0
    %183 = vmatpush1.bf16.msra.mxu0 0
    %184 = vmatprep.subr.bf16.mxu0 0
    %185 = vmatpush1.bf16.msra.mxu0 0
    %186 = vmatprep.subr.bf16.mxu0 0
    %187 = vmatpush1.bf16.msra.mxu0 0
    %188 = vmatprep.subr.bf16.mxu0 0
    %189 = vmatpush1.bf16.msra.mxu0 0
    %190 = vmatprep.subr.bf16.mxu0 0
    %191 = vmatpush1.bf16.msra.mxu0 0
    %192 = vmatprep.subr.bf16.mxu0 0
    %193 = vmatpush1.bf16.msra.mxu0 0
    %194 = vmatprep.subr.bf16.mxu0 0
    %195 = vmatpush1.bf16.msra.mxu0 0
    %196 = vmatprep.subr.bf16.mxu0 0
    %197 = vmatpush1.bf16.msra.mxu0 0
    %198 = vmatprep.mubr.bf16.mxu0 0
    %199 = vmatmul.mubr.bf16.gmra.mrb[0].mxu0 %v94
    %v200 = vpop.f32.mrb[0].mxu0
    %v201 = vadd.f32 %v116, %v200
    %v202 = vpop.f32.mrb[0].mxu0
    %v203 = vpop.f32.mrb[0].mxu0
    %v204 = vpop.f32.mrb[0].mxu0
    %205 = vdwg.mxu0
    %vm206 = vcmp.gt.f32.partialorder %v201, 0.0
    %v207 = vmul.f32 %v201, 0.2
    %v208 = vsel %vm206, %v201, %v207
    %v209 = vpack.c.bf16 %v208, %v208
    %v210 = vld [vmem:[%s2] sm:$0xff]
    %v211 = vld [vmem:[%s2 + $0x8] sm:$0xff]
    %v212 = vld [vmem:[%s2 + $0x10] sm:$0xff]
    %v213 = vld [vmem:[%s2 + $0x18] sm:$0xff]
    %v214 = vld [vmem:[%s2 + $0x20] sm:$0xff]
    %v215 = vld [vmem:[%s2 + $0x28] sm:$0xff]
    %v216 = vld [vmem:[%s2 + $0x30] sm:$0xff]
    %v217 = vld [vmem:[%s2 + $0x38] sm:$0xff]
    %v218 = vld [vmem:[%s2 + $0x40] sm:$0xff]
    %v219 = vld [vmem:[%s2 + $0x48] sm:$0xff]
    %v220 = vld [vmem:[%s2 + $0x50] sm:$0xff]
    %v221 = vld [vmem:[%s2 + $0x58] sm:$0xff]
    %v222 = vld [vmem:[%s2 + $0x60] sm:$0xff]
    %v223 = vld [vmem:[%s2 + $0x68] sm:$0xff]
    %v224 = vld [vmem:[%s2 + $0x70] sm:$0xff]
    %v225 = vld [vmem:[%s2 + $0x78] sm:$0xff]
    %v226 = vld [vmem:[#allocation9 + $0x1] sm:$0x3]
    %v228 = vlaneseq
    %v229 = vshrl.u32 %v228, 7
    %v230 = vsub.s32 0, %v229
    %v231 = vrot.slane %v226, %v230
    %v232 = vlaneseq
    %v233 = vshrl.u32 %v232, 7
    %v234 = vsub.s32 1, %v233
    %v235 = vrot.slane %v226, %v234
    %v254 = vunpack.c.l.b16 %v210
    %v255 = vunpack.c.h.b16 %v210
    %v256 = vunpack.c.l.b16 %v211
    %v257 = vunpack.c.h.b16 %v211
    %v258 = vunpack.c.l.b16 %v212
    %v259 = vunpack.c.h.b16 %v212
    %v260 = vunpack.c.l.b16 %v213
    %v261 = vunpack.c.h.b16 %v213
    %v262 = vunpack.c.l.b16 %v214
    %v263 = vunpack.c.h.b16 %v214
    %v264 = vunpack.c.l.b16 %v215
    %v265 = vunpack.c.h.b16 %v215
    %v266 = vunpack.c.l.b16 %v216
    %v267 = vunpack.c.h.b16 %v216
    %v268 = vunpack.c.l.b16 %v217
    %v269 = vunpack.c.h.b16 %v217
    %v270 = vunpack.c.l.b16 %v218
    %v271 = vunpack.c.h.b16 %v218
    %v272 = vunpack.c.l.b16 %v219
    %v273 = vunpack.c.h.b16 %v219
    %v274 = vunpack.c.l.b16 %v220
    %v275 = vunpack.c.h.b16 %v220
    %v276 = vunpack.c.l.b16 %v221
    %v277 = vunpack.c.h.b16 %v221
    %v278 = vunpack.c.l.b16 %v222
    %v279 = vunpack.c.h.b16 %v222
    %v280 = vunpack.c.l.b16 %v223
    %v281 = vunpack.c.h.b16 %v223
    %v282 = vunpack.c.l.b16 %v224
    %v283 = vunpack.c.h.b16 %v224
    %v284 = vunpack.c.l.b16 %v225
    %v285 = vunpack.c.h.b16 %v225
    %v286 = vpack.c.b16 %v256, %v254
    %v287 = vpack.c.b16 %v257, %v255
    %v288 = vpack.c.b16 %v260, %v258
    %v289 = vpack.c.b16 %v261, %v259
    %v290 = vpack.c.b16 %v264, %v262
    %v291 = vpack.c.b16 %v265, %v263
    %v292 = vpack.c.b16 %v268, %v266
    %v293 = vpack.c.b16 %v269, %v267
    %v294 = vpack.c.b16 %v272, %v270
    %v295 = vpack.c.b16 %v273, %v271
    %v296 = vpack.c.b16 %v276, %v274
    %v297 = vpack.c.b16 %v277, %v275
    %v298 = vpack.c.b16 %v280, %v278
    %v299 = vpack.c.b16 %v281, %v279
    %v300 = vpack.c.b16 %v284, %v282
    %v301 = vpack.c.b16 %v285, %v283
    %318 = vmatprep.subr.bf16.mxu0 %v287
    %319 = vmatpush1.bf16.msra.mxu0 %v286
    %320 = vmatprep.subr.bf16.mxu0 %v289
    %321 = vmatpush1.bf16.msra.mxu0 %v288
    %322 = vmatprep.subr.bf16.mxu0 %v291
    %323 = vmatpush1.bf16.msra.mxu0 %v290
    %324 = vmatprep.subr.bf16.mxu0 %v293
    %325 = vmatpush1.bf16.msra.mxu0 %v292
    %326 = vmatprep.subr.bf16.mxu0 %v295
    %327 = vmatpush1.bf16.msra.mxu0 %v294
    %328 = vmatprep.subr.bf16.mxu0 %v297
    %329 = vmatpush1.bf16.msra.mxu0 %v296
    %330 = vmatprep.subr.bf16.mxu0 %v299
    %331 = vmatpush1.bf16.msra.mxu0 %v298
    %332 = vmatprep.subr.bf16.mxu0 %v301
    %333 = vmatpush1.bf16.msra.mxu0 %v300
    %334 = vmatprep.subr.bf16.mxu0 0
    %335 = vmatpush1.bf16.msra.mxu0 0
    %336 = vmatprep.subr.bf16.mxu0 0
    %337 = vmatpush1.bf16.msra.mxu0 0
    %338 = vmatprep.subr.bf16.mxu0 0
    %339 = vmatpush1.bf16.msra.mxu0 0
    %340 = vmatprep.subr.bf16.mxu0 0
    %341 = vmatpush1.bf16.msra.mxu0 0
    %342 = vmatprep.subr.bf16.mxu0 0
    %343 = vmatpush1.bf16.msra.mxu0 0
    %344 = vmatprep.subr.bf16.mxu0 0
    %345 = vmatpush1.bf16.msra.mxu0 0
    %346 = vmatprep.subr.bf16.mxu0 0
    %347 = vmatpush1.bf16.msra.mxu0 0
    %348 = vmatprep.subr.bf16.mxu0 0
    %349 = vmatpush1.bf16.msra.mxu0 0
    %350 = vmatprep.mubr.bf16.mxu0 0
    %351 = vmatmul.mubr.bf16.gmra.mrb[0].mxu0 %v209
    %v352 = vpop.f32.mrb[0].mxu0
    %v353 = vadd.f32 %v231, %v352
    %v354 = vpop.f32.mrb[0].mxu0
    %v355 = vadd.f32 %v235, %v354
    %v356 = vpop.f32.mrb[0].mxu0
    %v357 = vpop.f32.mrb[0].mxu0
    %358 = vdwg.mxu0
    %v359 = vld [vmem:[#allocation9 + $0x3] sm:$0x3]
    %v360 = vld [vmem:[#allocation9 + $0x5] sm:$0x3]
    %v361 = vrot.slane %v353, 4
    %v362 = vadd.f32 %v353, %v361
    %v363 = vrot.slane %v362, 2
    %v364 = vadd.f32 %v362, %v363
    %v365 = vrot.slane %v364, 1
    %v366 = vadd.f32 %v364, %v365
    %v367 = vrot.slane %v355, 4
    %v368 = vadd.f32 %v355, %v367
    %v369 = vrot.slane %v368, 2
    %v370 = vadd.f32 %v368, %v369
    %v371 = vrot.slane %v370, 1
    %v372 = vadd.f32 %v370, %v371
    %v373 = vrcp.pop 8.0
    %v374 = vmul.f32 %v366, %v373
    %v375 = vmul.f32 %v372, %v373
    %v376 = vmul.f32 %v353, %v353
    %v377 = vmul.f32 %v355, %v355
    %v378 = vrot.slane %v376, 4
    %v379 = vadd.f32 %v376, %v378
    %v380 = vrot.slane %v379, 2
    %v381 = vadd.f32 %v379, %v380
    %v382 = vrot.slane %v381, 1
    %v383 = vadd.f32 %v381, %v382
    %v384 = vrot.slane %v377, 4
    %v385 = vadd.f32 %v377, %v384
    %v386 = vrot.slane %v385, 2
    %v387 = vadd.f32 %v385, %v386
    %v388 = vrot.slane %v387, 1
    %v389 = vadd.f32 %v387, %v388
    %v390 = vmul.f32 %v383, %v373
    %v391 = vmul.f32 %v389, %v373
    %v392 = vmul.f32 %v374, %v374
    %v393 = vmul.f32 %v375, %v375
    %v394 = vsub.f32 %v390, %v392
    %v395 = vsub.f32 %v391, %v393
    %v396 = vadd.f32 %v394, 0.8
    %v397 = vadd.f32 %v395, 0.8
    %v398 = vrsqrt.pop %v396
    %v399 = vrsqrt.pop %v397
    %v402 = vcombine.low %v398, %v399
    %v404 = vunpack.c.l.s4 1966171168
    %v405 = vunpack.c.0.s8 %v404
    %v406 = vlaneseq
    %v407 = vshrl.u32 %v406, 7
    %v408 = vsub.s32 %v405, %v407
    %v409 = vrot.slane %v402, %v408
    %v411 = vunpack.c.l.s4 1966171168
    %v412 = vunpack.c.0.s8 %v411
    %v413 = vlaneseq
    %v414 = vshrl.u32 %v413, 7
    %v415 = vsub.s32 %v412, %v414
    %v416 = vrot.slane %v409, %v415
    %v418 = vmul.f32 %v359, %v416
    %v420 = vlaneseq
    %v421 = vshrl.u32 %v420, 7
    %v422 = vsub.s32 0, %v421
    %v423 = vrot.slane %v418, %v422
    %v424 = vlaneseq
    %v425 = vshrl.u32 %v424, 7
    %v426 = vsub.s32 1, %v425
    %v427 = vrot.slane %v418, %v426
    %v430 = vmul.f32 %v353, %v423
    %v431 = vmul.f32 %v355, %v427
    %v432 = vmul.f32 %v374, %v423
    %v433 = vmul.f32 %v375, %v427
    %v436 = vcombine.low %v432, %v433
    %v438 = vunpack.c.l.s4 1966171168
    %v439 = vunpack.c.0.s8 %v438
    %v440 = vlaneseq
    %v441 = vshrl.u32 %v440, 7
    %v442 = vsub.s32 %v439, %v441
    %v443 = vrot.slane %v436, %v442
    %v445 = vunpack.c.l.s4 1966171168
    %v446 = vunpack.c.0.s8 %v445
    %v447 = vlaneseq
    %v448 = vshrl.u32 %v447, 7
    %v449 = vsub.s32 %v446, %v448
    %v450 = vrot.slane %v443, %v449
    %v452 = vsub.f32 %v360, %v450
    %v454 = vlaneseq
    %v455 = vshrl.u32 %v454, 7
    %v456 = vsub.s32 0, %v455
    %v457 = vrot.slane %v452, %v456
    %v458 = vlaneseq
    %v459 = vshrl.u32 %v458, 7
    %v460 = vsub.s32 1, %v459
    %v461 = vrot.slane %v452, %v460
    %v464 = vadd.f32 %v430, %v457
    %v465 = vadd.f32 %v431, %v461
    %vm466 = vcmp.gt.f32.partialorder %v464, 0.0
    %vm467 = vcmp.gt.f32.partialorder %v465, 0.0
    %v468 = vmul.f32 %v464, 0.2
    %v469 = vmul.f32 %v465, 0.2
    %v470 = vsel %vm466, %v464, %v468
    %v471 = vsel %vm467, %v465, %v469
    %v472 = vpack.c.bf16 %v470, %v470
    %v473 = vpack.c.bf16 %v471, %v471
    %v474 = vld [vmem:[#allocation4] sm:$0xff]
    %v475 = vld [vmem:[#allocation4 + $0x8] sm:$0xff]
    %v476 = vld [vmem:[#allocation4 + $0x10] sm:$0xff]
    %v477 = vld [vmem:[#allocation4 + $0x18] sm:$0xff]
    %v478 = vld [vmem:[#allocation4 + $0x20] sm:$0xff]
    %v479 = vld [vmem:[#allocation4 + $0x28] sm:$0xff]
    %v480 = vld [vmem:[#allocation4 + $0x30] sm:$0xff]
    %v481 = vld [vmem:[#allocation4 + $0x38] sm:$0xff]
    %v482 = vld [vmem:[#allocation4 + $0x40] sm:$0xff]
    %v483 = vld [vmem:[#allocation4 + $0x48] sm:$0xff]
    %v484 = vld [vmem:[#allocation4 + $0x50] sm:$0xff]
    %v485 = vld [vmem:[#allocation4 + $0x58] sm:$0xff]
    %v486 = vld [vmem:[#allocation4 + $0x60] sm:$0xff]
    %v487 = vld [vmem:[#allocation4 + $0x68] sm:$0xff]
    %v488 = vld [vmem:[#allocation4 + $0x70] sm:$0xff]
    %v489 = vld [vmem:[#allocation4 + $0x78] sm:$0xff]
    %v490 = vld [vmem:[#allocation4 + $0x80] sm:$0xff]
    %v491 = vld [vmem:[#allocation4 + $0x88] sm:$0xff]
    %v492 = vld [vmem:[#allocation4 + $0x90] sm:$0xff]
    %v493 = vld [vmem:[#allocation4 + $0x98] sm:$0xff]
    %v494 = vld [vmem:[#allocation4 + $0xa0] sm:$0xff]
    %v495 = vld [vmem:[#allocation4 + $0xa8] sm:$0xff]
    %v496 = vld [vmem:[#allocation4 + $0xb0] sm:$0xff]
    %v497 = vld [vmem:[#allocation4 + $0xb8] sm:$0xff]
    %v498 = vld [vmem:[#allocation4 + $0xc0] sm:$0xff]
    %v499 = vld [vmem:[#allocation4 + $0xc8] sm:$0xff]
    %v500 = vld [vmem:[#allocation4 + $0xd0] sm:$0xff]
    %v501 = vld [vmem:[#allocation4 + $0xd8] sm:$0xff]
    %v502 = vld [vmem:[#allocation4 + $0xe0] sm:$0xff]
    %v503 = vld [vmem:[#allocation4 + $0xe8] sm:$0xff]
    %v504 = vld [vmem:[#allocation4 + $0xf0] sm:$0xff]
    %v505 = vld [vmem:[#allocation4 + $0xf8] sm:$0xff]
    %v506 = vld [vmem:[#allocation4 + $0x100] sm:$0xff]
    %v507 = vld [vmem:[#allocation4 + $0x108] sm:$0xff]
    %v508 = vld [vmem:[#allocation4 + $0x110] sm:$0xff]
    %v509 = vld [vmem:[#allocation4 + $0x118] sm:$0xff]
    %v510 = vld [vmem:[#allocation4 + $0x120] sm:$0xff]
    %v511 = vld [vmem:[#allocation4 + $0x128] sm:$0xff]
    %v512 = vld [vmem:[#allocation4 + $0x130] sm:$0xff]
    %v513 = vld [vmem:[#allocation4 + $0x138] sm:$0xff]
    %v514 = vld [vmem:[#allocation4 + $0x140] sm:$0xff]
    %v515 = vld [vmem:[#allocation4 + $0x148] sm:$0xff]
    %v516 = vld [vmem:[#allocation4 + $0x150] sm:$0xff]
    %v517 = vld [vmem:[#allocation4 + $0x158] sm:$0xff]
    %v518 = vld [vmem:[#allocation4 + $0x160] sm:$0xff]
    %v519 = vld [vmem:[#allocation4 + $0x168] sm:$0xff]
    %v520 = vld [vmem:[#allocation4 + $0x170] sm:$0xff]
    %v521 = vld [vmem:[#allocation4 + $0x178] sm:$0xff]
    %v522 = vld [vmem:[#allocation4 + $0x180] sm:$0xff]
    %v523 = vld [vmem:[#allocation4 + $0x188] sm:$0xff]
    %v524 = vld [vmem:[#allocation4 + $0x190] sm:$0xff]
    %v525 = vld [vmem:[#allocation4 + $0x198] sm:$0xff]
    %v526 = vld [vmem:[#allocation4 + $0x1a0] sm:$0xff]
    %v527 = vld [vmem:[#allocation4 + $0x1a8] sm:$0xff]
    %v528 = vld [vmem:[#allocation4 + $0x1b0] sm:$0xff]
    %v529 = vld [vmem:[#allocation4 + $0x1b8] sm:$0xff]
    %v530 = vld [vmem:[#allocation4 + $0x1c0] sm:$0xff]
    %v531 = vld [vmem:[#allocation4 + $0x1c8] sm:$0xff]
    %v532 = vld [vmem:[#allocation4 + $0x1d0] sm:$0xff]
    %v533 = vld [vmem:[#allocation4 + $0x1d8] sm:$0xff]
    %v534 = vld [vmem:[#allocation4 + $0x1e0] sm:$0xff]
    %v535 = vld [vmem:[#allocation4 + $0x1e8] sm:$0xff]
    %v536 = vld [vmem:[#allocation4 + $0x1f0] sm:$0xff]
    %v537 = vld [vmem:[#allocation4 + $0x1f8] sm:$0xff]
    %v538 = vld [vmem:[#allocation9 + $0x7] sm:$0xf]
    %v540 = vlaneseq
    %v541 = vshrl.u32 %v540, 7
    %v542 = vsub.s32 0, %v541
    %v543 = vrot.slane %v538, %v542
    %v544 = vlaneseq
    %v545 = vshrl.u32 %v544, 7
    %v546 = vsub.s32 1, %v545
    %v547 = vrot.slane %v538, %v546
    %v548 = vlaneseq
    %v549 = vshrl.u32 %v548, 7
    %v550 = vsub.s32 2, %v549
    %v551 = vrot.slane %v538, %v550
    %v552 = vlaneseq
    %v553 = vshrl.u32 %v552, 7
    %v554 = vsub.s32 3, %v553
    %v555 = vrot.slane %v538, %v554
    %v624 = vunpack.c.l.b16 %v474
    %v625 = vunpack.c.h.b16 %v474
    %v626 = vunpack.c.l.b16 %v475
    %v627 = vunpack.c.h.b16 %v475
    %v628 = vunpack.c.l.b16 %v476
    %v629 = vunpack.c.h.b16 %v476
    %v630 = vunpack.c.l.b16 %v477
    %v631 = vunpack.c.h.b16 %v477
    %v632 = vunpack.c.l.b16 %v478
    %v633 = vunpack.c.h.b16 %v478
    %v634 = vunpack.c.l.b16 %v479
    %v635 = vunpack.c.h.b16 %v479
    %v636 = vunpack.c.l.b16 %v480
    %v637 = vunpack.c.h.b16 %v480
    %v638 = vunpack.c.l.b16 %v481
    %v639 = vunpack.c.h.b16 %v481
    %v640 = vunpack.c.l.b16 %v482
    %v641 = vunpack.c.h.b16 %v482
    %v642 = vunpack.c.l.b16 %v483
    %v643 = vunpack.c.h.b16 %v483
    %v644 = vunpack.c.l.b16 %v484
    %v645 = vunpack.c.h.b16 %v484
    %v646 = vunpack.c.l.b16 %v485
    %v647 = vunpack.c.h.b16 %v485
    %v648 = vunpack.c.l.b16 %v486
    %v649 = vunpack.c.h.b16 %v486
    %v650 = vunpack.c.l.b16 %v487
    %v651 = vunpack.c.h.b16 %v487
    %v652 = vunpack.c.l.b16 %v488
    %v653 = vunpack.c.h.b16 %v488
    %v654 = vunpack.c.l.b16 %v489
    %v655 = vunpack.c.h.b16 %v489
    %v656 = vunpack.c.l.b16 %v490
    %v657 = vunpack.c.h.b16 %v490
    %v658 = vunpack.c.l.b16 %v491
    %v659 = vunpack.c.h.b16 %v491
    %v660 = vunpack.c.l.b16 %v492
    %v661 = vunpack.c.h.b16 %v492
    %v662 = vunpack.c.l.b16 %v493
    %v663 = vunpack.c.h.b16 %v493
    %v664 = vunpack.c.l.b16 %v494
    %v665 = vunpack.c.h.b16 %v494
    %v666 = vunpack.c.l.b16 %v495
    %v667 = vunpack.c.h.b16 %v495
    %v668 = vunpack.c.l.b16 %v496
    %v669 = vunpack.c.h.b16 %v496
    %v670 = vunpack.c.l.b16 %v497
    %v671 = vunpack.c.h.b16 %v497
    %v672 = vunpack.c.l.b16 %v498
    %v673 = vunpack.c.h.b16 %v498
    %v674 = vunpack.c.l.b16 %v499
    %v675 = vunpack.c.h.b16 %v499
    %v676 = vunpack.c.l.b16 %v500
    %v677 = vunpack.c.h.b16 %v500
    %v678 = vunpack.c.l.b16 %v501
    %v679 = vunpack.c.h.b16 %v501
    %v680 = vunpack.c.l.b16 %v502
    %v681 = vunpack.c.h.b16 %v502
    %v682 = vunpack.c.l.b16 %v503
    %v683 = vunpack.c.h.b16 %v503
    %v684 = vunpack.c.l.b16 %v504
    %v685 = vunpack.c.h.b16 %v504
    %v686 = vunpack.c.l.b16 %v505
    %v687 = vunpack.c.h.b16 %v505
    %v688 = vunpack.c.l.b16 %v506
    %v689 = vunpack.c.h.b16 %v506
    %v690 = vunpack.c.l.b16 %v507
    %v691 = vunpack.c.h.b16 %v507
    %v692 = vunpack.c.l.b16 %v508
    %v693 = vunpack.c.h.b16 %v508
    %v694 = vunpack.c.l.b16 %v509
    %v695 = vunpack.c.h.b16 %v509
    %v696 = vunpack.c.l.b16 %v510
    %v697 = vunpack.c.h.b16 %v510
    %v698 = vunpack.c.l.b16 %v511
    %v699 = vunpack.c.h.b16 %v511
    %v700 = vunpack.c.l.b16 %v512
    %v701 = vunpack.c.h.b16 %v512
    %v702 = vunpack.c.l.b16 %v513
    %v703 = vunpack.c.h.b16 %v513
    %v704 = vunpack.c.l.b16 %v514
    %v705 = vunpack.c.h.b16 %v514
    %v706 = vunpack.c.l.b16 %v515
    %v707 = vunpack.c.h.b16 %v515
    %v708 = vunpack.c.l.b16 %v516
    %v709 = vunpack.c.h.b16 %v516
    %v710 = vunpack.c.l.b16 %v517
    %v711 = vunpack.c.h.b16 %v517
    %v712 = vunpack.c.l.b16 %v518
    %v713 = vunpack.c.h.b16 %v518
    %v714 = vunpack.c.l.b16 %v519
    %v715 = vunpack.c.h.b16 %v519
    %v716 = vunpack.c.l.b16 %v520
    %v717 = vunpack.c.h.b16 %v520
    %v718 = vunpack.c.l.b16 %v521
    %v719 = vunpack.c.h.b16 %v521
    %v720 = vunpack.c.l.b16 %v522
    %v721 = vunpack.c.h.b16 %v522
    %v722 = vunpack.c.l.b16 %v523
    %v723 = vunpack.c.h.b16 %v523
    %v724 = vunpack.c.l.b16 %v524
    %v725 = vunpack.c.h.b16 %v524
    %v726 = vunpack.c.l.b16 %v525
    %v727 = vunpack.c.h.b16 %v525
    %v728 = vunpack.c.l.b16 %v526
    %v729 = vunpack.c.h.b16 %v526
    %v730 = vunpack.c.l.b16 %v527
    %v731 = vunpack.c.h.b16 %v527
    %v732 = vunpack.c.l.b16 %v528
    %v733 = vunpack.c.h.b16 %v528
    %v734 = vunpack.c.l.b16 %v529
    %v735 = vunpack.c.h.b16 %v529
    %v736 = vunpack.c.l.b16 %v530
    %v737 = vunpack.c.h.b16 %v530
    %v738 = vunpack.c.l.b16 %v531
    %v739 = vunpack.c.h.b16 %v531
    %v740 = vunpack.c.l.b16 %v532
    %v741 = vunpack.c.h.b16 %v532
    %v742 = vunpack.c.l.b16 %v533
    %v743 = vunpack.c.h.b16 %v533
    %v744 = vunpack.c.l.b16 %v534
    %v745 = vunpack.c.h.b16 %v534
    %v746 = vunpack.c.l.b16 %v535
    %v747 = vunpack.c.h.b16 %v535
    %v748 = vunpack.c.l.b16 %v536
    %v749 = vunpack.c.h.b16 %v536
    %v750 = vunpack.c.l.b16 %v537
    %v751 = vunpack.c.h.b16 %v537
    %v752 = vpack.c.b16 %v628, %v624
    %v753 = vpack.c.b16 %v629, %v625
    %v754 = vpack.c.b16 %v630, %v626
    %v755 = vpack.c.b16 %v631, %v627
    %v756 = vpack.c.b16 %v636, %v632
    %v757 = vpack.c.b16 %v637, %v633
    %v758 = vpack.c.b16 %v638, %v634
    %v759 = vpack.c.b16 %v639, %v635
    %v760 = vpack.c.b16 %v644, %v640
    %v761 = vpack.c.b16 %v645, %v641
    %v762 = vpack.c.b16 %v646, %v642
    %v763 = vpack.c.b16 %v647, %v643
    %v764 = vpack.c.b16 %v652, %v648
    %v765 = vpack.c.b16 %v653, %v649
    %v766 = vpack.c.b16 %v654, %v650
    %v767 = vpack.c.b16 %v655, %v651
    %v768 = vpack.c.b16 %v660, %v656
    %v769 = vpack.c.b16 %v661, %v657
    %v770 = vpack.c.b16 %v662, %v658
    %v771 = vpack.c.b16 %v663, %v659
    %v772 = vpack.c.b16 %v668, %v664
    %v773 = vpack.c.b16 %v669, %v665
    %v774 = vpack.c.b16 %v670, %v666
    %v775 = vpack.c.b16 %v671, %v667
    %v776 = vpack.c.b16 %v676, %v672
    %v777 = vpack.c.b16 %v677, %v673
    %v778 = vpack.c.b16 %v678, %v674
    %v779 = vpack.c.b16 %v679, %v675
    %v780 = vpack.c.b16 %v684, %v680
    %v781 = vpack.c.b16 %v685, %v681
    %v782 = vpack.c.b16 %v686, %v682
    %v783 = vpack.c.b16 %v687, %v683
    %v784 = vpack.c.b16 %v692, %v688
    %v785 = vpack.c.b16 %v693, %v689
    %v786 = vpack.c.b16 %v694, %v690
    %v787 = vpack.c.b16 %v695, %v691
    %v788 = vpack.c.b16 %v700, %v696
    %v789 = vpack.c.b16 %v701, %v697
    %v790 = vpack.c.b16 %v702, %v698
    %v791 = vpack.c.b16 %v703, %v699
    %v792 = vpack.c.b16 %v708, %v704
    %v793 = vpack.c.b16 %v709, %v705
    %v794 = vpack.c.b16 %v710, %v706
    %v795 = vpack.c.b16 %v711, %v707
    %v796 = vpack.c.b16 %v716, %v712
    %v797 = vpack.c.b16 %v717, %v713
    %v798 = vpack.c.b16 %v718, %v714
    %v799 = vpack.c.b16 %v719, %v715
    %v800 = vpack.c.b16 %v724, %v720
    %v801 = vpack.c.b16 %v725, %v721
    %v802 = vpack.c.b16 %v726, %v722
    %v803 = vpack.c.b16 %v727, %v723
    %v804 = vpack.c.b16 %v732, %v728
    %v805 = vpack.c.b16 %v733, %v729
    %v806 = vpack.c.b16 %v734, %v730
    %v807 = vpack.c.b16 %v735, %v731
    %v808 = vpack.c.b16 %v740, %v736
    %v809 = vpack.c.b16 %v741, %v737
    %v810 = vpack.c.b16 %v742, %v738
    %v811 = vpack.c.b16 %v743, %v739
    %v812 = vpack.c.b16 %v748, %v744
    %v813 = vpack.c.b16 %v749, %v745
    %v814 = vpack.c.b16 %v750, %v746
    %v815 = vpack.c.b16 %v751, %v747
    %880 = vmatprep.subr.bf16.mxu0 %v753
    %881 = vmatpush1.bf16.msra.mxu0 %v752
    %882 = vmatprep.subr.bf16.mxu0 %v757
    %883 = vmatpush1.bf16.msra.mxu0 %v756
    %884 = vmatprep.subr.bf16.mxu0 %v761
    %885 = vmatpush1.bf16.msra.mxu0 %v760
    %886 = vmatprep.subr.bf16.mxu0 %v765
    %887 = vmatpush1.bf16.msra.mxu0 %v764
    %888 = vmatprep.subr.bf16.mxu0 %v769
    %889 = vmatpush1.bf16.msra.mxu0 %v768
    %890 = vmatprep.subr.bf16.mxu0 %v773
    %891 = vmatpush1.bf16.msra.mxu0 %v772
    %892 = vmatprep.subr.bf16.mxu0 %v777
    %893 = vmatpush1.bf16.msra.mxu0 %v776
    %894 = vmatprep.subr.bf16.mxu0 %v781
    %895 = vmatpush1.bf16.msra.mxu0 %v780
    %896 = vmatprep.subr.bf16.mxu0 %v785
    %897 = vmatpush1.bf16.msra.mxu0 %v784
    %898 = vmatprep.subr.bf16.mxu0 %v789
    %899 = vmatpush1.bf16.msra.mxu0 %v788
    %900 = vmatprep.subr.bf16.mxu0 %v793
    %901 = vmatpush1.bf16.msra.mxu0 %v792
    %902 = vmatprep.subr.bf16.mxu0 %v797
    %903 = vmatpush1.bf16.msra.mxu0 %v796
    %904 = vmatprep.subr.bf16.mxu0 %v801
    %905 = vmatpush1.bf16.msra.mxu0 %v800
    %906 = vmatprep.subr.bf16.mxu0 %v805
    %907 = vmatpush1.bf16.msra.mxu0 %v804
    %908 = vmatprep.subr.bf16.mxu0 %v809
    %909 = vmatpush1.bf16.msra.mxu0 %v808
    %910 = vmatprep.subr.bf16.mxu0 %v813
    %911 = vmatpush1.bf16.msra.mxu0 %v812
    %912 = vmatprep.mubr.bf16.mxu0 %v473
    %913 = vmatmul.mubr.bf16.gmra.mrb[0].mxu0 %v472
    %v914 = vpop.f32.mrb[0].mxu0
    %v915 = vadd.f32 %v543, %v914
    %v916 = vpop.f32.mrb[0].mxu0
    %v917 = vadd.f32 %v547, %v916
    %v918 = vpop.f32.mrb[0].mxu0
    %v919 = vpop.f32.mrb[0].mxu0
    %920 = vdwg.mxu0
    %921 = vmatprep.subr.bf16.mxu0 %v755
    %922 = vmatpush1.bf16.msra.mxu0 %v754
    %923 = vmatprep.subr.bf16.mxu0 %v759
    %924 = vmatpush1.bf16.msra.mxu0 %v758
    %925 = vmatprep.subr.bf16.mxu0 %v763
    %926 = vmatpush1.bf16.msra.mxu0 %v762
    %927 = vmatprep.subr.bf16.mxu0 %v767
    %928 = vmatpush1.bf16.msra.mxu0 %v766
    %929 = vmatprep.subr.bf16.mxu0 %v771
    %930 = vmatpush1.bf16.msra.mxu0 %v770
    %931 = vmatprep.subr.bf16.mxu0 %v775
    %932 = vmatpush1.bf16.msra.mxu0 %v774
    %933 = vmatprep.subr.bf16.mxu0 %v779
    %934 = vmatpush1.bf16.msra.mxu0 %v778
    %935 = vmatprep.subr.bf16.mxu0 %v783
    %936 = vmatpush1.bf16.msra.mxu0 %v782
    %937 = vmatprep.subr.bf16.mxu0 %v787
    %938 = vmatpush1.bf16.msra.mxu0 %v786
    %939 = vmatprep.subr.bf16.mxu0 %v791
    %940 = vmatpush1.bf16.msra.mxu0 %v790
    %941 = vmatprep.subr.bf16.mxu0 %v795
    %942 = vmatpush1.bf16.msra.mxu0 %v794
    %943 = vmatprep.subr.bf16.mxu0 %v799
    %944 = vmatpush1.bf16.msra.mxu0 %v798
    %945 = vmatprep.subr.bf16.mxu0 %v803
    %946 = vmatpush1.bf16.msra.mxu0 %v802
    %947 = vmatprep.subr.bf16.mxu0 %v807
    %948 = vmatpush1.bf16.msra.mxu0 %v806
    %949 = vmatprep.subr.bf16.mxu0 %v811
    %950 = vmatpush1.bf16.msra.mxu0 %v810
    %951 = vmatprep.subr.bf16.mxu0 %v815
    %952 = vmatpush1.bf16.msra.mxu0 %v814
    %953 = vmatprep.mubr.bf16.mxu0 %v473
    %954 = vmatmul.mubr.bf16.gmra.mrb[0].mxu0 %v472
    %v955 = vpop.f32.mrb[0].mxu0
    %v956 = vadd.f32 %v551, %v955
    %v957 = vpop.f32.mrb[0].mxu0
    %v958 = vadd.f32 %v555, %v957
    %v959 = vpop.f32.mrb[0].mxu0
    %v960 = vpop.f32.mrb[0].mxu0
    %961 = vdwg.mxu0
    %v962 = vld [vmem:[#allocation9 + $0xb] sm:$0xf]
    %v963 = vld [vmem:[#allocation9 + $0xf] sm:$0xf]
    %v964 = vrot.slane %v915, 4
    %v965 = vadd.f32 %v915, %v964
    %v966 = vrot.slane %v965, 2
    %v967 = vadd.f32 %v965, %v966
    %v968 = vrot.slane %v967, 1
    %v969 = vadd.f32 %v967, %v968
    %v970 = vrot.slane %v917, 4
    %v971 = vadd.f32 %v917, %v970
    %v972 = vrot.slane %v971, 2
    %v973 = vadd.f32 %v971, %v972
    %v974 = vrot.slane %v973, 1
    %v975 = vadd.f32 %v973, %v974
    %v976 = vrot.slane %v956, 4
    %v977 = vadd.f32 %v956, %v976
    %v978 = vrot.slane %v977, 2
    %v979 = vadd.f32 %v977, %v978
    %v980 = vrot.slane %v979, 1
    %v981 = vadd.f32 %v979, %v980
    %v982 = vrot.slane %v958, 4
    %v983 = vadd.f32 %v958, %v982
    %v984 = vrot.slane %v983, 2
    %v985 = vadd.f32 %v983, %v984
    %v986 = vrot.slane %v985, 1
    %v987 = vadd.f32 %v985, %v986
    %v988 = vmul.f32 %v969, %v373
    %v989 = vmul.f32 %v975, %v373
    %v990 = vmul.f32 %v981, %v373
    %v991 = vmul.f32 %v987, %v373
    %v992 = vmul.f32 %v915, %v915
    %v993 = vmul.f32 %v917, %v917
    %v994 = vmul.f32 %v956, %v956
    %v995 = vmul.f32 %v958, %v958
    %v996 = vrot.slane %v992, 4
    %v997 = vadd.f32 %v992, %v996
    %v998 = vrot.slane %v997, 2
    %v999 = vadd.f32 %v997, %v998
    %v1000 = vrot.slane %v999, 1
    %v1001 = vadd.f32 %v999, %v1000
    %v1002 = vrot.slane %v993, 4
    %v1003 = vadd.f32 %v993, %v1002
    %v1004 = vrot.slane %v1003, 2
    %v1005 = vadd.f32 %v1003, %v1004
    %v1006 = vrot.slane %v1005, 1
    %v1007 = vadd.f32 %v1005, %v1006
    %v1008 = vrot.slane %v994, 4
    %v1009 = vadd.f32 %v994, %v1008
    %v1010 = vrot.slane %v1009, 2
    %v1011 = vadd.f32 %v1009, %v1010
    %v1012 = vrot.slane %v1011, 1
    %v1013 = vadd.f32 %v1011, %v1012
    %v1014 = vrot.slane %v995, 4
    %v1015 = vadd.f32 %v995, %v1014
    %v1016 = vrot.slane %v1015, 2
    %v1017 = vadd.f32 %v1015, %v1016
    %v1018 = vrot.slane %v1017, 1
    %v1019 = vadd.f32 %v1017, %v1018
    %v1020 = vmul.f32 %v1001, %v373
    %v1021 = vmul.f32 %v1007, %v373
    %v1022 = vmul.f32 %v1013, %v373
    %v1023 = vmul.f32 %v1019, %v373
    %v1024 = vmul.f32 %v988, %v988
    %v1025 = vmul.f32 %v989, %v989
    %v1026 = vmul.f32 %v990, %v990
    %v1027 = vmul.f32 %v991, %v991
    %v1028 = vsub.f32 %v1020, %v1024
    %v1029 = vsub.f32 %v1021, %v1025
    %v1030 = vsub.f32 %v1022, %v1026
    %v1031 = vsub.f32 %v1023, %v1027
    %v1032 = vadd.f32 %v1028, 0.8
    %v1033 = vadd.f32 %v1029, 0.8
    %v1034 = vadd.f32 %v1030, 0.8
    %v1035 = vadd.f32 %v1031, 0.8
    %v1036 = vrsqrt.pop %v1032
    %v1037 = vrsqrt.pop %v1033
    %v1038 = vrsqrt.pop %v1034
    %v1039 = vrsqrt.pop %v1035
    %v1044 = vcombine.low %v1036, %v1037
    %v1045 = vcombine.low %v1038, %v1039
    %v1047 = vunpack.c.l.s4 1966171168
    %v1048 = vunpack.c.0.s8 %v1047
    %v1049 = vlaneseq
    %v1050 = vshrl.u32 %v1049, 7
    %v1051 = vsub.s32 %v1048, %v1050
    %v1052 = vrot.slane %v1044, %v1051
    %v1054 = vunpack.c.l.s4 1966171168
    %v1055 = vunpack.c.0.s8 %v1054
    %v1056 = vlaneseq
    %v1057 = vshrl.u32 %v1056, 7
    %v1058 = vsub.s32 %v1055, %v1057
    %v1059 = vrot.slane %v1045, %v1058
    %v1060 = vcombine.low %v1052, %v1059
    %v1062 = vunpack.c.l.s4 1966171168
    %v1063 = vunpack.c.0.s8 %v1062
    %v1064 = vlaneseq
    %v1065 = vshrl.u32 %v1064, 7
    %v1066 = vsub.s32 %v1063, %v1065
    %v1067 = vrot.slane %v1060, %v1066
    %v1069 = vmul.f32 %v962, %v1067
    %v1071 = vlaneseq
    %v1072 = vshrl.u32 %v1071, 7
    %v1073 = vsub.s32 0, %v1072
    %v1074 = vrot.slane %v1069, %v1073
    %v1075 = vlaneseq
    %v1076 = vshrl.u32 %v1075, 7
    %v1077 = vsub.s32 1, %v1076
    %v1078 = vrot.slane %v1069, %v1077
    %v1079 = vlaneseq
    %v1080 = vshrl.u32 %v1079, 7
    %v1081 = vsub.s32 2, %v1080
    %v1082 = vrot.slane %v1069, %v1081
    %v1083 = vlaneseq
    %v1084 = vshrl.u32 %v1083, 7
    %v1085 = vsub.s32 3, %v1084
    %v1086 = vrot.slane %v1069, %v1085
    %v1091 = vmul.f32 %v915, %v1074
    %v1092 = vmul.f32 %v917, %v1078
    %v1093 = vmul.f32 %v956, %v1082
    %v1094 = vmul.f32 %v958, %v1086
    %v1095 = vmul.f32 %v988, %v1074
    %v1096 = vmul.f32 %v989, %v1078
    %v1097 = vmul.f32 %v990, %v1082
    %v1098 = vmul.f32 %v991, %v1086
    %v1103 = vcombine.low %v1095, %v1096
    %v1104 = vcombine.low %v1097, %v1098
    %v1106 = vunpack.c.l.s4 1966171168
    %v1107 = vunpack.c.0.s8 %v1106
    %v1108 = vlaneseq
    %v1109 = vshrl.u32 %v1108, 7
    %v1110 = vsub.s32 %v1107, %v1109
    %v1111 = vrot.slane %v1103, %v1110
    %v1113 = vunpack.c.l.s4 1966171168
    %v1114 = vunpack.c.0.s8 %v1113
    %v1115 = vlaneseq
    %v1116 = vshrl.u32 %v1115, 7
    %v1117 = vsub.s32 %v1114, %v1116
    %v1118 = vrot.slane %v1104, %v1117
    %v1119 = vcombine.low %v1111, %v1118
    %v1121 = vunpack.c.l.s4 1966171168
    %v1122 = vunpack.c.0.s8 %v1121
    %v1123 = vlaneseq
    %v1124 = vshrl.u32 %v1123, 7
    %v1125 = vsub.s32 %v1122, %v1124
    %v1126 = vrot.slane %v1119, %v1125
    %v1128 = vsub.f32 %v963, %v1126
    %v1130 = vlaneseq
    %v1131 = vshrl.u32 %v1130, 7
    %v1132 = vsub.s32 0, %v1131
    %v1133 = vrot.slane %v1128, %v1132
    %v1134 = vlaneseq
    %v1135 = vshrl.u32 %v1134, 7
    %v1136 = vsub.s32 1, %v1135
    %v1137 = vrot.slane %v1128, %v1136
    %v1138 = vlaneseq
    %v1139 = vshrl.u32 %v1138, 7
    %v1140 = vsub.s32 2, %v1139
    %v1141 = vrot.slane %v1128, %v1140
    %v1142 = vlaneseq
    %v1143 = vshrl.u32 %v1142, 7
    %v1144 = vsub.s32 3, %v1143
    %v1145 = vrot.slane %v1128, %v1144
    %v1150 = vadd.f32 %v1091, %v1133
    %v1151 = vadd.f32 %v1092, %v1137
    %v1152 = vadd.f32 %v1093, %v1141
    %v1153 = vadd.f32 %v1094, %v1145
    %vm1154 = vcmp.gt.f32.partialorder %v1150, 0.0
    %vm1155 = vcmp.gt.f32.partialorder %v1151, 0.0
    %vm1156 = vcmp.gt.f32.partialorder %v1152, 0.0
    %vm1157 = vcmp.gt.f32.partialorder %v1153, 0.0
    %v1158 = vmul.f32 %v1150, 0.2
    %v1159 = vmul.f32 %v1151, 0.2
    %v1160 = vmul.f32 %v1152, 0.2
    %v1161 = vmul.f32 %v1153, 0.2
    %v1162 = vsel %vm1154, %v1150, %v1158
    %v1163 = vsel %vm1155, %v1151, %v1159
    %v1164 = vsel %vm1156, %v1152, %v1160
    %v1165 = vsel %vm1157, %v1153, %v1161
    %v1166 = vpack.c.bf16 %v1162, %v1162
    %v1167 = vpack.c.bf16 %v1163, %v1163
    %v1168 = vpack.c.bf16 %v1164, %v1164
    %v1169 = vpack.c.bf16 %v1165, %v1165
    %v1170 = vld [vmem:[#allocation6] sm:$0xff]
    %v1171 = vld [vmem:[#allocation6 + $0x8] sm:$0xff]
    %v1172 = vld [vmem:[#allocation6 + $0x10] sm:$0xff]
    %v1173 = vld [vmem:[#allocation6 + $0x18] sm:$0xff]
    %v1174 = vld [vmem:[#allocation6 + $0x20] sm:$0xff]
    %v1175 = vld [vmem:[#allocation6 + $0x28] sm:$0xff]
    %v1176 = vld [vmem:[#allocation6 + $0x30] sm:$0xff]
    %v1177 = vld [vmem:[#allocation6 + $0x38] sm:$0xff]
    %v1178 = vld [vmem:[#allocation6 + $0x40] sm:$0xff]
    %v1179 = vld [vmem:[#allocation6 + $0x48] sm:$0xff]
    %v1180 = vld [vmem:[#allocation6 + $0x50] sm:$0xff]
    %v1181 = vld [vmem:[#allocation6 + $0x58] sm:$0xff]
    %v1182 = vld [vmem:[#allocation6 + $0x60] sm:$0xff]
    %v1183 = vld [vmem:[#allocation6 + $0x68] sm:$0xff]
    %v1184 = vld [vmem:[#allocation6 + $0x70] sm:$0xff]
    %v1185 = vld [vmem:[#allocation6 + $0x78] sm:$0xff]
    %v1186 = vld [vmem:[#allocation6 + $0x80] sm:$0xff]
    %v1187 = vld [vmem:[#allocation6 + $0x88] sm:$0xff]
    %v1188 = vld [vmem:[#allocation6 + $0x90] sm:$0xff]
    %v1189 = vld [vmem:[#allocation6 + $0x98] sm:$0xff]
    %v1190 = vld [vmem:[#allocation6 + $0xa0] sm:$0xff]
    %v1191 = vld [vmem:[#allocation6 + $0xa8] sm:$0xff]
    %v1192 = vld [vmem:[#allocation6 + $0xb0] sm:$0xff]
    %v1193 = vld [vmem:[#allocation6 + $0xb8] sm:$0xff]
    %v1194 = vld [vmem:[#allocation6 + $0xc0] sm:$0xff]
    %v1195 = vld [vmem:[#allocation6 + $0xc8] sm:$0xff]
    %v1196 = vld [vmem:[#allocation6 + $0xd0] sm:$0xff]
    %v1197 = vld [vmem:[#allocation6 + $0xd8] sm:$0xff]
    %v1198 = vld [vmem:[#allocation6 + $0xe0] sm:$0xff]
    %v1199 = vld [vmem:[#allocation6 + $0xe8] sm:$0xff]
    %v1200 = vld [vmem:[#allocation6 + $0xf0] sm:$0xff]
    %v1201 = vld [vmem:[#allocation6 + $0xf8] sm:$0xff]
    %v1202 = vld [vmem:[#allocation6 + $0x100] sm:$0xff]
    %v1203 = vld [vmem:[#allocation6 + $0x108] sm:$0xff]
    %v1204 = vld [vmem:[#allocation6 + $0x110] sm:$0xff]
    %v1205 = vld [vmem:[#allocation6 + $0x118] sm:$0xff]
    %v1206 = vld [vmem:[#allocation6 + $0x120] sm:$0xff]
    %v1207 = vld [vmem:[#allocation6 + $0x128] sm:$0xff]
    %v1208 = vld [vmem:[#allocation6 + $0x130] sm:$0xff]
    %v1209 = vld [vmem:[#allocation6 + $0x138] sm:$0xff]
    %v1210 = vld [vmem:[#allocation6 + $0x140] sm:$0xff]
    %v1211 = vld [vmem:[#allocation6 + $0x148] sm:$0xff]
    %v1212 = vld [vmem:[#allocation6 + $0x150] sm:$0xff]
    %v1213 = vld [vmem:[#allocation6 + $0x158] sm:$0xff]
    %v1214 = vld [vmem:[#allocation6 + $0x160] sm:$0xff]
    %v1215 = vld [vmem:[#allocation6 + $0x168] sm:$0xff]
    %v1216 = vld [vmem:[#allocation6 + $0x170] sm:$0xff]
    %v1217 = vld [vmem:[#allocation6 + $0x178] sm:$0xff]
    %v1218 = vld [vmem:[#allocation6 + $0x180] sm:$0xff]
    %v1219 = vld [vmem:[#allocation6 + $0x188] sm:$0xff]
    %v1220 = vld [vmem:[#allocation6 + $0x190] sm:$0xff]
    %v1221 = vld [vmem:[#allocation6 + $0x198] sm:$0xff]
    %v1222 = vld [vmem:[#allocation6 + $0x1a0] sm:$0xff]
    %v1223 = vld [vmem:[#allocation6 + $0x1a8] sm:$0xff]
    %v1224 = vld [vmem:[#allocation6 + $0x1b0] sm:$0xff]
    %v1225 = vld [vmem:[#allocation6 + $0x1b8] sm:$0xff]
    %v1226 = vld [vmem:[#allocation6 + $0x1c0] sm:$0xff]
    %v1227 = vld [vmem:[#allocation6 + $0x1c8] sm:$0xff]
    %v1228 = vld [vmem:[#allocation6 + $0x1d0] sm:$0xff]
    %v1229 = vld [vmem:[#allocation6 + $0x1d8] sm:$0xff]
    %v1230 = vld [vmem:[#allocation6 + $0x1e0] sm:$0xff]
    %v1231 = vld [vmem:[#allocation6 + $0x1e8] sm:$0xff]
    %v1232 = vld [vmem:[#allocation6 + $0x1f0] sm:$0xff]
    %v1233 = vld [vmem:[#allocation6 + $0x1f8] sm:$0xff]
    %v1234 = vld [vmem:[#allocation6 + $0x200] sm:$0xff]
    %v1235 = vld [vmem:[#allocation6 + $0x208] sm:$0xff]
    %v1236 = vld [vmem:[#allocation6 + $0x210] sm:$0xff]
    %v1237 = vld [vmem:[#allocation6 + $0x218] sm:$0xff]
    %v1238 = vld [vmem:[#allocation6 + $0x220] sm:$0xff]
    %v1239 = vld [vmem:[#allocation6 + $0x228] sm:$0xff]
    %v1240 = vld [vmem:[#allocation6 + $0x230] sm:$0xff]
    %v1241 = vld [vmem:[#allocation6 + $0x238] sm:$0xff]
    %v1242 = vld [vmem:[#allocation6 + $0x240] sm:$0xff]
    %v1243 = vld [vmem:[#allocation6 + $0x248] sm:$0xff]
    %v1244 = vld [vmem:[#allocation6 + $0x250] sm:$0xff]
    %v1245 = vld [vmem:[#allocation6 + $0x258] sm:$0xff]
    %v1246 = vld [vmem:[#allocation6 + $0x260] sm:$0xff]
    %v1247 = vld [vmem:[#allocation6 + $0x268] sm:$0xff]
    %v1248 = vld [vmem:[#allocation6 + $0x270] sm:$0xff]
    %v1249 = vld [vmem:[#allocation6 + $0x278] sm:$0xff]
    %v1250 = vld [vmem:[#allocation6 + $0x280] sm:$0xff]
    %v1251 = vld [vmem:[#allocation6 + $0x288] sm:$0xff]
    %v1252 = vld [vmem:[#allocation6 + $0x290] sm:$0xff]
    %v1253 = vld [vmem:[#allocation6 + $0x298] sm:$0xff]
    %v1254 = vld [vmem:[#allocation6 + $0x2a0] sm:$0xff]
    %v1255 = vld [vmem:[#allocation6 + $0x2a8] sm:$0xff]
    %v1256 = vld [vmem:[#allocation6 + $0x2b0] sm:$0xff]
    %v1257 = vld [vmem:[#allocation6 + $0x2b8] sm:$0xff]
    %v1258 = vld [vmem:[#allocation6 + $0x2c0] sm:$0xff]
    %v1259 = vld [vmem:[#allocation6 + $0x2c8] sm:$0xff]
    %v1260 = vld [vmem:[#allocation6 + $0x2d0] sm:$0xff]
    %v1261 = vld [vmem:[#allocation6 + $0x2d8] sm:$0xff]
    %v1262 = vld [vmem:[#allocation6 + $0x2e0] sm:$0xff]
    %v1263 = vld [vmem:[#allocation6 + $0x2e8] sm:$0xff]
    %v1264 = vld [vmem:[#allocation6 + $0x2f0] sm:$0xff]
    %v1265 = vld [vmem:[#allocation6 + $0x2f8] sm:$0xff]
    %v1266 = vld [vmem:[#allocation6 + $0x300] sm:$0xff]
    %v1267 = vld [vmem:[#allocation6 + $0x308] sm:$0xff]
    %v1268 = vld [vmem:[#allocation6 + $0x310] sm:$0xff]
    %v1269 = vld [vmem:[#allocation6 + $0x318] sm:$0xff]
    %v1270 = vld [vmem:[#allocation6 + $0x320] sm:$0xff]
    %v1271 = vld [vmem:[#allocation6 + $0x328] sm:$0xff]
    %v1272 = vld [vmem:[#allocation6 + $0x330] sm:$0xff]
    %v1273 = vld [vmem:[#allocation6 + $0x338] sm:$0xff]
    %v1274 = vld [vmem:[#allocation6 + $0x340] sm:$0xff]
    %v1275 = vld [vmem:[#allocation6 + $0x348] sm:$0xff]
    %v1276 = vld [vmem:[#allocation6 + $0x350] sm:$0xff]
    %v1277 = vld [vmem:[#allocation6 + $0x358] sm:$0xff]
    %v1278 = vld [vmem:[#allocation6 + $0x360] sm:$0xff]
    %v1279 = vld [vmem:[#allocation6 + $0x368] sm:$0xff]
    %v1280 = vld [vmem:[#allocation6 + $0x370] sm:$0xff]
    %v1281 = vld [vmem:[#allocation6 + $0x378] sm:$0xff]
    %v1282 = vld [vmem:[#allocation6 + $0x380] sm:$0xff]
    %v1283 = vld [vmem:[#allocation6 + $0x388] sm:$0xff]
    %v1284 = vld [vmem:[#allocation6 + $0x390] sm:$0xff]
    %v1285 = vld [vmem:[#allocation6 + $0x398] sm:$0xff]
    %v1286 = vld [vmem:[#allocation6 + $0x3a0] sm:$0xff]
    %v1287 = vld [vmem:[#allocation6 + $0x3a8] sm:$0xff]
    %v1288 = vld [vmem:[#allocation6 + $0x3b0] sm:$0xff]
    %v1289 = vld [vmem:[#allocation6 + $0x3b8] sm:$0xff]
    %v1290 = vld [vmem:[#allocation6 + $0x3c0] sm:$0xff]
    %v1291 = vld [vmem:[#allocation6 + $0x3c8] sm:$0xff]
    %v1292 = vld [vmem:[#allocation6 + $0x3d0] sm:$0xff]
    %v1293 = vld [vmem:[#allocation6 + $0x3d8] sm:$0xff]
    %v1294 = vld [vmem:[#allocation6 + $0x3e0] sm:$0xff]
    %v1295 = vld [vmem:[#allocation6 + $0x3e8] sm:$0xff]
    %v1296 = vld [vmem:[#allocation6 + $0x3f0] sm:$0xff]
    %v1297 = vld [vmem:[#allocation6 + $0x3f8] sm:$0xff]
    %v1298 = vld [vmem:[#allocation6 + $0x400] sm:$0xff]
    %v1299 = vld [vmem:[#allocation6 + $0x408] sm:$0xff]
    %v1300 = vld [vmem:[#allocation6 + $0x410] sm:$0xff]
    %v1301 = vld [vmem:[#allocation6 + $0x418] sm:$0xff]
    %v1302 = vld [vmem:[#allocation6 + $0x420] sm:$0xff]
    %v1303 = vld [vmem:[#allocation6 + $0x428] sm:$0xff]
    %v1304 = vld [vmem:[#allocation6 + $0x430] sm:$0xff]
    %v1305 = vld [vmem:[#allocation6 + $0x438] sm:$0xff]
    %v1306 = vld [vmem:[#allocation6 + $0x440] sm:$0xff]
    %v1307 = vld [vmem:[#allocation6 + $0x448] sm:$0xff]
    %v1308 = vld [vmem:[#allocation6 + $0x450] sm:$0xff]
    %v1309 = vld [vmem:[#allocation6 + $0x458] sm:$0xff]
    %v1310 = vld [vmem:[#allocation6 + $0x460] sm:$0xff]
    %v1311 = vld [vmem:[#allocation6 + $0x468] sm:$0xff]
    %v1312 = vld [vmem:[#allocation6 + $0x470] sm:$0xff]
    %v1313 = vld [vmem:[#allocation6 + $0x478] sm:$0xff]
    %v1314 = vld [vmem:[#allocation6 + $0x480] sm:$0xff]
    %v1315 = vld [vmem:[#allocation6 + $0x488] sm:$0xff]
    %v1316 = vld [vmem:[#allocation6 + $0x490] sm:$0xff]
    %v1317 = vld [vmem:[#allocation6 + $0x498] sm:$0xff]
    %v1318 = vld [vmem:[#allocation6 + $0x4a0] sm:$0xff]
    %v1319 = vld [vmem:[#allocation6 + $0x4a8] sm:$0xff]
    %v1320 = vld [vmem:[#allocation6 + $0x4b0] sm:$0xff]
    %v1321 = vld [vmem:[#allocation6 + $0x4b8] sm:$0xff]
    %v1322 = vld [vmem:[#allocation6 + $0x4c0] sm:$0xff]
    %v1323 = vld [vmem:[#allocation6 + $0x4c8] sm:$0xff]
    %v1324 = vld [vmem:[#allocation6 + $0x4d0] sm:$0xff]
    %v1325 = vld [vmem:[#allocation6 + $0x4d8] sm:$0xff]
    %v1326 = vld [vmem:[#allocation6 + $0x4e0] sm:$0xff]
    %v1327 = vld [vmem:[#allocation6 + $0x4e8] sm:$0xff]
    %v1328 = vld [vmem:[#allocation6 + $0x4f0] sm:$0xff]
    %v1329 = vld [vmem:[#allocation6 + $0x4f8] sm:$0xff]
    %v1330 = vld [vmem:[#allocation6 + $0x500] sm:$0xff]
    %v1331 = vld [vmem:[#allocation6 + $0x508] sm:$0xff]
    %v1332 = vld [vmem:[#allocation6 + $0x510] sm:$0xff]
    %v1333 = vld [vmem:[#allocation6 + $0x518] sm:$0xff]
    %v1334 = vld [vmem:[#allocation6 + $0x520] sm:$0xff]
    %v1335 = vld [vmem:[#allocation6 + $0x528] sm:$0xff]
    %v1336 = vld [vmem:[#allocation6 + $0x530] sm:$0xff]
    %v1337 = vld [vmem:[#allocation6 + $0x538] sm:$0xff]
    %v1338 = vld [vmem:[#allocation6 + $0x540] sm:$0xff]
    %v1339 = vld [vmem:[#allocation6 + $0x548] sm:$0xff]
    %v1340 = vld [vmem:[#allocation6 + $0x550] sm:$0xff]
    %v1341 = vld [vmem:[#allocation6 + $0x558] sm:$0xff]
    %v1342 = vld [vmem:[#allocation6 + $0x560] sm:$0xff]
    %v1343 = vld [vmem:[#allocation6 + $0x568] sm:$0xff]
    %v1344 = vld [vmem:[#allocation6 + $0x570] sm:$0xff]
    %v1345 = vld [vmem:[#allocation6 + $0x578] sm:$0xff]
    %v1346 = vld [vmem:[#allocation6 + $0x580] sm:$0xff]
    %v1347 = vld [vmem:[#allocation6 + $0x588] sm:$0xff]
    %v1348 = vld [vmem:[#allocation6 + $0x590] sm:$0xff]
    %v1349 = vld [vmem:[#allocation6 + $0x598] sm:$0xff]
    %v1350 = vld [vmem:[#allocation6 + $0x5a0] sm:$0xff]
    %v1351 = vld [vmem:[#allocation6 + $0x5a8] sm:$0xff]
    %v1352 = vld [vmem:[#allocation6 + $0x5b0] sm:$0xff]
    %v1353 = vld [vmem:[#allocation6 + $0x5b8] sm:$0xff]
    %v1354 = vld [vmem:[#allocation6 + $0x5c0] sm:$0xff]
    %v1355 = vld [vmem:[#allocation6 + $0x5c8] sm:$0xff]
    %v1356 = vld [vmem:[#allocation6 + $0x5d0] sm:$0xff]
    %v1357 = vld [vmem:[#allocation6 + $0x5d8] sm:$0xff]
    %v1358 = vld [vmem:[#allocation6 + $0x5e0] sm:$0xff]
    %v1359 = vld [vmem:[#allocation6 + $0x5e8] sm:$0xff]
    %v1360 = vld [vmem:[#allocation6 + $0x5f0] sm:$0xff]
    %v1361 = vld [vmem:[#allocation6 + $0x5f8] sm:$0xff]
    %v1362 = vld [vmem:[#allocation6 + $0x600] sm:$0xff]
    %v1363 = vld [vmem:[#allocation6 + $0x608] sm:$0xff]
    %v1364 = vld [vmem:[#allocation6 + $0x610] sm:$0xff]
    %v1365 = vld [vmem:[#allocation6 + $0x618] sm:$0xff]
    %v1366 = vld [vmem:[#allocation6 + $0x620] sm:$0xff]
    %v1367 = vld [vmem:[#allocation6 + $0x628] sm:$0xff]
    %v1368 = vld [vmem:[#allocation6 + $0x630] sm:$0xff]
    %v1369 = vld [vmem:[#allocation6 + $0x638] sm:$0xff]
    %v1370 = vld [vmem:[#allocation6 + $0x640] sm:$0xff]
    %v1371 = vld [vmem:[#allocation6 + $0x648] sm:$0xff]
    %v1372 = vld [vmem:[#allocation6 + $0x650] sm:$0xff]
    %v1373 = vld [vmem:[#allocation6 + $0x658] sm:$0xff]
    %v1374 = vld [vmem:[#allocation6 + $0x660] sm:$0xff]
    %v1375 = vld [vmem:[#allocation6 + $0x668] sm:$0xff]
    %v1376 = vld [vmem:[#allocation6 + $0x670] sm:$0xff]
    %v1377 = vld [vmem:[#allocation6 + $0x678] sm:$0xff]
    %v1378 = vld [vmem:[#allocation6 + $0x680] sm:$0xff]
    %v1379 = vld [vmem:[#allocation6 + $0x688] sm:$0xff]
    %v1380 = vld [vmem:[#allocation6 + $0x690] sm:$0xff]
    %v1381 = vld [vmem:[#allocation6 + $0x698] sm:$0xff]
    %v1382 = vld [vmem:[#allocation6 + $0x6a0] sm:$0xff]
    %v1383 = vld [vmem:[#allocation6 + $0x6a8] sm:$0xff]
    %v1384 = vld [vmem:[#allocation6 + $0x6b0] sm:$0xff]
    %v1385 = vld [vmem:[#allocation6 + $0x6b8] sm:$0xff]
    %v1386 = vld [vmem:[#allocation6 + $0x6c0] sm:$0xff]
    %v1387 = vld [vmem:[#allocation6 + $0x6c8] sm:$0xff]
    %v1388 = vld [vmem:[#allocation6 + $0x6d0] sm:$0xff]
    %v1389 = vld [vmem:[#allocation6 + $0x6d8] sm:$0xff]
    %v1390 = vld [vmem:[#allocation6 + $0x6e0] sm:$0xff]
    %v1391 = vld [vmem:[#allocation6 + $0x6e8] sm:$0xff]
    %v1392 = vld [vmem:[#allocation6 + $0x6f0] sm:$0xff]
    %v1393 = vld [vmem:[#allocation6 + $0x6f8] sm:$0xff]
    %v1394 = vld [vmem:[#allocation6 + $0x700] sm:$0xff]
    %v1395 = vld [vmem:[#allocation6 + $0x708] sm:$0xff]
    %v1396 = vld [vmem:[#allocation6 + $0x710] sm:$0xff]
    %v1397 = vld [vmem:[#allocation6 + $0x718] sm:$0xff]
    %v1398 = vld [vmem:[#allocation6 + $0x720] sm:$0xff]
    %v1399 = vld [vmem:[#allocation6 + $0x728] sm:$0xff]
    %v1400 = vld [vmem:[#allocation6 + $0x730] sm:$0xff]
    %v1401 = vld [vmem:[#allocation6 + $0x738] sm:$0xff]
    %v1402 = vld [vmem:[#allocation6 + $0x740] sm:$0xff]
    %v1403 = vld [vmem:[#allocation6 + $0x748] sm:$0xff]
    %v1404 = vld [vmem:[#allocation6 + $0x750] sm:$0xff]
    %v1405 = vld [vmem:[#allocation6 + $0x758] sm:$0xff]
    %v1406 = vld [vmem:[#allocation6 + $0x760] sm:$0xff]
    %v1407 = vld [vmem:[#allocation6 + $0x768] sm:$0xff]
    %v1408 = vld [vmem:[#allocation6 + $0x770] sm:$0xff]
    %v1409 = vld [vmem:[#allocation6 + $0x778] sm:$0xff]
    %v1410 = vld [vmem:[#allocation6 + $0x780] sm:$0xff]
    %v1411 = vld [vmem:[#allocation6 + $0x788] sm:$0xff]
    %v1412 = vld [vmem:[#allocation6 + $0x790] sm:$0xff]
    %v1413 = vld [vmem:[#allocation6 + $0x798] sm:$0xff]
    %v1414 = vld [vmem:[#allocation6 + $0x7a0] sm:$0xff]
    %v1415 = vld [vmem:[#allocation6 + $0x7a8] sm:$0xff]
    %v1416 = vld [vmem:[#allocation6 + $0x7b0] sm:$0xff]
    %v1417 = vld [vmem:[#allocation6 + $0x7b8] sm:$0xff]
    %v1418 = vld [vmem:[#allocation6 + $0x7c0] sm:$0xff]
    %v1419 = vld [vmem:[#allocation6 + $0x7c8] sm:$0xff]
    %v1420 = vld [vmem:[#allocation6 + $0x7d0] sm:$0xff]
    %v1421 = vld [vmem:[#allocation6 + $0x7d8] sm:$0xff]
    %v1422 = vld [vmem:[#allocation6 + $0x7e0] sm:$0xff]
    %v1423 = vld [vmem:[#allocation6 + $0x7e8] sm:$0xff]
    %v1424 = vld [vmem:[#allocation6 + $0x7f0] sm:$0xff]
    %v1425 = vld [vmem:[#allocation6 + $0x7f8] sm:$0xff]
    %v1426 = vld [vmem:[#allocation9 + $0x13] sm:$0xff]
    %v1428 = vlaneseq
    %v1429 = vshrl.u32 %v1428, 7
    %v1430 = vsub.s32 0, %v1429
    %v1431 = vrot.slane %v1426, %v1430
    %v1432 = vlaneseq
    %v1433 = vshrl.u32 %v1432, 7
    %v1434 = vsub.s32 1, %v1433
    %v1435 = vrot.slane %v1426, %v1434
    %v1436 = vlaneseq
    %v1437 = vshrl.u32 %v1436, 7
    %v1438 = vsub.s32 2, %v1437
    %v1439 = vrot.slane %v1426, %v1438
    %v1440 = vlaneseq
    %v1441 = vshrl.u32 %v1440, 7
    %v1442 = vsub.s32 3, %v1441
    %v1443 = vrot.slane %v1426, %v1442
    %v1444 = vlaneseq
    %v1445 = vshrl.u32 %v1444, 7
    %v1446 = vsub.s32 4, %v1445
    %v1447 = vrot.slane %v1426, %v1446
    %v1448 = vlaneseq
    %v1449 = vshrl.u32 %v1448, 7
    %v1450 = vsub.s32 5, %v1449
    %v1451 = vrot.slane %v1426, %v1450
    %v1452 = vlaneseq
    %v1453 = vshrl.u32 %v1452, 7
    %v1454 = vsub.s32 6, %v1453
    %v1455 = vrot.slane %v1426, %v1454
    %v1456 = vlaneseq
    %v1457 = vshrl.u32 %v1456, 7
    %v1458 = vsub.s32 7, %v1457
    %v1459 = vrot.slane %v1426, %v1458
    %v1724 = vunpack.c.l.b16 %v1170
    %v1725 = vunpack.c.h.b16 %v1170
    %v1726 = vunpack.c.l.b16 %v1171
    %v1727 = vunpack.c.h.b16 %v1171
    %v1728 = vunpack.c.l.b16 %v1172
    %v1729 = vunpack.c.h.b16 %v1172
    %v1730 = vunpack.c.l.b16 %v1173
    %v1731 = vunpack.c.h.b16 %v1173
    %v1732 = vunpack.c.l.b16 %v1174
    %v1733 = vunpack.c.h.b16 %v1174
    %v1734 = vunpack.c.l.b16 %v1175
    %v1735 = vunpack.c.h.b16 %v1175
    %v1736 = vunpack.c.l.b16 %v1176
    %v1737 = vunpack.c.h.b16 %v1176
    %v1738 = vunpack.c.l.b16 %v1177
    %v1739 = vunpack.c.h.b16 %v1177
    %v1740 = vunpack.c.l.b16 %v1178
    %v1741 = vunpack.c.h.b16 %v1178
    %v1742 = vunpack.c.l.b16 %v1179
    %v1743 = vunpack.c.h.b16 %v1179
    %v1744 = vunpack.c.l.b16 %v1180
    %v1745 = vunpack.c.h.b16 %v1180
    %v1746 = vunpack.c.l.b16 %v1181
    %v1747 = vunpack.c.h.b16 %v1181
    %v1748 = vunpack.c.l.b16 %v1182
    %v1749 = vunpack.c.h.b16 %v1182
    %v1750 = vunpack.c.l.b16 %v1183
    %v1751 = vunpack.c.h.b16 %v1183
    %v1752 = vunpack.c.l.b16 %v1184
    %v1753 = vunpack.c.h.b16 %v1184
    %v1754 = vunpack.c.l.b16 %v1185
    %v1755 = vunpack.c.h.b16 %v1185
    %v1756 = vunpack.c.l.b16 %v1186
    %v1757 = vunpack.c.h.b16 %v1186
    %v1758 = vunpack.c.l.b16 %v1187
    %v1759 = vunpack.c.h.b16 %v1187
    %v1760 = vunpack.c.l.b16 %v1188
    %v1761 = vunpack.c.h.b16 %v1188
    %v1762 = vunpack.c.l.b16 %v1189
    %v1763 = vunpack.c.h.b16 %v1189
    %v1764 = vunpack.c.l.b16 %v1190
    %v1765 = vunpack.c.h.b16 %v1190
    %v1766 = vunpack.c.l.b16 %v1191
    %v1767 = vunpack.c.h.b16 %v1191
    %v1768 = vunpack.c.l.b16 %v1192
    %v1769 = vunpack.c.h.b16 %v1192
    %v1770 = vunpack.c.l.b16 %v1193
    %v1771 = vunpack.c.h.b16 %v1193
    %v1772 = vunpack.c.l.b16 %v1194
    %v1773 = vunpack.c.h.b16 %v1194
    %v1774 = vunpack.c.l.b16 %v1195
    %v1775 = vunpack.c.h.b16 %v1195
    %v1776 = vunpack.c.l.b16 %v1196
    %v1777 = vunpack.c.h.b16 %v1196
    %v1778 = vunpack.c.l.b16 %v1197
    %v1779 = vunpack.c.h.b16 %v1197
    %v1780 = vunpack.c.l.b16 %v1198
    %v1781 = vunpack.c.h.b16 %v1198
    %v1782 = vunpack.c.l.b16 %v1199
    %v1783 = vunpack.c.h.b16 %v1199
    %v1784 = vunpack.c.l.b16 %v1200
    %v1785 = vunpack.c.h.b16 %v1200
    %v1786 = vunpack.c.l.b16 %v1201
    %v1787 = vunpack.c.h.b16 %v1201
    %v1788 = vunpack.c.l.b16 %v1202
    %v1789 = vunpack.c.h.b16 %v1202
    %v1790 = vunpack.c.l.b16 %v1203
    %v1791 = vunpack.c.h.b16 %v1203
    %v1792 = vunpack.c.l.b16 %v1204
    %v1793 = vunpack.c.h.b16 %v1204
    %v1794 = vunpack.c.l.b16 %v1205
    %v1795 = vunpack.c.h.b16 %v1205
    %v1796 = vunpack.c.l.b16 %v1206
    %v1797 = vunpack.c.h.b16 %v1206
    %v1798 = vunpack.c.l.b16 %v1207
    %v1799 = vunpack.c.h.b16 %v1207
    %v1800 = vunpack.c.l.b16 %v1208
    %v1801 = vunpack.c.h.b16 %v1208
    %v1802 = vunpack.c.l.b16 %v1209
    %v1803 = vunpack.c.h.b16 %v1209
    %v1804 = vunpack.c.l.b16 %v1210
    %v1805 = vunpack.c.h.b16 %v1210
    %v1806 = vunpack.c.l.b16 %v1211
    %v1807 = vunpack.c.h.b16 %v1211
    %v1808 = vunpack.c.l.b16 %v1212
    %v1809 = vunpack.c.h.b16 %v1212
    %v1810 = vunpack.c.l.b16 %v1213
    %v1811 = vunpack.c.h.b16 %v1213
    %v1812 = vunpack.c.l.b16 %v1214
    %v1813 = vunpack.c.h.b16 %v1214
    %v1814 = vunpack.c.l.b16 %v1215
    %v1815 = vunpack.c.h.b16 %v1215
    %v1816 = vunpack.c.l.b16 %v1216
    %v1817 = vunpack.c.h.b16 %v1216
    %v1818 = vunpack.c.l.b16 %v1217
    %v1819 = vunpack.c.h.b16 %v1217
    %v1820 = vunpack.c.l.b16 %v1218
    %v1821 = vunpack.c.h.b16 %v1218
    %v1822 = vunpack.c.l.b16 %v1219
    %v1823 = vunpack.c.h.b16 %v1219
    %v1824 = vunpack.c.l.b16 %v1220
    %v1825 = vunpack.c.h.b16 %v1220
    %v1826 = vunpack.c.l.b16 %v1221
    %v1827 = vunpack.c.h.b16 %v1221
    %v1828 = vunpack.c.l.b16 %v1222
    %v1829 = vunpack.c.h.b16 %v1222
    %v1830 = vunpack.c.l.b16 %v1223
    %v1831 = vunpack.c.h.b16 %v1223
    %v1832 = vunpack.c.l.b16 %v1224
    %v1833 = vunpack.c.h.b16 %v1224
    %v1834 = vunpack.c.l.b16 %v1225
    %v1835 = vunpack.c.h.b16 %v1225
    %v1836 = vunpack.c.l.b16 %v1226
    %v1837 = vunpack.c.h.b16 %v1226
    %v1838 = vunpack.c.l.b16 %v1227
    %v1839 = vunpack.c.h.b16 %v1227
    %v1840 = vunpack.c.l.b16 %v1228
    %v1841 = vunpack.c.h.b16 %v1228
    %v1842 = vunpack.c.l.b16 %v1229
    %v1843 = vunpack.c.h.b16 %v1229
    %v1844 = vunpack.c.l.b16 %v1230
    %v1845 = vunpack.c.h.b16 %v1230
    %v1846 = vunpack.c.l.b16 %v1231
    %v1847 = vunpack.c.h.b16 %v1231
    %v1848 = vunpack.c.l.b16 %v1232
    %v1849 = vunpack.c.h.b16 %v1232
    %v1850 = vunpack.c.l.b16 %v1233
    %v1851 = vunpack.c.h.b16 %v1233
    %v1852 = vunpack.c.l.b16 %v1234
    %v1853 = vunpack.c.h.b16 %v1234
    %v1854 = vunpack.c.l.b16 %v1235
    %v1855 = vunpack.c.h.b16 %v1235
    %v1856 = vunpack.c.l.b16 %v1236
    %v1857 = vunpack.c.h.b16 %v1236
    %v1858 = vunpack.c.l.b16 %v1237
    %v1859 = vunpack.c.h.b16 %v1237
    %v1860 = vunpack.c.l.b16 %v1238
    %v1861 = vunpack.c.h.b16 %v1238
    %v1862 = vunpack.c.l.b16 %v1239
    %v1863 = vunpack.c.h.b16 %v1239
    %v1864 = vunpack.c.l.b16 %v1240
    %v1865 = vunpack.c.h.b16 %v1240
    %v1866 = vunpack.c.l.b16 %v1241
    %v1867 = vunpack.c.h.b16 %v1241
    %v1868 = vunpack.c.l.b16 %v1242
    %v1869 = vunpack.c.h.b16 %v1242
    %v1870 = vunpack.c.l.b16 %v1243
    %v1871 = vunpack.c.h.b16 %v1243
    %v1872 = vunpack.c.l.b16 %v1244
    %v1873 = vunpack.c.h.b16 %v1244
    %v1874 = vunpack.c.l.b16 %v1245
    %v1875 = vunpack.c.h.b16 %v1245
    %v1876 = vunpack.c.l.b16 %v1246
    %v1877 = vunpack.c.h.b16 %v1246
    %v1878 = vunpack.c.l.b16 %v1247
    %v1879 = vunpack.c.h.b16 %v1247
    %v1880 = vunpack.c.l.b16 %v1248
    %v1881 = vunpack.c.h.b16 %v1248
    %v1882 = vunpack.c.l.b16 %v1249
    %v1883 = vunpack.c.h.b16 %v1249
    %v1884 = vunpack.c.l.b16 %v1250
    %v1885 = vunpack.c.h.b16 %v1250
    %v1886 = vunpack.c.l.b16 %v1251
    %v1887 = vunpack.c.h.b16 %v1251
    %v1888 = vunpack.c.l.b16 %v1252
    %v1889 = vunpack.c.h.b16 %v1252
    %v1890 = vunpack.c.l.b16 %v1253
    %v1891 = vunpack.c.h.b16 %v1253
    %v1892 = vunpack.c.l.b16 %v1254
    %v1893 = vunpack.c.h.b16 %v1254
    %v1894 = vunpack.c.l.b16 %v1255
    %v1895 = vunpack.c.h.b16 %v1255
    %v1896 = vunpack.c.l.b16 %v1256
    %v1897 = vunpack.c.h.b16 %v1256
    %v1898 = vunpack.c.l.b16 %v1257
    %v1899 = vunpack.c.h.b16 %v1257
    %v1900 = vunpack.c.l.b16 %v1258
    %v1901 = vunpack.c.h.b16 %v1258
    %v1902 = vunpack.c.l.b16 %v1259
    %v1903 = vunpack.c.h.b16 %v1259
    %v1904 = vunpack.c.l.b16 %v1260
    %v1905 = vunpack.c.h.b16 %v1260
    %v1906 = vunpack.c.l.b16 %v1261
    %v1907 = vunpack.c.h.b16 %v1261
    %v1908 = vunpack.c.l.b16 %v1262
    %v1909 = vunpack.c.h.b16 %v1262
    %v1910 = vunpack.c.l.b16 %v1263
    %v1911 = vunpack.c.h.b16 %v1263
    %v1912 = vunpack.c.l.b16 %v1264
    %v1913 = vunpack.c.h.b16 %v1264
    %v1914 = vunpack.c.l.b16 %v1265
    %v1915 = vunpack.c.h.b16 %v1265
    %v1916 = vunpack.c.l.b16 %v1266
    %v1917 = vunpack.c.h.b16 %v1266
    %v1918 = vunpack.c.l.b16 %v1267
    %v1919 = vunpack.c.h.b16 %v1267
    %v1920 = vunpack.c.l.b16 %v1268
    %v1921 = vunpack.c.h.b16 %v1268
    %v1922 = vunpack.c.l.b16 %v1269
    %v1923 = vunpack.c.h.b16 %v1269
    %v1924 = vunpack.c.l.b16 %v1270
    %v1925 = vunpack.c.h.b16 %v1270
    %v1926 = vunpack.c.l.b16 %v1271
    %v1927 = vunpack.c.h.b16 %v1271
    %v1928 = vunpack.c.l.b16 %v1272
    %v1929 = vunpack.c.h.b16 %v1272
    %v1930 = vunpack.c.l.b16 %v1273
    %v1931 = vunpack.c.h.b16 %v1273
    %v1932 = vunpack.c.l.b16 %v1274
    %v1933 = vunpack.c.h.b16 %v1274
    %v1934 = vunpack.c.l.b16 %v1275
    %v1935 = vunpack.c.h.b16 %v1275
    %v1936 = vunpack.c.l.b16 %v1276
    %v1937 = vunpack.c.h.b16 %v1276
    %v1938 = vunpack.c.l.b16 %v1277
    %v1939 = vunpack.c.h.b16 %v1277
    %v1940 = vunpack.c.l.b16 %v1278
    %v1941 = vunpack.c.h.b16 %v1278
    %v1942 = vunpack.c.l.b16 %v1279
    %v1943 = vunpack.c.h.b16 %v1279
    %v1944 = vunpack.c.l.b16 %v1280
    %v1945 = vunpack.c.h.b16 %v1280
    %v1946 = vunpack.c.l.b16 %v1281
    %v1947 = vunpack.c.h.b16 %v1281
    %v1948 = vunpack.c.l.b16 %v1282
    %v1949 = vunpack.c.h.b16 %v1282
    %v1950 = vunpack.c.l.b16 %v1283
    %v1951 = vunpack.c.h.b16 %v1283
    %v1952 = vunpack.c.l.b16 %v1284
    %v1953 = vunpack.c.h.b16 %v1284
    %v1954 = vunpack.c.l.b16 %v1285
    %v1955 = vunpack.c.h.b16 %v1285
    %v1956 = vunpack.c.l.b16 %v1286
    %v1957 = vunpack.c.h.b16 %v1286
    %v1958 = vunpack.c.l.b16 %v1287
    %v1959 = vunpack.c.h.b16 %v1287
    %v1960 = vunpack.c.l.b16 %v1288
    %v1961 = vunpack.c.h.b16 %v1288
    %v1962 = vunpack.c.l.b16 %v1289
    %v1963 = vunpack.c.h.b16 %v1289
    %v1964 = vunpack.c.l.b16 %v1290
    %v1965 = vunpack.c.h.b16 %v1290
    %v1966 = vunpack.c.l.b16 %v1291
    %v1967 = vunpack.c.h.b16 %v1291
    %v1968 = vunpack.c.l.b16 %v1292
    %v1969 = vunpack.c.h.b16 %v1292
    %v1970 = vunpack.c.l.b16 %v1293
    %v1971 = vunpack.c.h.b16 %v1293
    %v1972 = vunpack.c.l.b16 %v1294
    %v1973 = vunpack.c.h.b16 %v1294
    %v1974 = vunpack.c.l.b16 %v1295
    %v1975 = vunpack.c.h.b16 %v1295
    %v1976 = vunpack.c.l.b16 %v1296
    %v1977 = vunpack.c.h.b16 %v1296
    %v1978 = vunpack.c.l.b16 %v1297
    %v1979 = vunpack.c.h.b16 %v1297
    %v1980 = vunpack.c.l.b16 %v1298
    %v1981 = vunpack.c.h.b16 %v1298
    %v1982 = vunpack.c.l.b16 %v1299
    %v1983 = vunpack.c.h.b16 %v1299
    %v1984 = vunpack.c.l.b16 %v1300
    %v1985 = vunpack.c.h.b16 %v1300
    %v1986 = vunpack.c.l.b16 %v1301
    %v1987 = vunpack.c.h.b16 %v1301
    %v1988 = vunpack.c.l.b16 %v1302
    %v1989 = vunpack.c.h.b16 %v1302
    %v1990 = vunpack.c.l.b16 %v1303
    %v1991 = vunpack.c.h.b16 %v1303
    %v1992 = vunpack.c.l.b16 %v1304
    %v1993 = vunpack.c.h.b16 %v1304
    %v1994 = vunpack.c.l.b16 %v1305
    %v1995 = vunpack.c.h.b16 %v1305
    %v1996 = vunpack.c.l.b16 %v1306
    %v1997 = vunpack.c.h.b16 %v1306
    %v1998 = vunpack.c.l.b16 %v1307
    %v1999 = vunpack.c.h.b16 %v1307
    %v2000 = vunpack.c.l.b16 %v1308
    %v2001 = vunpack.c.h.b16 %v1308
    %v2002 = vunpack.c.l.b16 %v1309
    %v2003 = vunpack.c.h.b16 %v1309
    %v2004 = vunpack.c.l.b16 %v1310
    %v2005 = vunpack.c.h.b16 %v1310
    %v2006 = vunpack.c.l.b16 %v1311
    %v2007 = vunpack.c.h.b16 %v1311
    %v2008 = vunpack.c.l.b16 %v1312
    %v2009 = vunpack.c.h.b16 %v1312
    %v2010 = vunpack.c.l.b16 %v1313
    %v2011 = vunpack.c.h.b16 %v1313
    %v2012 = vunpack.c.l.b16 %v1314
    %v2013 = vunpack.c.h.b16 %v1314
    %v2014 = vunpack.c.l.b16 %v1315
    %v2015 = vunpack.c.h.b16 %v1315
    %v2016 = vunpack.c.l.b16 %v1316
    %v2017 = vunpack.c.h.b16 %v1316
    %v2018 = vunpack.c.l.b16 %v1317
    %v2019 = vunpack.c.h.b16 %v1317
    %v2020 = vunpack.c.l.b16 %v1318
    %v2021 = vunpack.c.h.b16 %v1318
    %v2022 = vunpack.c.l.b16 %v1319
    %v2023 = vunpack.c.h.b16 %v1319
    %v2024 = vunpack.c.l.b16 %v1320
    %v2025 = vunpack.c.h.b16 %v1320
    %v2026 = vunpack.c.l.b16 %v1321
    %v2027 = vunpack.c.h.b16 %v1321
    %v2028 = vunpack.c.l.b16 %v1322
    %v2029 = vunpack.c.h.b16 %v1322
    %v2030 = vunpack.c.l.b16 %v1323
    %v2031 = vunpack.c.h.b16 %v1323
    %v2032 = vunpack.c.l.b16 %v1324
    %v2033 = vunpack.c.h.b16 %v1324
    %v2034 = vunpack.c.l.b16 %v1325
    %v2035 = vunpack.c.h.b16 %v1325
    %v2036 = vunpack.c.l.b16 %v1326
    %v2037 = vunpack.c.h.b16 %v1326
    %v2038 = vunpack.c.l.b16 %v1327
    %v2039 = vunpack.c.h.b16 %v1327
    %v2040 = vunpack.c.l.b16 %v1328
    %v2041 = vunpack.c.h.b16 %v1328
    %v2042 = vunpack.c.l.b16 %v1329
    %v2043 = vunpack.c.h.b16 %v1329
    %v2044 = vunpack.c.l.b16 %v1330
    %v2045 = vunpack.c.h.b16 %v1330
    %v2046 = vunpack.c.l.b16 %v1331
    %v2047 = vunpack.c.h.b16 %v1331
    %v2048 = vunpack.c.l.b16 %v1332
    %v2049 = vunpack.c.h.b16 %v1332
    %v2050 = vunpack.c.l.b16 %v1333
    %v2051 = vunpack.c.h.b16 %v1333
    %v2052 = vunpack.c.l.b16 %v1334
    %v2053 = vunpack.c.h.b16 %v1334
    %v2054 = vunpack.c.l.b16 %v1335
    %v2055 = vunpack.c.h.b16 %v1335
    %v2056 = vunpack.c.l.b16 %v1336
    %v2057 = vunpack.c.h.b16 %v1336
    %v2058 = vunpack.c.l.b16 %v1337
    %v2059 = vunpack.c.h.b16 %v1337
    %v2060 = vunpack.c.l.b16 %v1338
    %v2061 = vunpack.c.h.b16 %v1338
    %v2062 = vunpack.c.l.b16 %v1339
    %v2063 = vunpack.c.h.b16 %v1339
    %v2064 = vunpack.c.l.b16 %v1340
    %v2065 = vunpack.c.h.b16 %v1340
    %v2066 = vunpack.c.l.b16 %v1341
    %v2067 = vunpack.c.h.b16 %v1341
    %v2068 = vunpack.c.l.b16 %v1342
    %v2069 = vunpack.c.h.b16 %v1342
    %v2070 = vunpack.c.l.b16 %v1343
    %v2071 = vunpack.c.h.b16 %v1343
    %v2072 = vunpack.c.l.b16 %v1344
    %v2073 = vunpack.c.h.b16 %v1344
    %v2074 = vunpack.c.l.b16 %v1345
    %v2075 = vunpack.c.h.b16 %v1345
    %v2076 = vunpack.c.l.b16 %v1346
    %v2077 = vunpack.c.h.b16 %v1346
    %v2078 = vunpack.c.l.b16 %v1347
    %v2079 = vunpack.c.h.b16 %v1347
    %v2080 = vunpack.c.l.b16 %v1348
    %v2081 = vunpack.c.h.b16 %v1348
    %v2082 = vunpack.c.l.b16 %v1349
    %v2083 = vunpack.c.h.b16 %v1349
    %v2084 = vunpack.c.l.b16 %v1350
    %v2085 = vunpack.c.h.b16 %v1350
    %v2086 = vunpack.c.l.b16 %v1351
    %v2087 = vunpack.c.h.b16 %v1351
    %v2088 = vunpack.c.l.b16 %v1352
    %v2089 = vunpack.c.h.b16 %v1352
    %v2090 = vunpack.c.l.b16 %v1353
    %v2091 = vunpack.c.h.b16 %v1353
    %v2092 = vunpack.c.l.b16 %v1354
    %v2093 = vunpack.c.h.b16 %v1354
    %v2094 = vunpack.c.l.b16 %v1355
    %v2095 = vunpack.c.h.b16 %v1355
    %v2096 = vunpack.c.l.b16 %v1356
    %v2097 = vunpack.c.h.b16 %v1356
    %v2098 = vunpack.c.l.b16 %v1357
    %v2099 = vunpack.c.h.b16 %v1357
    %v2100 = vunpack.c.l.b16 %v1358
    %v2101 = vunpack.c.h.b16 %v1358
    %v2102 = vunpack.c.l.b16 %v1359
    %v2103 = vunpack.c.h.b16 %v1359
    %v2104 = vunpack.c.l.b16 %v1360
    %v2105 = vunpack.c.h.b16 %v1360
    %v2106 = vunpack.c.l.b16 %v1361
    %v2107 = vunpack.c.h.b16 %v1361
    %v2108 = vunpack.c.l.b16 %v1362
    %v2109 = vunpack.c.h.b16 %v1362
    %v2110 = vunpack.c.l.b16 %v1363
    %v2111 = vunpack.c.h.b16 %v1363
    %v2112 = vunpack.c.l.b16 %v1364
    %v2113 = vunpack.c.h.b16 %v1364
    %v2114 = vunpack.c.l.b16 %v1365
    %v2115 = vunpack.c.h.b16 %v1365
    %v2116 = vunpack.c.l.b16 %v1366
    %v2117 = vunpack.c.h.b16 %v1366
    %v2118 = vunpack.c.l.b16 %v1367
    %v2119 = vunpack.c.h.b16 %v1367
    %v2120 = vunpack.c.l.b16 %v1368
    %v2121 = vunpack.c.h.b16 %v1368
    %v2122 = vunpack.c.l.b16 %v1369
    %v2123 = vunpack.c.h.b16 %v1369
    %v2124 = vunpack.c.l.b16 %v1370
    %v2125 = vunpack.c.h.b16 %v1370
    %v2126 = vunpack.c.l.b16 %v1371
    %v2127 = vunpack.c.h.b16 %v1371
    %v2128 = vunpack.c.l.b16 %v1372
    %v2129 = vunpack.c.h.b16 %v1372
    %v2130 = vunpack.c.l.b16 %v1373
    %v2131 = vunpack.c.h.b16 %v1373
    %v2132 = vunpack.c.l.b16 %v1374
    %v2133 = vunpack.c.h.b16 %v1374
    %v2134 = vunpack.c.l.b16 %v1375
    %v2135 = vunpack.c.h.b16 %v1375
    %v2136 = vunpack.c.l.b16 %v1376
    %v2137 = vunpack.c.h.b16 %v1376
    %v2138 = vunpack.c.l.b16 %v1377
    %v2139 = vunpack.c.h.b16 %v1377
    %v2140 = vunpack.c.l.b16 %v1378
    %v2141 = vunpack.c.h.b16 %v1378
    %v2142 = vunpack.c.l.b16 %v1379
    %v2143 = vunpack.c.h.b16 %v1379
    %v2144 = vunpack.c.l.b16 %v1380
    %v2145 = vunpack.c.h.b16 %v1380
    %v2146 = vunpack.c.l.b16 %v1381
    %v2147 = vunpack.c.h.b16 %v1381
    %v2148 = vunpack.c.l.b16 %v1382
    %v2149 = vunpack.c.h.b16 %v1382
    %v2150 = vunpack.c.l.b16 %v1383
    %v2151 = vunpack.c.h.b16 %v1383
    %v2152 = vunpack.c.l.b16 %v1384
    %v2153 = vunpack.c.h.b16 %v1384
    %v2154 = vunpack.c.l.b16 %v1385
    %v2155 = vunpack.c.h.b16 %v1385
    %v2156 = vunpack.c.l.b16 %v1386
    %v2157 = vunpack.c.h.b16 %v1386
    %v2158 = vunpack.c.l.b16 %v1387
    %v2159 = vunpack.c.h.b16 %v1387
    %v2160 = vunpack.c.l.b16 %v1388
    %v2161 = vunpack.c.h.b16 %v1388
    %v2162 = vunpack.c.l.b16 %v1389
    %v2163 = vunpack.c.h.b16 %v1389
    %v2164 = vunpack.c.l.b16 %v1390
    %v2165 = vunpack.c.h.b16 %v1390
    %v2166 = vunpack.c.l.b16 %v1391
    %v2167 = vunpack.c.h.b16 %v1391
    %v2168 = vunpack.c.l.b16 %v1392
    %v2169 = vunpack.c.h.b16 %v1392
    %v2170 = vunpack.c.l.b16 %v1393
    %v2171 = vunpack.c.h.b16 %v1393
    %v2172 = vunpack.c.l.b16 %v1394
    %v2173 = vunpack.c.h.b16 %v1394
    %v2174 = vunpack.c.l.b16 %v1395
    %v2175 = vunpack.c.h.b16 %v1395
    %v2176 = vunpack.c.l.b16 %v1396
    %v2177 = vunpack.c.h.b16 %v1396
    %v2178 = vunpack.c.l.b16 %v1397
    %v2179 = vunpack.c.h.b16 %v1397
    %v2180 = vunpack.c.l.b16 %v1398
    %v2181 = vunpack.c.h.b16 %v1398
    %v2182 = vunpack.c.l.b16 %v1399
    %v2183 = vunpack.c.h.b16 %v1399
    %v2184 = vunpack.c.l.b16 %v1400
    %v2185 = vunpack.c.h.b16 %v1400
    %v2186 = vunpack.c.l.b16 %v1401
    %v2187 = vunpack.c.h.b16 %v1401
    %v2188 = vunpack.c.l.b16 %v1402
    %v2189 = vunpack.c.h.b16 %v1402
    %v2190 = vunpack.c.l.b16 %v1403
    %v2191 = vunpack.c.h.b16 %v1403
    %v2192 = vunpack.c.l.b16 %v1404
    %v2193 = vunpack.c.h.b16 %v1404
    %v2194 = vunpack.c.l.b16 %v1405
    %v2195 = vunpack.c.h.b16 %v1405
    %v2196 = vunpack.c.l.b16 %v1406
    %v2197 = vunpack.c.h.b16 %v1406
    %v2198 = vunpack.c.l.b16 %v1407
    %v2199 = vunpack.c.h.b16 %v1407
    %v2200 = vunpack.c.l.b16 %v1408
    %v2201 = vunpack.c.h.b16 %v1408
    %v2202 = vunpack.c.l.b16 %v1409
    %v2203 = vunpack.c.h.b16 %v1409
    %v2204 = vunpack.c.l.b16 %v1410
    %v2205 = vunpack.c.h.b16 %v1410
    %v2206 = vunpack.c.l.b16 %v1411
    %v2207 = vunpack.c.h.b16 %v1411
    %v2208 = vunpack.c.l.b16 %v1412
    %v2209 = vunpack.c.h.b16 %v1412
    %v2210 = vunpack.c.l.b16 %v1413
    %v2211 = vunpack.c.h.b16 %v1413
    %v2212 = vunpack.c.l.b16 %v1414
    %v2213 = vunpack.c.h.b16 %v1414
    %v2214 = vunpack.c.l.b16 %v1415
    %v2215 = vunpack.c.h.b16 %v1415
    %v2216 = vunpack.c.l.b16 %v1416
    %v2217 = vunpack.c.h.b16 %v1416
    %v2218 = vunpack.c.l.b16 %v1417
    %v2219 = vunpack.c.h.b16 %v1417
    %v2220 = vunpack.c.l.b16 %v1418
    %v2221 = vunpack.c.h.b16 %v1418
    %v2222 = vunpack.c.l.b16 %v1419
    %v2223 = vunpack.c.h.b16 %v1419
    %v2224 = vunpack.c.l.b16 %v1420
    %v2225 = vunpack.c.h.b16 %v1420
    %v2226 = vunpack.c.l.b16 %v1421
    %v2227 = vunpack.c.h.b16 %v1421
    %v2228 = vunpack.c.l.b16 %v1422
    %v2229 = vunpack.c.h.b16 %v1422
    %v2230 = vunpack.c.l.b16 %v1423
    %v2231 = vunpack.c.h.b16 %v1423
    %v2232 = vunpack.c.l.b16 %v1424
    %v2233 = vunpack.c.h.b16 %v1424
    %v2234 = vunpack.c.l.b16 %v1425
    %v2235 = vunpack.c.h.b16 %v1425
    %v2236 = vpack.c.b16 %v1732, %v1724
    %v2237 = vpack.c.b16 %v1733, %v1725
    %v2238 = vpack.c.b16 %v1734, %v1726
    %v2239 = vpack.c.b16 %v1735, %v1727
    %v2240 = vpack.c.b16 %v1736, %v1728
    %v2241 = vpack.c.b16 %v1737, %v1729
    %v2242 = vpack.c.b16 %v1738, %v1730
    %v2243 = vpack.c.b16 %v1739, %v1731
    %v2244 = vpack.c.b16 %v1748, %v1740
    %v2245 = vpack.c.b16 %v1749, %v1741
    %v2246 = vpack.c.b16 %v1750, %v1742
    %v2247 = vpack.c.b16 %v1751, %v1743
    %v2248 = vpack.c.b16 %v1752, %v1744
    %v2249 = vpack.c.b16 %v1753, %v1745
    %v2250 = vpack.c.b16 %v1754, %v1746
    %v2251 = vpack.c.b16 %v1755, %v1747
    %v2252 = vpack.c.b16 %v1764, %v1756
    %v2253 = vpack.c.b16 %v1765, %v1757
    %v2254 = vpack.c.b16 %v1766, %v1758
    %v2255 = vpack.c.b16 %v1767, %v1759
    %v2256 = vpack.c.b16 %v1768, %v1760
    %v2257 = vpack.c.b16 %v1769, %v1761
    %v2258 = vpack.c.b16 %v1770, %v1762
    %v2259 = vpack.c.b16 %v1771, %v1763
    %v2260 = vpack.c.b16 %v1780, %v1772
    %v2261 = vpack.c.b16 %v1781, %v1773
    %v2262 = vpack.c.b16 %v1782, %v1774
    %v2263 = vpack.c.b16 %v1783, %v1775
    %v2264 = vpack.c.b16 %v1784, %v1776
    %v2265 = vpack.c.b16 %v1785, %v1777
    %v2266 = vpack.c.b16 %v1786, %v1778
    %v2267 = vpack.c.b16 %v1787, %v1779
    %v2268 = vpack.c.b16 %v1796, %v1788
    %v2269 = vpack.c.b16 %v1797, %v1789
    %v2270 = vpack.c.b16 %v1798, %v1790
    %v2271 = vpack.c.b16 %v1799, %v1791
    %v2272 = vpack.c.b16 %v1800, %v1792
    %v2273 = vpack.c.b16 %v1801, %v1793
    %v2274 = vpack.c.b16 %v1802, %v1794
    %v2275 = vpack.c.b16 %v1803, %v1795
    %v2276 = vpack.c.b16 %v1812, %v1804
    %v2277 = vpack.c.b16 %v1813, %v1805
    %v2278 = vpack.c.b16 %v1814, %v1806
    %v2279 = vpack.c.b16 %v1815, %v1807
    %v2280 = vpack.c.b16 %v1816, %v1808
    %v2281 = vpack.c.b16 %v1817, %v1809
    %v2282 = vpack.c.b16 %v1818, %v1810
    %v2283 = vpack.c.b16 %v1819, %v1811
    %v2284 = vpack.c.b16 %v1828, %v1820
    %v2285 = vpack.c.b16 %v1829, %v1821
    %v2286 = vpack.c.b16 %v1830, %v1822
    %v2287 = vpack.c.b16 %v1831, %v1823
    %v2288 = vpack.c.b16 %v1832, %v1824
    %v2289 = vpack.c.b16 %v1833, %v1825
    %v2290 = vpack.c.b16 %v1834, %v1826
    %v2291 = vpack.c.b16 %v1835, %v1827
    %v2292 = vpack.c.b16 %v1844, %v1836
    %v2293 = vpack.c.b16 %v1845, %v1837
    %v2294 = vpack.c.b16 %v1846, %v1838
    %v2295 = vpack.c.b16 %v1847, %v1839
    %v2296 = vpack.c.b16 %v1848, %v1840
    %v2297 = vpack.c.b16 %v1849, %v1841
    %v2298 = vpack.c.b16 %v1850, %v1842
    %v2299 = vpack.c.b16 %v1851, %v1843
    %v2300 = vpack.c.b16 %v1860, %v1852
    %v2301 = vpack.c.b16 %v1861, %v1853
    %v2302 = vpack.c.b16 %v1862, %v1854
    %v2303 = vpack.c.b16 %v1863, %v1855
    %v2304 = vpack.c.b16 %v1864, %v1856
    %v2305 = vpack.c.b16 %v1865, %v1857
    %v2306 = vpack.c.b16 %v1866, %v1858
    %v2307 = vpack.c.b16 %v1867, %v1859
    %v2308 = vpack.c.b16 %v1876, %v1868
    %v2309 = vpack.c.b16 %v1877, %v1869
    %v2310 = vpack.c.b16 %v1878, %v1870
    %v2311 = vpack.c.b16 %v1879, %v1871
    %v2312 = vpack.c.b16 %v1880, %v1872
    %v2313 = vpack.c.b16 %v1881, %v1873
    %v2314 = vpack.c.b16 %v1882, %v1874
    %v2315 = vpack.c.b16 %v1883, %v1875
    %v2316 = vpack.c.b16 %v1892, %v1884
    %v2317 = vpack.c.b16 %v1893, %v1885
    %v2318 = vpack.c.b16 %v1894, %v1886
    %v2319 = vpack.c.b16 %v1895, %v1887
    %v2320 = vpack.c.b16 %v1896, %v1888
    %v2321 = vpack.c.b16 %v1897, %v1889
    %v2322 = vpack.c.b16 %v1898, %v1890
    %v2323 = vpack.c.b16 %v1899, %v1891
    %v2324 = vpack.c.b16 %v1908, %v1900
    %v2325 = vpack.c.b16 %v1909, %v1901
    %v2326 = vpack.c.b16 %v1910, %v1902
    %v2327 = vpack.c.b16 %v1911, %v1903
    %v2328 = vpack.c.b16 %v1912, %v1904
    %v2329 = vpack.c.b16 %v1913, %v1905
    %v2330 = vpack.c.b16 %v1914, %v1906
    %v2331 = vpack.c.b16 %v1915, %v1907
    %v2332 = vpack.c.b16 %v1924, %v1916
    %v2333 = vpack.c.b16 %v1925, %v1917
    %v2334 = vpack.c.b16 %v1926, %v1918
    %v2335 = vpack.c.b16 %v1927, %v1919
    %v2336 = vpack.c.b16 %v1928, %v1920
    %v2337 = vpack.c.b16 %v1929, %v1921
    %v2338 = vpack.c.b16 %v1930, %v1922
    %v2339 = vpack.c.b16 %v1931, %v1923
    %v2340 = vpack.c.b16 %v1940, %v1932
    %v2341 = vpack.c.b16 %v1941, %v1933
    %v2342 = vpack.c.b16 %v1942, %v1934
    %v2343 = vpack.c.b16 %v1943, %v1935
    %v2344 = vpack.c.b16 %v1944, %v1936
    %v2345 = vpack.c.b16 %v1945, %v1937
    %v2346 = vpack.c.b16 %v1946, %v1938
    %v2347 = vpack.c.b16 %v1947, %v1939
    %v2348 = vpack.c.b16 %v1956, %v1948
    %v2349 = vpack.c.b16 %v1957, %v1949
    %v2350 = vpack.c.b16 %v1958, %v1950
    %v2351 = vpack.c.b16 %v1959, %v1951
    %v2352 = vpack.c.b16 %v1960, %v1952
    %v2353 = vpack.c.b16 %v1961, %v1953
    %v2354 = vpack.c.b16 %v1962, %v1954
    %v2355 = vpack.c.b16 %v1963, %v1955
    %v2356 = vpack.c.b16 %v1972, %v1964
    %v2357 = vpack.c.b16 %v1973, %v1965
    %v2358 = vpack.c.b16 %v1974, %v1966
    %v2359 = vpack.c.b16 %v1975, %v1967
    %v2360 = vpack.c.b16 %v1976, %v1968
    %v2361 = vpack.c.b16 %v1977, %v1969
    %v2362 = vpack.c.b16 %v1978, %v1970
    %v2363 = vpack.c.b16 %v1979, %v1971
    %v2364 = vpack.c.b16 %v1988, %v1980
    %v2365 = vpack.c.b16 %v1989, %v1981
    %v2366 = vpack.c.b16 %v1990, %v1982
    %v2367 = vpack.c.b16 %v1991, %v1983
    %v2368 = vpack.c.b16 %v1992, %v1984
    %v2369 = vpack.c.b16 %v1993, %v1985
    %v2370 = vpack.c.b16 %v1994, %v1986
    %v2371 = vpack.c.b16 %v1995, %v1987
    %v2372 = vpack.c.b16 %v2004, %v1996
    %v2373 = vpack.c.b16 %v2005, %v1997
    %v2374 = vpack.c.b16 %v2006, %v1998
    %v2375 = vpack.c.b16 %v2007, %v1999
    %v2376 = vpack.c.b16 %v2008, %v2000
    %v2377 = vpack.c.b16 %v2009, %v2001
    %v2378 = vpack.c.b16 %v2010, %v2002
    %v2379 = vpack.c.b16 %v2011, %v2003
    %v2380 = vpack.c.b16 %v2020, %v2012
    %v2381 = vpack.c.b16 %v2021, %v2013
    %v2382 = vpack.c.b16 %v2022, %v2014
    %v2383 = vpack.c.b16 %v2023, %v2015
    %v2384 = vpack.c.b16 %v2024, %v2016
    %v2385 = vpack.c.b16 %v2025, %v2017
    %v2386 = vpack.c.b16 %v2026, %v2018
    %v2387 = vpack.c.b16 %v2027, %v2019
    %v2388 = vpack.c.b16 %v2036, %v2028
    %v2389 = vpack.c.b16 %v2037, %v2029
    %v2390 = vpack.c.b16 %v2038, %v2030
    %v2391 = vpack.c.b16 %v2039, %v2031
    %v2392 = vpack.c.b16 %v2040, %v2032
    %v2393 = vpack.c.b16 %v2041, %v2033
    %v2394 = vpack.c.b16 %v2042, %v2034
    %v2395 = vpack.c.b16 %v2043, %v2035
    %v2396 = vpack.c.b16 %v2052, %v2044
    %v2397 = vpack.c.b16 %v2053, %v2045
    %v2398 = vpack.c.b16 %v2054, %v2046
    %v2399 = vpack.c.b16 %v2055, %v2047
    %v2400 = vpack.c.b16 %v2056, %v2048
    %v2401 = vpack.c.b16 %v2057, %v2049
    %v2402 = vpack.c.b16 %v2058, %v2050
    %v2403 = vpack.c.b16 %v2059, %v2051
    %v2404 = vpack.c.b16 %v2068, %v2060
    %v2405 = vpack.c.b16 %v2069, %v2061
    %v2406 = vpack.c.b16 %v2070, %v2062
    %v2407 = vpack.c.b16 %v2071, %v2063
    %v2408 = vpack.c.b16 %v2072, %v2064
    %v2409 = vpack.c.b16 %v2073, %v2065
    %v2410 = vpack.c.b16 %v2074, %v2066
    %v2411 = vpack.c.b16 %v2075, %v2067
    %v2412 = vpack.c.b16 %v2084, %v2076
    %v2413 = vpack.c.b16 %v2085, %v2077
    %v2414 = vpack.c.b16 %v2086, %v2078
    %v2415 = vpack.c.b16 %v2087, %v2079
    %v2416 = vpack.c.b16 %v2088, %v2080
    %v2417 = vpack.c.b16 %v2089, %v2081
    %v2418 = vpack.c.b16 %v2090, %v2082
    %v2419 = vpack.c.b16 %v2091, %v2083
    %v2420 = vpack.c.b16 %v2100, %v2092
    %v2421 = vpack.c.b16 %v2101, %v2093
    %v2422 = vpack.c.b16 %v2102, %v2094
    %v2423 = vpack.c.b16 %v2103, %v2095
    %v2424 = vpack.c.b16 %v2104, %v2096
    %v2425 = vpack.c.b16 %v2105, %v2097
    %v2426 = vpack.c.b16 %v2106, %v2098
    %v2427 = vpack.c.b16 %v2107, %v2099
    %v2428 = vpack.c.b16 %v2116, %v2108
    %v2429 = vpack.c.b16 %v2117, %v2109
    %v2430 = vpack.c.b16 %v2118, %v2110
    %v2431 = vpack.c.b16 %v2119, %v2111
    %v2432 = vpack.c.b16 %v2120, %v2112
    %v2433 = vpack.c.b16 %v2121, %v2113
    %v2434 = vpack.c.b16 %v2122, %v2114
    %v2435 = vpack.c.b16 %v2123, %v2115
    %v2436 = vpack.c.b16 %v2132, %v2124
    %v2437 = vpack.c.b16 %v2133, %v2125
    %v2438 = vpack.c.b16 %v2134, %v2126
    %v2439 = vpack.c.b16 %v2135, %v2127
    %v2440 = vpack.c.b16 %v2136, %v2128
    %v2441 = vpack.c.b16 %v2137, %v2129
    %v2442 = vpack.c.b16 %v2138, %v2130
    %v2443 = vpack.c.b16 %v2139, %v2131
    %v2444 = vpack.c.b16 %v2148, %v2140
    %v2445 = vpack.c.b16 %v2149, %v2141
    %v2446 = vpack.c.b16 %v2150, %v2142
    %v2447 = vpack.c.b16 %v2151, %v2143
    %v2448 = vpack.c.b16 %v2152, %v2144
    %v2449 = vpack.c.b16 %v2153, %v2145
    %v2450 = vpack.c.b16 %v2154, %v2146
    %v2451 = vpack.c.b16 %v2155, %v2147
    %v2452 = vpack.c.b16 %v2164, %v2156
    %v2453 = vpack.c.b16 %v2165, %v2157
    %v2454 = vpack.c.b16 %v2166, %v2158
    %v2455 = vpack.c.b16 %v2167, %v2159
    %v2456 = vpack.c.b16 %v2168, %v2160
    %v2457 = vpack.c.b16 %v2169, %v2161
    %v2458 = vpack.c.b16 %v2170, %v2162
    %v2459 = vpack.c.b16 %v2171, %v2163
    %v2460 = vpack.c.b16 %v2180, %v2172
    %v2461 = vpack.c.b16 %v2181, %v2173
    %v2462 = vpack.c.b16 %v2182, %v2174
    %v2463 = vpack.c.b16 %v2183, %v2175
    %v2464 = vpack.c.b16 %v2184, %v2176
    %v2465 = vpack.c.b16 %v2185, %v2177
    %v2466 = vpack.c.b16 %v2186, %v2178
    %v2467 = vpack.c.b16 %v2187, %v2179
    %v2468 = vpack.c.b16 %v2196, %v2188
    %v2469 = vpack.c.b16 %v2197, %v2189
    %v2470 = vpack.c.b16 %v2198, %v2190
    %v2471 = vpack.c.b16 %v2199, %v2191
    %v2472 = vpack.c.b16 %v2200, %v2192
    %v2473 = vpack.c.b16 %v2201, %v2193
    %v2474 = vpack.c.b16 %v2202, %v2194
    %v2475 = vpack.c.b16 %v2203, %v2195
    %v2476 = vpack.c.b16 %v2212, %v2204
    %v2477 = vpack.c.b16 %v2213, %v2205
    %v2478 = vpack.c.b16 %v2214, %v2206
    %v2479 = vpack.c.b16 %v2215, %v2207
    %v2480 = vpack.c.b16 %v2216, %v2208
    %v2481 = vpack.c.b16 %v2217, %v2209
    %v2482 = vpack.c.b16 %v2218, %v2210
    %v2483 = vpack.c.b16 %v2219, %v2211
    %v2484 = vpack.c.b16 %v2228, %v2220
    %v2485 = vpack.c.b16 %v2229, %v2221
    %v2486 = vpack.c.b16 %v2230, %v2222
    %v2487 = vpack.c.b16 %v2231, %v2223
    %v2488 = vpack.c.b16 %v2232, %v2224
    %v2489 = vpack.c.b16 %v2233, %v2225
    %v2490 = vpack.c.b16 %v2234, %v2226
    %v2491 = vpack.c.b16 %v2235, %v2227
    %2748 = vmatprep.subr.bf16.mxu0 %v2237
    %2749 = vmatpush1.bf16.msra.mxu0 %v2236
    %2750 = vmatprep.subr.bf16.mxu0 %v2245
    %2751 = vmatpush1.bf16.msra.mxu0 %v2244
    %2752 = vmatprep.subr.bf16.mxu0 %v2253
    %2753 = vmatpush1.bf16.msra.mxu0 %v2252
    %2754 = vmatprep.subr.bf16.mxu0 %v2261
    %2755 = vmatpush1.bf16.msra.mxu0 %v2260
    %2756 = vmatprep.subr.bf16.mxu0 %v2269
    %2757 = vmatpush1.bf16.msra.mxu0 %v2268
    %2758 = vmatprep.subr.bf16.mxu0 %v2277
    %2759 = vmatpush1.bf16.msra.mxu0 %v2276
    %2760 = vmatprep.subr.bf16.mxu0 %v2285
    %2761 = vmatpush1.bf16.msra.mxu0 %v2284
    %2762 = vmatprep.subr.bf16.mxu0 %v2293
    %2763 = vmatpush1.bf16.msra.mxu0 %v2292
    %2764 = vmatprep.subr.bf16.mxu0 %v2301
    %2765 = vmatpush1.bf16.msra.mxu0 %v2300
    %2766 = vmatprep.subr.bf16.mxu0 %v2309
    %2767 = vmatpush1.bf16.msra.mxu0 %v2308
    %2768 = vmatprep.subr.bf16.mxu0 %v2317
    %2769 = vmatpush1.bf16.msra.mxu0 %v2316
    %2770 = vmatprep.subr.bf16.mxu0 %v2325
    %2771 = vmatpush1.bf16.msra.mxu0 %v2324
    %2772 = vmatprep.subr.bf16.mxu0 %v2333
    %2773 = vmatpush1.bf16.msra.mxu0 %v2332
    %2774 = vmatprep.subr.bf16.mxu0 %v2341
    %2775 = vmatpush1.bf16.msra.mxu0 %v2340
    %2776 = vmatprep.subr.bf16.mxu0 %v2349
    %2777 = vmatpush1.bf16.msra.mxu0 %v2348
    %2778 = vmatprep.subr.bf16.mxu0 %v2357
    %2779 = vmatpush1.bf16.msra.mxu0 %v2356
    %2780 = vmatprep.mubr.bf16.mxu0 %v1167
    %2781 = vmatmul.mubr.bf16.gmra.mrb[0].mxu0 %v1166
    %v2782 = vpop.f32.mrb[0].mxu0
    %v2783 = vadd.f32 %v1431, %v2782
    %v2784 = vpop.f32.mrb[0].mxu0
    %v2785 = vadd.f32 %v1435, %v2784
    %v2786 = vpop.f32.mrb[0].mxu0
    %v2787 = vpop.f32.mrb[0].mxu0
    %2788 = vdwg.mxu0
    %2789 = vmatprep.subr.bf16.mxu0 %v2365
    %2790 = vmatpush1.bf16.msra.mxu0 %v2364
    %2791 = vmatprep.subr.bf16.mxu0 %v2373
    %2792 = vmatpush1.bf16.msra.mxu0 %v2372
    %2793 = vmatprep.subr.bf16.mxu0 %v2381
    %2794 = vmatpush1.bf16.msra.mxu0 %v2380
    %2795 = vmatprep.subr.bf16.mxu0 %v2389
    %2796 = vmatpush1.bf16.msra.mxu0 %v2388
    %2797 = vmatprep.subr.bf16.mxu0 %v2397
    %2798 = vmatpush1.bf16.msra.mxu0 %v2396
    %2799 = vmatprep.subr.bf16.mxu0 %v2405
    %2800 = vmatpush1.bf16.msra.mxu0 %v2404
    %2801 = vmatprep.subr.bf16.mxu0 %v2413
    %2802 = vmatpush1.bf16.msra.mxu0 %v2412
    %2803 = vmatprep.subr.bf16.mxu0 %v2421
    %2804 = vmatpush1.bf16.msra.mxu0 %v2420
    %2805 = vmatprep.subr.bf16.mxu0 %v2429
    %2806 = vmatpush1.bf16.msra.mxu0 %v2428
    %2807 = vmatprep.subr.bf16.mxu0 %v2437
    %2808 = vmatpush1.bf16.msra.mxu0 %v2436
    %2809 = vmatprep.subr.bf16.mxu0 %v2445
    %2810 = vmatpush1.bf16.msra.mxu0 %v2444
    %2811 = vmatprep.subr.bf16.mxu0 %v2453
    %2812 = vmatpush1.bf16.msra.mxu0 %v2452
    %2813 = vmatprep.subr.bf16.mxu0 %v2461
    %2814 = vmatpush1.bf16.msra.mxu0 %v2460
    %2815 = vmatprep.subr.bf16.mxu0 %v2469
    %2816 = vmatpush1.bf16.msra.mxu0 %v2468
    %2817 = vmatprep.subr.bf16.mxu0 %v2477
    %2818 = vmatpush1.bf16.msra.mxu0 %v2476
    %2819 = vmatprep.subr.bf16.mxu0 %v2485
    %2820 = vmatpush1.bf16.msra.mxu0 %v2484
    %2821 = vmatprep.mubr.bf16.mxu0 %v1169
    %2822 = vmatmul.mubr.bf16.gmra.mrb[0].mxu0 %v1168
    %v2823 = vpop.f32.mrb[0].mxu0
    %v2824 = vadd.f32 %v2783, %v2823
    %v2825 = vpop.f32.mrb[0].mxu0
    %v2826 = vadd.f32 %v2785, %v2825
    %v2827 = vpop.f32.mrb[0].mxu0
    %v2828 = vpop.f32.mrb[0].mxu0
    %2829 = vdwg.mxu0
    %2830 = vmatprep.subr.bf16.mxu0 %v2239
    %2831 = vmatpush1.bf16.msra.mxu0 %v2238
    %2832 = vmatprep.subr.bf16.mxu0 %v2247
    %2833 = vmatpush1.bf16.msra.mxu0 %v2246
    %2834 = vmatprep.subr.bf16.mxu0 %v2255
    %2835 = vmatpush1.bf16.msra.mxu0 %v2254
    %2836 = vmatprep.subr.bf16.mxu0 %v2263
    %2837 = vmatpush1.bf16.msra.mxu0 %v2262
    %2838 = vmatprep.subr.bf16.mxu0 %v2271
    %2839 = vmatpush1.bf16.msra.mxu0 %v2270
    %2840 = vmatprep.subr.bf16.mxu0 %v2279
    %2841 = vmatpush1.bf16.msra.mxu0 %v2278
    %2842 = vmatprep.subr.bf16.mxu0 %v2287
    %2843 = vmatpush1.bf16.msra.mxu0 %v2286
    %2844 = vmatprep.subr.bf16.mxu0 %v2295
    %2845 = vmatpush1.bf16.msra.mxu0 %v2294
    %2846 = vmatprep.subr.bf16.mxu0 %v2303
    %2847 = vmatpush1.bf16.msra.mxu0 %v2302
    %2848 = vmatprep.subr.bf16.mxu0 %v2311
    %2849 = vmatpush1.bf16.msra.mxu0 %v2310
    %2850 = vmatprep.subr.bf16.mxu0 %v2319
    %2851 = vmatpush1.bf16.msra.mxu0 %v2318
    %2852 = vmatprep.subr.bf16.mxu0 %v2327
    %2853 = vmatpush1.bf16.msra.mxu0 %v2326
    %2854 = vmatprep.subr.bf16.mxu0 %v2335
    %2855 = vmatpush1.bf16.msra.mxu0 %v2334
    %2856 = vmatprep.subr.bf16.mxu0 %v2343
    %2857 = vmatpush1.bf16.msra.mxu0 %v2342
    %2858 = vmatprep.subr.bf16.mxu0 %v2351
    %2859 = vmatpush1.bf16.msra.mxu0 %v2350
    %2860 = vmatprep.subr.bf16.mxu0 %v2359
    %2861 = vmatpush1.bf16.msra.mxu0 %v2358
    %2862 = vmatprep.mubr.bf16.mxu0 %v1167
    %2863 = vmatmul.mubr.bf16.gmra.mrb[0].mxu0 %v1166
    %v2864 = vpop.f32.mrb[0].mxu0
    %v2865 = vadd.f32 %v1439, %v2864
    %v2866 = vpop.f32.mrb[0].mxu0
    %v2867 = vadd.f32 %v1443, %v2866
    %v2868 = vpop.f32.mrb[0].mxu0
    %v2869 = vpop.f32.mrb[0].mxu0
    %2870 = vdwg.mxu0
    %2871 = vmatprep.subr.bf16.mxu0 %v2367
    %2872 = vmatpush1.bf16.msra.mxu0 %v2366
    %2873 = vmatprep.subr.bf16.mxu0 %v2375
    %2874 = vmatpush1.bf16.msra.mxu0 %v2374
    %2875 = vmatprep.subr.bf16.mxu0 %v2383
    %2876 = vmatpush1.bf16.msra.mxu0 %v2382
    %2877 = vmatprep.subr.bf16.mxu0 %v2391
    %2878 = vmatpush1.bf16.msra.mxu0 %v2390
    %2879 = vmatprep.subr.bf16.mxu0 %v2399
    %2880 = vmatpush1.bf16.msra.mxu0 %v2398
    %2881 = vmatprep.subr.bf16.mxu0 %v2407
    %2882 = vmatpush1.bf16.msra.mxu0 %v2406
    %2883 = vmatprep.subr.bf16.mxu0 %v2415
    %2884 = vmatpush1.bf16.msra.mxu0 %v2414
    %2885 = vmatprep.subr.bf16.mxu0 %v2423
    %2886 = vmatpush1.bf16.msra.mxu0 %v2422
    %2887 = vmatprep.subr.bf16.mxu0 %v2431
    %2888 = vmatpush1.bf16.msra.mxu0 %v2430
    %2889 = vmatprep.subr.bf16.mxu0 %v2439
    %2890 = vmatpush1.bf16.msra.mxu0 %v2438
    %2891 = vmatprep.subr.bf16.mxu0 %v2447
    %2892 = vmatpush1.bf16.msra.mxu0 %v2446
    %2893 = vmatprep.subr.bf16.mxu0 %v2455
    %2894 = vmatpush1.bf16.msra.mxu0 %v2454
    %2895 = vmatprep.subr.bf16.mxu0 %v2463
    %2896 = vmatpush1.bf16.msra.mxu0 %v2462
    %2897 = vmatprep.subr.bf16.mxu0 %v2471
    %2898 = vmatpush1.bf16.msra.mxu0 %v2470
    %2899 = vmatprep.subr.bf16.mxu0 %v2479
    %2900 = vmatpush1.bf16.msra.mxu0 %v2478
    %2901 = vmatprep.subr.bf16.mxu0 %v2487
    %2902 = vmatpush1.bf16.msra.mxu0 %v2486
    %2903 = vmatprep.mubr.bf16.mxu0 %v1169
    %2904 = vmatmul.mubr.bf16.gmra.mrb[0].mxu0 %v1168
    %v2905 = vpop.f32.mrb[0].mxu0
    %v2906 = vadd.f32 %v2865, %v2905
    %v2907 = vpop.f32.mrb[0].mxu0
    %v2908 = vadd.f32 %v2867, %v2907
    %v2909 = vpop.f32.mrb[0].mxu0
    %v2910 = vpop.f32.mrb[0].mxu0
    %2911 = vdwg.mxu0
    %2912 = vmatprep.subr.bf16.mxu0 %v2241
    %2913 = vmatpush1.bf16.msra.mxu0 %v2240
    %2914 = vmatprep.subr.bf16.mxu0 %v2249
    %2915 = vmatpush1.bf16.msra.mxu0 %v2248
    %2916 = vmatprep.subr.bf16.mxu0 %v2257
    %2917 = vmatpush1.bf16.msra.mxu0 %v2256
    %2918 = vmatprep.subr.bf16.mxu0 %v2265
    %2919 = vmatpush1.bf16.msra.mxu0 %v2264
    %2920 = vmatprep.subr.bf16.mxu0 %v2273
    %2921 = vmatpush1.bf16.msra.mxu0 %v2272
    %2922 = vmatprep.subr.bf16.mxu0 %v2281
    %2923 = vmatpush1.bf16.msra.mxu0 %v2280
    %2924 = vmatprep.subr.bf16.mxu0 %v2289
    %2925 = vmatpush1.bf16.msra.mxu0 %v2288
    %2926 = vmatprep.subr.bf16.mxu0 %v2297
    %2927 = vmatpush1.bf16.msra.mxu0 %v2296
    %2928 = vmatprep.subr.bf16.mxu0 %v2305
    %2929 = vmatpush1.bf16.msra.mxu0 %v2304
    %2930 = vmatprep.subr.bf16.mxu0 %v2313
    %2931 = vmatpush1.bf16.msra.mxu0 %v2312
    %2932 = vmatprep.subr.bf16.mxu0 %v2321
    %2933 = vmatpush1.bf16.msra.mxu0 %v2320
    %2934 = vmatprep.subr.bf16.mxu0 %v2329
    %2935 = vmatpush1.bf16.msra.mxu0 %v2328
    %2936 = vmatprep.subr.bf16.mxu0 %v2337
    %2937 = vmatpush1.bf16.msra.mxu0 %v2336
    %2938 = vmatprep.subr.bf16.mxu0 %v2345
    %2939 = vmatpush1.bf16.msra.mxu0 %v2344
    %2940 = vmatprep.subr.bf16.mxu0 %v2353
    %2941 = vmatpush1.bf16.msra.mxu0 %v2352
    %2942 = vmatprep.subr.bf16.mxu0 %v2361
    %2943 = vmatpush1.bf16.msra.mxu0 %v2360
    %2944 = vmatprep.mubr.bf16.mxu0 %v1167
    %2945 = vmatmul.mubr.bf16.gmra.mrb[0].mxu0 %v1166
    %v2946 = vpop.f32.mrb[0].mxu0
    %v2947 = vadd.f32 %v1447, %v2946
    %v2948 = vpop.f32.mrb[0].mxu0
    %v2949 = vadd.f32 %v1451, %v2948
    %v2950 = vpop.f32.mrb[0].mxu0
    %v2951 = vpop.f32.mrb[0].mxu0
    %2952 = vdwg.mxu0
    %2953 = vmatprep.subr.bf16.mxu0 %v2369
    %2954 = vmatpush1.bf16.msra.mxu0 %v2368
    %2955 = vmatprep.subr.bf16.mxu0 %v2377
    %2956 = vmatpush1.bf16.msra.mxu0 %v2376
    %2957 = vmatprep.subr.bf16.mxu0 %v2385
    %2958 = vmatpush1.bf16.msra.mxu0 %v2384
    %2959 = vmatprep.subr.bf16.mxu0 %v2393
    %2960 = vmatpush1.bf16.msra.mxu0 %v2392
    %2961 = vmatprep.subr.bf16.mxu0 %v2401
    %2962 = vmatpush1.bf16.msra.mxu0 %v2400
    %2963 = vmatprep.subr.bf16.mxu0 %v2409
    %2964 = vmatpush1.bf16.msra.mxu0 %v2408
    %2965 = vmatprep.subr.bf16.mxu0 %v2417
    %2966 = vmatpush1.bf16.msra.mxu0 %v2416
    %2967 = vmatprep.subr.bf16.mxu0 %v2425
    %2968 = vmatpush1.bf16.msra.mxu0 %v2424
    %2969 = vmatprep.subr.bf16.mxu0 %v2433
    %2970 = vmatpush1.bf16.msra.mxu0 %v2432
    %2971 = vmatprep.subr.bf16.mxu0 %v2441
    %2972 = vmatpush1.bf16.msra.mxu0 %v2440
    %2973 = vmatprep.subr.bf16.mxu0 %v2449
    %2974 = vmatpush1.bf16.msra.mxu0 %v2448
    %2975 = vmatprep.subr.bf16.mxu0 %v2457
    %2976 = vmatpush1.bf16.msra.mxu0 %v2456
    %2977 = vmatprep.subr.bf16.mxu0 %v2465
    %2978 = vmatpush1.bf16.msra.mxu0 %v2464
    %2979 = vmatprep.subr.bf16.mxu0 %v2473
    %2980 = vmatpush1.bf16.msra.mxu0 %v2472
    %2981 = vmatprep.subr.bf16.mxu0 %v2481
    %2982 = vmatpush1.bf16.msra.mxu0 %v2480
    %2983 = vmatprep.subr.bf16.mxu0 %v2489
    %2984 = vmatpush1.bf16.msra.mxu0 %v2488
    %2985 = vmatprep.mubr.bf16.mxu0 %v1169
    %2986 = vmatmul.mubr.bf16.gmra.mrb[0].mxu0 %v1168
    %v2987 = vpop.f32.mrb[0].mxu0
    %v2988 = vadd.f32 %v2947, %v2987
    %v2989 = vpop.f32.mrb[0].mxu0
    %v2990 = vadd.f32 %v2949, %v2989
    %v2991 = vpop.f32.mrb[0].mxu0
    %v2992 = vpop.f32.mrb[0].mxu0
    %2993 = vdwg.mxu0
    %2994 = vmatprep.subr.bf16.mxu0 %v2243
    %2995 = vmatpush1.bf16.msra.mxu0 %v2242
    %2996 = vmatprep.subr.bf16.mxu0 %v2251
    %2997 = vmatpush1.bf16.msra.mxu0 %v2250
    %2998 = vmatprep.subr.bf16.mxu0 %v2259
    %2999 = vmatpush1.bf16.msra.mxu0 %v2258
    %3000 = vmatprep.subr.bf16.mxu0 %v2267
    %3001 = vmatpush1.bf16.msra.mxu0 %v2266
    %3002 = vmatprep.subr.bf16.mxu0 %v2275
    %3003 = vmatpush1.bf16.msra.mxu0 %v2274
    %3004 = vmatprep.subr.bf16.mxu0 %v2283
    %3005 = vmatpush1.bf16.msra.mxu0 %v2282
    %3006 = vmatprep.subr.bf16.mxu0 %v2291
    %3007 = vmatpush1.bf16.msra.mxu0 %v2290
    %3008 = vmatprep.subr.bf16.mxu0 %v2299
    %3009 = vmatpush1.bf16.msra.mxu0 %v2298
    %3010 = vmatprep.subr.bf16.mxu0 %v2307
    %3011 = vmatpush1.bf16.msra.mxu0 %v2306
    %3012 = vmatprep.subr.bf16.mxu0 %v2315
    %3013 = vmatpush1.bf16.msra.mxu0 %v2314
    %3014 = vmatprep.subr.bf16.mxu0 %v2323
    %3015 = vmatpush1.bf16.msra.mxu0 %v2322
    %3016 = vmatprep.subr.bf16.mxu0 %v2331
    %3017 = vmatpush1.bf16.msra.mxu0 %v2330
    %3018 = vmatprep.subr.bf16.mxu0 %v2339
    %3019 = vmatpush1.bf16.msra.mxu0 %v2338
    %3020 = vmatprep.subr.bf16.mxu0 %v2347
    %3021 = vmatpush1.bf16.msra.mxu0 %v2346
    %3022 = vmatprep.subr.bf16.mxu0 %v2355
    %3023 = vmatpush1.bf16.msra.mxu0 %v2354
    %3024 = vmatprep.subr.bf16.mxu0 %v2363
    %3025 = vmatpush1.bf16.msra.mxu0 %v2362
    %3026 = vmatprep.mubr.bf16.mxu0 %v1167
    %3027 = vmatmul.mubr.bf16.gmra.mrb[0].mxu0 %v1166
    %v3028 = vpop.f32.mrb[0].mxu0
    %v3029 = vadd.f32 %v1455, %v3028
    %v3030 = vpop.f32.mrb[0].mxu0
    %v3031 = vadd.f32 %v1459, %v3030
    %v3032 = vpop.f32.mrb[0].mxu0
    %v3033 = vpop.f32.mrb[0].mxu0
    %3034 = vdwg.mxu0
    %3035 = vmatprep.subr.bf16.mxu0 %v2371
    %3036 = vmatpush1.bf16.msra.mxu0 %v2370
    %3037 = vmatprep.subr.bf16.mxu0 %v2379
    %3038 = vmatpush1.bf16.msra.mxu0 %v2378
    %3039 = vmatprep.subr.bf16.mxu0 %v2387
    %3040 = vmatpush1.bf16.msra.mxu0 %v2386
    %3041 = vmatprep.subr.bf16.mxu0 %v2395
    %3042 = vmatpush1.bf16.msra.mxu0 %v2394
    %3043 = vmatprep.subr.bf16.mxu0 %v2403
    %3044 = vmatpush1.bf16.msra.mxu0 %v2402
    %3045 = vmatprep.subr.bf16.mxu0 %v2411
    %3046 = vmatpush1.bf16.msra.mxu0 %v2410
    %3047 = vmatprep.subr.bf16.mxu0 %v2419
    %3048 = vmatpush1.bf16.msra.mxu0 %v2418
    %3049 = vmatprep.subr.bf16.mxu0 %v2427
    %3050 = vmatpush1.bf16.msra.mxu0 %v2426
    %3051 = vmatprep.subr.bf16.mxu0 %v2435
    %3052 = vmatpush1.bf16.msra.mxu0 %v2434
    %3053 = vmatprep.subr.bf16.mxu0 %v2443
    %3054 = vmatpush1.bf16.msra.mxu0 %v2442
    %3055 = vmatprep.subr.bf16.mxu0 %v2451
    %3056 = vmatpush1.bf16.msra.mxu0 %v2450
    %3057 = vmatprep.subr.bf16.mxu0 %v2459
    %3058 = vmatpush1.bf16.msra.mxu0 %v2458
    %3059 = vmatprep.subr.bf16.mxu0 %v2467
    %3060 = vmatpush1.bf16.msra.mxu0 %v2466
    %3061 = vmatprep.subr.bf16.mxu0 %v2475
    %3062 = vmatpush1.bf16.msra.mxu0 %v2474
    %3063 = vmatprep.subr.bf16.mxu0 %v2483
    %3064 = vmatpush1.bf16.msra.mxu0 %v2482
    %3065 = vmatprep.subr.bf16.mxu0 %v2491
    %3066 = vmatpush1.bf16.msra.mxu0 %v2490
    %3067 = vmatprep.mubr.bf16.mxu0 %v1169
    %3068 = vmatmul.mubr.bf16.gmra.mrb[0].mxu0 %v1168
    %v3069 = vpop.f32.mrb[0].mxu0
    %v3070 = vadd.f32 %v3029, %v3069
    %v3071 = vpop.f32.mrb[0].mxu0
    %v3072 = vadd.f32 %v3031, %v3071
    %v3073 = vpop.f32.mrb[0].mxu0
    %v3074 = vpop.f32.mrb[0].mxu0
    %3075 = vdwg.mxu0
    %v3076 = vld [vmem:[#allocation9 + $0x1b] sm:$0xff]
    %v3077 = vld [vmem:[#allocation9 + $0x23] sm:$0xff]
    %v3078 = vrot.slane %v2824, 4
    %v3079 = vadd.f32 %v2824, %v3078
    %v3080 = vrot.slane %v3079, 2
    %v3081 = vadd.f32 %v3079, %v3080
    %v3082 = vrot.slane %v3081, 1
    %v3083 = vadd.f32 %v3081, %v3082
    %v3084 = vrot.slane %v2826, 4
    %v3085 = vadd.f32 %v2826, %v3084
    %v3086 = vrot.slane %v3085, 2
    %v3087 = vadd.f32 %v3085, %v3086
    %v3088 = vrot.slane %v3087, 1
    %v3089 = vadd.f32 %v3087, %v3088
    %v3090 = vrot.slane %v2906, 4
    %v3091 = vadd.f32 %v2906, %v3090
    %v3092 = vrot.slane %v3091, 2
    %v3093 = vadd.f32 %v3091, %v3092
    %v3094 = vrot.slane %v3093, 1
    %v3095 = vadd.f32 %v3093, %v3094
    %v3096 = vrot.slane %v2908, 4
    %v3097 = vadd.f32 %v2908, %v3096
    %v3098 = vrot.slane %v3097, 2
    %v3099 = vadd.f32 %v3097, %v3098
    %v3100 = vrot.slane %v3099, 1
    %v3101 = vadd.f32 %v3099, %v3100
    %v3102 = vrot.slane %v2988, 4
    %v3103 = vadd.f32 %v2988, %v3102
    %v3104 = vrot.slane %v3103, 2
    %v3105 = vadd.f32 %v3103, %v3104
    %v3106 = vrot.slane %v3105, 1
    %v3107 = vadd.f32 %v3105, %v3106
    %v3108 = vrot.slane %v2990, 4
    %v3109 = vadd.f32 %v2990, %v3108
    %v3110 = vrot.slane %v3109, 2
    %v3111 = vadd.f32 %v3109, %v3110
    %v3112 = vrot.slane %v3111, 1
    %v3113 = vadd.f32 %v3111, %v3112
    %v3114 = vrot.slane %v3070, 4
    %v3115 = vadd.f32 %v3070, %v3114
    %v3116 = vrot.slane %v3115, 2
    %v3117 = vadd.f32 %v3115, %v3116
    %v3118 = vrot.slane %v3117, 1
    %v3119 = vadd.f32 %v3117, %v3118
    %v3120 = vrot.slane %v3072, 4
    %v3121 = vadd.f32 %v3072, %v3120
    %v3122 = vrot.slane %v3121, 2
    %v3123 = vadd.f32 %v3121, %v3122
    %v3124 = vrot.slane %v3123, 1
    %v3125 = vadd.f32 %v3123, %v3124
    %v3126 = vmul.f32 %v3083, %v373
    %v3127 = vmul.f32 %v3089, %v373
    %v3128 = vmul.f32 %v3095, %v373
    %v3129 = vmul.f32 %v3101, %v373
    %v3130 = vmul.f32 %v3107, %v373
    %v3131 = vmul.f32 %v3113, %v373
    %v3132 = vmul.f32 %v3119, %v373
    %v3133 = vmul.f32 %v3125, %v373
    %v3134 = vmul.f32 %v2824, %v2824
    %v3135 = vmul.f32 %v2826, %v2826
    %v3136 = vmul.f32 %v2906, %v2906
    %v3137 = vmul.f32 %v2908, %v2908
    %v3138 = vmul.f32 %v2988, %v2988
    %v3139 = vmul.f32 %v2990, %v2990
    %v3140 = vmul.f32 %v3070, %v3070
    %v3141 = vmul.f32 %v3072, %v3072
    %v3142 = vrot.slane %v3134, 4
    %v3143 = vadd.f32 %v3134, %v3142
    %v3144 = vrot.slane %v3143, 2
    %v3145 = vadd.f32 %v3143, %v3144
    %v3146 = vrot.slane %v3145, 1
    %v3147 = vadd.f32 %v3145, %v3146
    %v3148 = vrot.slane %v3135, 4
    %v3149 = vadd.f32 %v3135, %v3148
    %v3150 = vrot.slane %v3149, 2
    %v3151 = vadd.f32 %v3149, %v3150
    %v3152 = vrot.slane %v3151, 1
    %v3153 = vadd.f32 %v3151, %v3152
    %v3154 = vrot.slane %v3136, 4
    %v3155 = vadd.f32 %v3136, %v3154
    %v3156 = vrot.slane %v3155, 2
    %v3157 = vadd.f32 %v3155, %v3156
    %v3158 = vrot.slane %v3157, 1
    %v3159 = vadd.f32 %v3157, %v3158
    %v3160 = vrot.slane %v3137, 4
    %v3161 = vadd.f32 %v3137, %v3160
    %v3162 = vrot.slane %v3161, 2
    %v3163 = vadd.f32 %v3161, %v3162
    %v3164 = vrot.slane %v3163, 1
    %v3165 = vadd.f32 %v3163, %v3164
    %v3166 = vrot.slane %v3138, 4
    %v3167 = vadd.f32 %v3138, %v3166
    %v3168 = vrot.slane %v3167, 2
    %v3169 = vadd.f32 %v3167, %v3168
    %v3170 = vrot.slane %v3169, 1
    %v3171 = vadd.f32 %v3169, %v3170
    %v3172 = vrot.slane %v3139, 4
    %v3173 = vadd.f32 %v3139, %v3172
    %v3174 = vrot.slane %v3173, 2
    %v3175 = vadd.f32 %v3173, %v3174
    %v3176 = vrot.slane %v3175, 1
    %v3177 = vadd.f32 %v3175, %v3176
    %v3178 = vrot.slane %v3140, 4
    %v3179 = vadd.f32 %v3140, %v3178
    %v3180 = vrot.slane %v3179, 2
    %v3181 = vadd.f32 %v3179, %v3180
    %v3182 = vrot.slane %v3181, 1
    %v3183 = vadd.f32 %v3181, %v3182
    %v3184 = vrot.slane %v3141, 4
    %v3185 = vadd.f32 %v3141, %v3184
    %v3186 = vrot.slane %v3185, 2
    %v3187 = vadd.f32 %v3185, %v3186
    %v3188 = vrot.slane %v3187, 1
    %v3189 = vadd.f32 %v3187, %v3188
    %v3190 = vmul.f32 %v3147, %v373
    %v3191 = vmul.f32 %v3153, %v373
    %v3192 = vmul.f32 %v3159, %v373
    %v3193 = vmul.f32 %v3165, %v373
    %v3194 = vmul.f32 %v3171, %v373
    %v3195 = vmul.f32 %v3177, %v373
    %v3196 = vmul.f32 %v3183, %v373
    %v3197 = vmul.f32 %v3189, %v373
    %v3198 = vmul.f32 %v3126, %v3126
    %v3199 = vmul.f32 %v3127, %v3127
    %v3200 = vmul.f32 %v3128, %v3128
    %v3201 = vmul.f32 %v3129, %v3129
    %v3202 = vmul.f32 %v3130, %v3130
    %v3203 = vmul.f32 %v3131, %v3131
    %v3204 = vmul.f32 %v3132, %v3132
    %v3205 = vmul.f32 %v3133, %v3133
    %v3206 = vsub.f32 %v3190, %v3198
    %v3207 = vsub.f32 %v3191, %v3199
    %v3208 = vsub.f32 %v3192, %v3200
    %v3209 = vsub.f32 %v3193, %v3201
    %v3210 = vsub.f32 %v3194, %v3202
    %v3211 = vsub.f32 %v3195, %v3203
    %v3212 = vsub.f32 %v3196, %v3204
    %v3213 = vsub.f32 %v3197, %v3205
    %v3214 = vadd.f32 %v3206, 0.8
    %v3215 = vadd.f32 %v3207, 0.8
    %v3216 = vadd.f32 %v3208, 0.8
    %v3217 = vadd.f32 %v3209, 0.8
    %v3218 = vadd.f32 %v3210, 0.8
    %v3219 = vadd.f32 %v3211, 0.8
    %v3220 = vadd.f32 %v3212, 0.8
    %v3221 = vadd.f32 %v3213, 0.8
    %v3222 = vrsqrt.pop %v3214
    %v3223 = vrsqrt.pop %v3215
    %v3224 = vrsqrt.pop %v3216
    %v3225 = vrsqrt.pop %v3217
    %v3226 = vrsqrt.pop %v3218
    %v3227 = vrsqrt.pop %v3219
    %v3228 = vrsqrt.pop %v3220
    %v3229 = vrsqrt.pop %v3221
    %v3238 = vcombine.low %v3222, %v3223
    %v3239 = vcombine.low %v3224, %v3225
    %v3240 = vcombine.low %v3226, %v3227
    %v3241 = vcombine.low %v3228, %v3229
    %v3243 = vunpack.c.l.s4 1966171168
    %v3244 = vunpack.c.0.s8 %v3243
    %v3245 = vlaneseq
    %v3246 = vshrl.u32 %v3245, 7
    %v3247 = vsub.s32 %v3244, %v3246
    %v3248 = vrot.slane %v3238, %v3247
    %v3250 = vunpack.c.l.s4 1966171168
    %v3251 = vunpack.c.0.s8 %v3250
    %v3252 = vlaneseq
    %v3253 = vshrl.u32 %v3252, 7
    %v3254 = vsub.s32 %v3251, %v3253
    %v3255 = vrot.slane %v3239, %v3254
    %v3257 = vunpack.c.l.s4 1966171168
    %v3258 = vunpack.c.0.s8 %v3257
    %v3259 = vlaneseq
    %v3260 = vshrl.u32 %v3259, 7
    %v3261 = vsub.s32 %v3258, %v3260
    %v3262 = vrot.slane %v3240, %v3261
    %v3264 = vunpack.c.l.s4 1966171168
    %v3265 = vunpack.c.0.s8 %v3264
    %v3266 = vlaneseq
    %v3267 = vshrl.u32 %v3266, 7
    %v3268 = vsub.s32 %v3265, %v3267
    %v3269 = vrot.slane %v3241, %v3268
    %v3270 = vcombine.low %v3248, %v3255
    %v3271 = vcombine.low %v3262, %v3269
    %v3273 = vunpack.c.l.s4 1966171168
    %v3274 = vunpack.c.0.s8 %v3273
    %v3275 = vlaneseq
    %v3276 = vshrl.u32 %v3275, 7
    %v3277 = vsub.s32 %v3274, %v3276
    %v3278 = vrot.slane %v3270, %v3277
    %v3280 = vunpack.c.l.s4 1966171168
    %v3281 = vunpack.c.0.s8 %v3280
    %v3282 = vlaneseq
    %v3283 = vshrl.u32 %v3282, 7
    %v3284 = vsub.s32 %v3281, %v3283
    %v3285 = vrot.slane %v3271, %v3284
    %v3286 = vcombine.low %v3278, %v3285
    %v3288 = vmul.f32 %v3076, %v3286
    %v3290 = vlaneseq
    %v3291 = vshrl.u32 %v3290, 7
    %v3292 = vsub.s32 0, %v3291
    %v3293 = vrot.slane %v3288, %v3292
    %v3294 = vlaneseq
    %v3295 = vshrl.u32 %v3294, 7
    %v3296 = vsub.s32 1, %v3295
    %v3297 = vrot.slane %v3288, %v3296
    %v3298 = vlaneseq
    %v3299 = vshrl.u32 %v3298, 7
    %v3300 = vsub.s32 2, %v3299
    %v3301 = vrot.slane %v3288, %v3300
    %v3302 = vlaneseq
    %v3303 = vshrl.u32 %v3302, 7
    %v3304 = vsub.s32 3, %v3303
    %v3305 = vrot.slane %v3288, %v3304
    %v3306 = vlaneseq
    %v3307 = vshrl.u32 %v3306, 7
    %v3308 = vsub.s32 4, %v3307
    %v3309 = vrot.slane %v3288, %v3308
    %v3310 = vlaneseq
    %v3311 = vshrl.u32 %v3310, 7
    %v3312 = vsub.s32 5, %v3311
    %v3313 = vrot.slane %v3288, %v3312
    %v3314 = vlaneseq
    %v3315 = vshrl.u32 %v3314, 7
    %v3316 = vsub.s32 6, %v3315
    %v3317 = vrot.slane %v3288, %v3316
    %v3318 = vlaneseq
    %v3319 = vshrl.u32 %v3318, 7
    %v3320 = vsub.s32 7, %v3319
    %v3321 = vrot.slane %v3288, %v3320
    %v3330 = vmul.f32 %v2824, %v3293
    %v3331 = vmul.f32 %v2826, %v3297
    %v3332 = vmul.f32 %v2906, %v3301
    %v3333 = vmul.f32 %v2908, %v3305
    %v3334 = vmul.f32 %v2988, %v3309
    %v3335 = vmul.f32 %v2990, %v3313
    %v3336 = vmul.f32 %v3070, %v3317
    %v3337 = vmul.f32 %v3072, %v3321
    %v3338 = vmul.f32 %v3126, %v3293
    %v3339 = vmul.f32 %v3127, %v3297
    %v3340 = vmul.f32 %v3128, %v3301
    %v3341 = vmul.f32 %v3129, %v3305
    %v3342 = vmul.f32 %v3130, %v3309
    %v3343 = vmul.f32 %v3131, %v3313
    %v3344 = vmul.f32 %v3132, %v3317
    %v3345 = vmul.f32 %v3133, %v3321
    %v3354 = vcombine.low %v3338, %v3339
    %v3355 = vcombine.low %v3340, %v3341
    %v3356 = vcombine.low %v3342, %v3343
    %v3357 = vcombine.low %v3344, %v3345
    %v3359 = vunpack.c.l.s4 1966171168
    %v3360 = vunpack.c.0.s8 %v3359
    %v3361 = vlaneseq
    %v3362 = vshrl.u32 %v3361, 7
    %v3363 = vsub.s32 %v3360, %v3362
    %v3364 = vrot.slane %v3354, %v3363
    %v3366 = vunpack.c.l.s4 1966171168
    %v3367 = vunpack.c.0.s8 %v3366
    %v3368 = vlaneseq
    %v3369 = vshrl.u32 %v3368, 7
    %v3370 = vsub.s32 %v3367, %v3369
    %v3371 = vrot.slane %v3355, %v3370
    %v3373 = vunpack.c.l.s4 1966171168
    %v3374 = vunpack.c.0.s8 %v3373
    %v3375 = vlaneseq
    %v3376 = vshrl.u32 %v3375, 7
    %v3377 = vsub.s32 %v3374, %v3376
    %v3378 = vrot.slane %v3356, %v3377
    %v3380 = vunpack.c.l.s4 1966171168
    %v3381 = vunpack.c.0.s8 %v3380
    %v3382 = vlaneseq
    %v3383 = vshrl.u32 %v3382, 7
    %v3384 = vsub.s32 %v3381, %v3383
    %v3385 = vrot.slane %v3357, %v3384
    %v3386 = vcombine.low %v3364, %v3371
    %v3387 = vcombine.low %v3378, %v3385
    %v3389 = vunpack.c.l.s4 1966171168
    %v3390 = vunpack.c.0.s8 %v3389
    %v3391 = vlaneseq
    %v3392 = vshrl.u32 %v3391, 7
    %v3393 = vsub.s32 %v3390, %v3392
    %v3394 = vrot.slane %v3386, %v3393
    %v3396 = vunpack.c.l.s4 1966171168
    %v3397 = vunpack.c.0.s8 %v3396
    %v3398 = vlaneseq
    %v3399 = vshrl.u32 %v3398, 7
    %v3400 = vsub.s32 %v3397, %v3399
    %v3401 = vrot.slane %v3387, %v3400
    %v3402 = vcombine.low %v3394, %v3401
    %v3404 = vsub.f32 %v3077, %v3402
    %v3406 = vlaneseq
    %v3407 = vshrl.u32 %v3406, 7
    %v3408 = vsub.s32 0, %v3407
    %v3409 = vrot.slane %v3404, %v3408
    %v3410 = vlaneseq
    %v3411 = vshrl.u32 %v3410, 7
    %v3412 = vsub.s32 1, %v3411
    %v3413 = vrot.slane %v3404, %v3412
    %v3414 = vlaneseq
    %v3415 = vshrl.u32 %v3414, 7
    %v3416 = vsub.s32 2, %v3415
    %v3417 = vrot.slane %v3404, %v3416
    %v3418 = vlaneseq
    %v3419 = vshrl.u32 %v3418, 7
    %v3420 = vsub.s32 3, %v3419
    %v3421 = vrot.slane %v3404, %v3420
    %v3422 = vlaneseq
    %v3423 = vshrl.u32 %v3422, 7
    %v3424 = vsub.s32 4, %v3423
    %v3425 = vrot.slane %v3404, %v3424
    %v3426 = vlaneseq
    %v3427 = vshrl.u32 %v3426, 7
    %v3428 = vsub.s32 5, %v3427
    %v3429 = vrot.slane %v3404, %v3428
    %v3430 = vlaneseq
    %v3431 = vshrl.u32 %v3430, 7
    %v3432 = vsub.s32 6, %v3431
    %v3433 = vrot.slane %v3404, %v3432
    %v3434 = vlaneseq
    %v3435 = vshrl.u32 %v3434, 7
    %v3436 = vsub.s32 7, %v3435
    %v3437 = vrot.slane %v3404, %v3436
    %v3446 = vadd.f32 %v3330, %v3409
    %v3447 = vadd.f32 %v3331, %v3413
    %v3448 = vadd.f32 %v3332, %v3417
    %v3449 = vadd.f32 %v3333, %v3421
    %v3450 = vadd.f32 %v3334, %v3425
    %v3451 = vadd.f32 %v3335, %v3429
    %v3452 = vadd.f32 %v3336, %v3433
    %v3453 = vadd.f32 %v3337, %v3437
    %vm3454 = vcmp.gt.f32.partialorder %v3446, 0.0
    %vm3455 = vcmp.gt.f32.partialorder %v3447, 0.0
    %vm3456 = vcmp.gt.f32.partialorder %v3448, 0.0
    %vm3457 = vcmp.gt.f32.partialorder %v3449, 0.0
    %vm3458 = vcmp.gt.f32.partialorder %v3450, 0.0
    %vm3459 = vcmp.gt.f32.partialorder %v3451, 0.0
    %vm3460 = vcmp.gt.f32.partialorder %v3452, 0.0
    %vm3461 = vcmp.gt.f32.partialorder %v3453, 0.0
    %v3462 = vmul.f32 %v3446, 0.2
    %v3463 = vmul.f32 %v3447, 0.2
    %v3464 = vmul.f32 %v3448, 0.2
    %v3465 = vmul.f32 %v3449, 0.2
    %v3466 = vmul.f32 %v3450, 0.2
    %v3467 = vmul.f32 %v3451, 0.2
    %v3468 = vmul.f32 %v3452, 0.2
    %v3469 = vmul.f32 %v3453, 0.2
    %v3470 = vsel %vm3454, %v3446, %v3462
    %v3471 = vsel %vm3455, %v3447, %v3463
    %v3472 = vsel %vm3456, %v3448, %v3464
    %v3473 = vsel %vm3457, %v3449, %v3465
    %v3474 = vsel %vm3458, %v3450, %v3466
    %v3475 = vsel %vm3459, %v3451, %v3467
    %v3476 = vsel %vm3460, %v3452, %v3468
    %v3477 = vsel %vm3461, %v3453, %v3469
    %v3478 = vpack.c.bf16 %v3470, %v3470
    %v3479 = vpack.c.bf16 %v3471, %v3471
    %v3480 = vpack.c.bf16 %v3472, %v3472
    %v3481 = vpack.c.bf16 %v3473, %v3473
    %v3482 = vpack.c.bf16 %v3474, %v3474
    %v3483 = vpack.c.bf16 %v3475, %v3475
    %v3484 = vpack.c.bf16 %v3476, %v3476
    %v3485 = vpack.c.bf16 %v3477, %v3477
    %v3486 = vld [vmem:[#allocation7] sm:$0xf]
    %v3487 = vld [vmem:[#allocation7 + $0x4] sm:$0xf]
    %v3488 = vld [vmem:[#allocation7 + $0x8] sm:$0xf]
    %v3489 = vld [vmem:[#allocation7 + $0xc] sm:$0xf]
    %v3490 = vld [vmem:[#allocation7 + $0x10] sm:$0xf]
    %v3491 = vld [vmem:[#allocation7 + $0x14] sm:$0xf]
    %v3492 = vld [vmem:[#allocation7 + $0x18] sm:$0xf]
    %v3493 = vld [vmem:[#allocation7 + $0x1c] sm:$0xf]
    %v3494 = vld [vmem:[#allocation7 + $0x20] sm:$0xf]
    %v3495 = vld [vmem:[#allocation7 + $0x24] sm:$0xf]
    %v3496 = vld [vmem:[#allocation7 + $0x28] sm:$0xf]
    %v3497 = vld [vmem:[#allocation7 + $0x2c] sm:$0xf]
    %v3498 = vld [vmem:[#allocation7 + $0x30] sm:$0xf]
    %v3499 = vld [vmem:[#allocation7 + $0x34] sm:$0xf]
    %v3500 = vld [vmem:[#allocation7 + $0x38] sm:$0xf]
    %v3501 = vld [vmem:[#allocation7 + $0x3c] sm:$0xf]
    %v3502 = vld [vmem:[#allocation7 + $0x40] sm:$0xf]
    %v3503 = vld [vmem:[#allocation7 + $0x44] sm:$0xf]
    %v3504 = vld [vmem:[#allocation7 + $0x48] sm:$0xf]
    %v3505 = vld [vmem:[#allocation7 + $0x4c] sm:$0xf]
    %v3506 = vld [vmem:[#allocation7 + $0x50] sm:$0xf]
    %v3507 = vld [vmem:[#allocation7 + $0x54] sm:$0xf]
    %v3508 = vld [vmem:[#allocation7 + $0x58] sm:$0xf]
    %v3509 = vld [vmem:[#allocation7 + $0x5c] sm:$0xf]
    %v3510 = vld [vmem:[#allocation7 + $0x60] sm:$0xf]
    %v3511 = vld [vmem:[#allocation7 + $0x64] sm:$0xf]
    %v3512 = vld [vmem:[#allocation7 + $0x68] sm:$0xf]
    %v3513 = vld [vmem:[#allocation7 + $0x6c] sm:$0xf]
    %v3514 = vld [vmem:[#allocation7 + $0x70] sm:$0xf]
    %v3515 = vld [vmem:[#allocation7 + $0x74] sm:$0xf]
    %v3516 = vld [vmem:[#allocation7 + $0x78] sm:$0xf]
    %v3517 = vld [vmem:[#allocation7 + $0x7c] sm:$0xf]
    %v3518 = vld [vmem:[#allocation7 + $0x80] sm:$0xf]
    %v3519 = vld [vmem:[#allocation7 + $0x84] sm:$0xf]
    %v3520 = vld [vmem:[#allocation7 + $0x88] sm:$0xf]
    %v3521 = vld [vmem:[#allocation7 + $0x8c] sm:$0xf]
    %v3522 = vld [vmem:[#allocation7 + $0x90] sm:$0xf]
    %v3523 = vld [vmem:[#allocation7 + $0x94] sm:$0xf]
    %v3524 = vld [vmem:[#allocation7 + $0x98] sm:$0xf]
    %v3525 = vld [vmem:[#allocation7 + $0x9c] sm:$0xf]
    %v3526 = vld [vmem:[#allocation7 + $0xa0] sm:$0xf]
    %v3527 = vld [vmem:[#allocation7 + $0xa4] sm:$0xf]
    %v3528 = vld [vmem:[#allocation7 + $0xa8] sm:$0xf]
    %v3529 = vld [vmem:[#allocation7 + $0xac] sm:$0xf]
    %v3530 = vld [vmem:[#allocation7 + $0xb0] sm:$0xf]
    %v3531 = vld [vmem:[#allocation7 + $0xb4] sm:$0xf]
    %v3532 = vld [vmem:[#allocation7 + $0xb8] sm:$0xf]
    %v3533 = vld [vmem:[#allocation7 + $0xbc] sm:$0xf]
    %v3534 = vld [vmem:[#allocation7 + $0xc0] sm:$0xf]
    %v3535 = vld [vmem:[#allocation7 + $0xc4] sm:$0xf]
    %v3536 = vld [vmem:[#allocation7 + $0xc8] sm:$0xf]
    %v3537 = vld [vmem:[#allocation7 + $0xcc] sm:$0xf]
    %v3538 = vld [vmem:[#allocation7 + $0xd0] sm:$0xf]
    %v3539 = vld [vmem:[#allocation7 + $0xd4] sm:$0xf]
    %v3540 = vld [vmem:[#allocation7 + $0xd8] sm:$0xf]
    %v3541 = vld [vmem:[#allocation7 + $0xdc] sm:$0xf]
    %v3542 = vld [vmem:[#allocation7 + $0xe0] sm:$0xf]
    %v3543 = vld [vmem:[#allocation7 + $0xe4] sm:$0xf]
    %v3544 = vld [vmem:[#allocation7 + $0xe8] sm:$0xf]
    %v3545 = vld [vmem:[#allocation7 + $0xec] sm:$0xf]
    %v3546 = vld [vmem:[#allocation7 + $0xf0] sm:$0xf]
    %v3547 = vld [vmem:[#allocation7 + $0xf4] sm:$0xf]
    %v3548 = vld [vmem:[#allocation7 + $0xf8] sm:$0xf]
    %v3549 = vld [vmem:[#allocation7 + $0xfc] sm:$0xf]
    %v3550 = vld [vmem:[#allocation7 + $0x100] sm:$0xf]
    %v3551 = vld [vmem:[#allocation7 + $0x104] sm:$0xf]
    %v3552 = vld [vmem:[#allocation7 + $0x108] sm:$0xf]
    %v3553 = vld [vmem:[#allocation7 + $0x10c] sm:$0xf]
    %v3554 = vld [vmem:[#allocation7 + $0x110] sm:$0xf]
    %v3555 = vld [vmem:[#allocation7 + $0x114] sm:$0xf]
    %v3556 = vld [vmem:[#allocation7 + $0x118] sm:$0xf]
    %v3557 = vld [vmem:[#allocation7 + $0x11c] sm:$0xf]
    %v3558 = vld [vmem:[#allocation7 + $0x120] sm:$0xf]
    %v3559 = vld [vmem:[#allocation7 + $0x124] sm:$0xf]
    %v3560 = vld [vmem:[#allocation7 + $0x128] sm:$0xf]
    %v3561 = vld [vmem:[#allocation7 + $0x12c] sm:$0xf]
    %v3562 = vld [vmem:[#allocation7 + $0x130] sm:$0xf]
    %v3563 = vld [vmem:[#allocation7 + $0x134] sm:$0xf]
    %v3564 = vld [vmem:[#allocation7 + $0x138] sm:$0xf]
    %v3565 = vld [vmem:[#allocation7 + $0x13c] sm:$0xf]
    %v3566 = vld [vmem:[#allocation7 + $0x140] sm:$0xf]
    %v3567 = vld [vmem:[#allocation7 + $0x144] sm:$0xf]
    %v3568 = vld [vmem:[#allocation7 + $0x148] sm:$0xf]
    %v3569 = vld [vmem:[#allocation7 + $0x14c] sm:$0xf]
    %v3570 = vld [vmem:[#allocation7 + $0x150] sm:$0xf]
    %v3571 = vld [vmem:[#allocation7 + $0x154] sm:$0xf]
    %v3572 = vld [vmem:[#allocation7 + $0x158] sm:$0xf]
    %v3573 = vld [vmem:[#allocation7 + $0x15c] sm:$0xf]
    %v3574 = vld [vmem:[#allocation7 + $0x160] sm:$0xf]
    %v3575 = vld [vmem:[#allocation7 + $0x164] sm:$0xf]
    %v3576 = vld [vmem:[#allocation7 + $0x168] sm:$0xf]
    %v3577 = vld [vmem:[#allocation7 + $0x16c] sm:$0xf]
    %v3578 = vld [vmem:[#allocation7 + $0x170] sm:$0xf]
    %v3579 = vld [vmem:[#allocation7 + $0x174] sm:$0xf]
    %v3580 = vld [vmem:[#allocation7 + $0x178] sm:$0xf]
    %v3581 = vld [vmem:[#allocation7 + $0x17c] sm:$0xf]
    %v3582 = vld [vmem:[#allocation7 + $0x180] sm:$0xf]
    %v3583 = vld [vmem:[#allocation7 + $0x184] sm:$0xf]
    %v3584 = vld [vmem:[#allocation7 + $0x188] sm:$0xf]
    %v3585 = vld [vmem:[#allocation7 + $0x18c] sm:$0xf]
    %v3586 = vld [vmem:[#allocation7 + $0x190] sm:$0xf]
    %v3587 = vld [vmem:[#allocation7 + $0x194] sm:$0xf]
    %v3588 = vld [vmem:[#allocation7 + $0x198] sm:$0xf]
    %v3589 = vld [vmem:[#allocation7 + $0x19c] sm:$0xf]
    %v3590 = vld [vmem:[#allocation7 + $0x1a0] sm:$0xf]
    %v3591 = vld [vmem:[#allocation7 + $0x1a4] sm:$0xf]
    %v3592 = vld [vmem:[#allocation7 + $0x1a8] sm:$0xf]
    %v3593 = vld [vmem:[#allocation7 + $0x1ac] sm:$0xf]
    %v3594 = vld [vmem:[#allocation7 + $0x1b0] sm:$0xf]
    %v3595 = vld [vmem:[#allocation7 + $0x1b4] sm:$0xf]
    %v3596 = vld [vmem:[#allocation7 + $0x1b8] sm:$0xf]
    %v3597 = vld [vmem:[#allocation7 + $0x1bc] sm:$0xf]
    %v3598 = vld [vmem:[#allocation7 + $0x1c0] sm:$0xf]
    %v3599 = vld [vmem:[#allocation7 + $0x1c4] sm:$0xf]
    %v3600 = vld [vmem:[#allocation7 + $0x1c8] sm:$0xf]
    %v3601 = vld [vmem:[#allocation7 + $0x1cc] sm:$0xf]
    %v3602 = vld [vmem:[#allocation7 + $0x1d0] sm:$0xf]
    %v3603 = vld [vmem:[#allocation7 + $0x1d4] sm:$0xf]
    %v3604 = vld [vmem:[#allocation7 + $0x1d8] sm:$0xf]
    %v3605 = vld [vmem:[#allocation7 + $0x1dc] sm:$0xf]
    %v3606 = vld [vmem:[#allocation7 + $0x1e0] sm:$0xf]
    %v3607 = vld [vmem:[#allocation7 + $0x1e4] sm:$0xf]
    %v3608 = vld [vmem:[#allocation7 + $0x1e8] sm:$0xf]
    %v3609 = vld [vmem:[#allocation7 + $0x1ec] sm:$0xf]
    %v3610 = vld [vmem:[#allocation7 + $0x1f0] sm:$0xf]
    %v3611 = vld [vmem:[#allocation7 + $0x1f4] sm:$0xf]
    %v3612 = vld [vmem:[#allocation7 + $0x1f8] sm:$0xf]
    %v3613 = vld [vmem:[#allocation7 + $0x1fc] sm:$0xf]
    %v3614 = vld [vmem:[#allocation9 + $0x2b] sm:$0x1]
    %v3616 = vlaneseq
    %v3617 = vshrl.u32 %v3616, 7
    %v3618 = vsub.s32 0, %v3617
    %v3619 = vrot.slane %v3614, %v3618
    %v3749 = vunpack.c.l.b16 %v3486
    %v3750 = vunpack.c.l.b16 %v3487
    %v3751 = vunpack.c.l.b16 %v3488
    %v3752 = vunpack.c.l.b16 %v3489
    %v3753 = vunpack.c.l.b16 %v3490
    %v3754 = vunpack.c.l.b16 %v3491
    %v3755 = vunpack.c.l.b16 %v3492
    %v3756 = vunpack.c.l.b16 %v3493
    %v3757 = vunpack.c.l.b16 %v3494
    %v3758 = vunpack.c.l.b16 %v3495
    %v3759 = vunpack.c.l.b16 %v3496
    %v3760 = vunpack.c.l.b16 %v3497
    %v3761 = vunpack.c.l.b16 %v3498
    %v3762 = vunpack.c.l.b16 %v3499
    %v3763 = vunpack.c.l.b16 %v3500
    %v3764 = vunpack.c.l.b16 %v3501
    %v3765 = vunpack.c.l.b16 %v3502
    %v3766 = vunpack.c.l.b16 %v3503
    %v3767 = vunpack.c.l.b16 %v3504
    %v3768 = vunpack.c.l.b16 %v3505
    %v3769 = vunpack.c.l.b16 %v3506
    %v3770 = vunpack.c.l.b16 %v3507
    %v3771 = vunpack.c.l.b16 %v3508
    %v3772 = vunpack.c.l.b16 %v3509
    %v3773 = vunpack.c.l.b16 %v3510
    %v3774 = vunpack.c.l.b16 %v3511
    %v3775 = vunpack.c.l.b16 %v3512
    %v3776 = vunpack.c.l.b16 %v3513
    %v3777 = vunpack.c.l.b16 %v3514
    %v3778 = vunpack.c.l.b16 %v3515
    %v3779 = vunpack.c.l.b16 %v3516
    %v3780 = vunpack.c.l.b16 %v3517
    %v3781 = vunpack.c.l.b16 %v3518
    %v3782 = vunpack.c.l.b16 %v3519
    %v3783 = vunpack.c.l.b16 %v3520
    %v3784 = vunpack.c.l.b16 %v3521
    %v3785 = vunpack.c.l.b16 %v3522
    %v3786 = vunpack.c.l.b16 %v3523
    %v3787 = vunpack.c.l.b16 %v3524
    %v3788 = vunpack.c.l.b16 %v3525
    %v3789 = vunpack.c.l.b16 %v3526
    %v3790 = vunpack.c.l.b16 %v3527
    %v3791 = vunpack.c.l.b16 %v3528
    %v3792 = vunpack.c.l.b16 %v3529
    %v3793 = vunpack.c.l.b16 %v3530
    %v3794 = vunpack.c.l.b16 %v3531
    %v3795 = vunpack.c.l.b16 %v3532
    %v3796 = vunpack.c.l.b16 %v3533
    %v3797 = vunpack.c.l.b16 %v3534
    %v3798 = vunpack.c.l.b16 %v3535
    %v3799 = vunpack.c.l.b16 %v3536
    %v3800 = vunpack.c.l.b16 %v3537
    %v3801 = vunpack.c.l.b16 %v3538
    %v3802 = vunpack.c.l.b16 %v3539
    %v3803 = vunpack.c.l.b16 %v3540
    %v3804 = vunpack.c.l.b16 %v3541
    %v3805 = vunpack.c.l.b16 %v3542
    %v3806 = vunpack.c.l.b16 %v3543
    %v3807 = vunpack.c.l.b16 %v3544
    %v3808 = vunpack.c.l.b16 %v3545
    %v3809 = vunpack.c.l.b16 %v3546
    %v3810 = vunpack.c.l.b16 %v3547
    %v3811 = vunpack.c.l.b16 %v3548
    %v3812 = vunpack.c.l.b16 %v3549
    %v3813 = vunpack.c.l.b16 %v3550
    %v3814 = vunpack.c.l.b16 %v3551
    %v3815 = vunpack.c.l.b16 %v3552
    %v3816 = vunpack.c.l.b16 %v3553
    %v3817 = vunpack.c.l.b16 %v3554
    %v3818 = vunpack.c.l.b16 %v3555
    %v3819 = vunpack.c.l.b16 %v3556
    %v3820 = vunpack.c.l.b16 %v3557
    %v3821 = vunpack.c.l.b16 %v3558
    %v3822 = vunpack.c.l.b16 %v3559
    %v3823 = vunpack.c.l.b16 %v3560
    %v3824 = vunpack.c.l.b16 %v3561
    %v3825 = vunpack.c.l.b16 %v3562
    %v3826 = vunpack.c.l.b16 %v3563
    %v3827 = vunpack.c.l.b16 %v3564
    %v3828 = vunpack.c.l.b16 %v3565
    %v3829 = vunpack.c.l.b16 %v3566
    %v3830 = vunpack.c.l.b16 %v3567
    %v3831 = vunpack.c.l.b16 %v3568
    %v3832 = vunpack.c.l.b16 %v3569
    %v3833 = vunpack.c.l.b16 %v3570
    %v3834 = vunpack.c.l.b16 %v3571
    %v3835 = vunpack.c.l.b16 %v3572
    %v3836 = vunpack.c.l.b16 %v3573
    %v3837 = vunpack.c.l.b16 %v3574
    %v3838 = vunpack.c.l.b16 %v3575
    %v3839 = vunpack.c.l.b16 %v3576
    %v3840 = vunpack.c.l.b16 %v3577
    %v3841 = vunpack.c.l.b16 %v3578
    %v3842 = vunpack.c.l.b16 %v3579
    %v3843 = vunpack.c.l.b16 %v3580
    %v3844 = vunpack.c.l.b16 %v3581
    %v3845 = vunpack.c.l.b16 %v3582
    %v3846 = vunpack.c.l.b16 %v3583
    %v3847 = vunpack.c.l.b16 %v3584
    %v3848 = vunpack.c.l.b16 %v3585
    %v3849 = vunpack.c.l.b16 %v3586
    %v3850 = vunpack.c.l.b16 %v3587
    %v3851 = vunpack.c.l.b16 %v3588
    %v3852 = vunpack.c.l.b16 %v3589
    %v3853 = vunpack.c.l.b16 %v3590
    %v3854 = vunpack.c.l.b16 %v3591
    %v3855 = vunpack.c.l.b16 %v3592
    %v3856 = vunpack.c.l.b16 %v3593
    %v3857 = vunpack.c.l.b16 %v3594
    %v3858 = vunpack.c.l.b16 %v3595
    %v3859 = vunpack.c.l.b16 %v3596
    %v3860 = vunpack.c.l.b16 %v3597
    %v3861 = vunpack.c.l.b16 %v3598
    %v3862 = vunpack.c.l.b16 %v3599
    %v3863 = vunpack.c.l.b16 %v3600
    %v3864 = vunpack.c.l.b16 %v3601
    %v3865 = vunpack.c.l.b16 %v3602
    %v3866 = vunpack.c.l.b16 %v3603
    %v3867 = vunpack.c.l.b16 %v3604
    %v3868 = vunpack.c.l.b16 %v3605
    %v3869 = vunpack.c.l.b16 %v3606
    %v3870 = vunpack.c.l.b16 %v3607
    %v3871 = vunpack.c.l.b16 %v3608
    %v3872 = vunpack.c.l.b16 %v3609
    %v3873 = vunpack.c.l.b16 %v3610
    %v3874 = vunpack.c.l.b16 %v3611
    %v3875 = vunpack.c.l.b16 %v3612
    %v3876 = vunpack.c.l.b16 %v3613
    %v3877 = vpack.c.b16 %v3750, %v3749
    %v3878 = vpack.c.b16 %v3752, %v3751
    %v3879 = vpack.c.b16 %v3754, %v3753
    %v3880 = vpack.c.b16 %v3756, %v3755
    %v3881 = vpack.c.b16 %v3758, %v3757
    %v3882 = vpack.c.b16 %v3760, %v3759
    %v3883 = vpack.c.b16 %v3762, %v3761
    %v3884 = vpack.c.b16 %v3764, %v3763
    %v3885 = vpack.c.b16 %v3766, %v3765
    %v3886 = vpack.c.b16 %v3768, %v3767
    %v3887 = vpack.c.b16 %v3770, %v3769
    %v3888 = vpack.c.b16 %v3772, %v3771
    %v3889 = vpack.c.b16 %v3774, %v3773
    %v3890 = vpack.c.b16 %v3776, %v3775
    %v3891 = vpack.c.b16 %v3778, %v3777
    %v3892 = vpack.c.b16 %v3780, %v3779
    %v3893 = vpack.c.b16 %v3782, %v3781
    %v3894 = vpack.c.b16 %v3784, %v3783
    %v3895 = vpack.c.b16 %v3786, %v3785
    %v3896 = vpack.c.b16 %v3788, %v3787
    %v3897 = vpack.c.b16 %v3790, %v3789
    %v3898 = vpack.c.b16 %v3792, %v3791
    %v3899 = vpack.c.b16 %v3794, %v3793
    %v3900 = vpack.c.b16 %v3796, %v3795
    %v3901 = vpack.c.b16 %v3798, %v3797
    %v3902 = vpack.c.b16 %v3800, %v3799
    %v3903 = vpack.c.b16 %v3802, %v3801
    %v3904 = vpack.c.b16 %v3804, %v3803
    %v3905 = vpack.c.b16 %v3806, %v3805
    %v3906 = vpack.c.b16 %v3808, %v3807
    %v3907 = vpack.c.b16 %v3810, %v3809
    %v3908 = vpack.c.b16 %v3812, %v3811
    %v3909 = vpack.c.b16 %v3814, %v3813
    %v3910 = vpack.c.b16 %v3816, %v3815
    %v3911 = vpack.c.b16 %v3818, %v3817
    %v3912 = vpack.c.b16 %v3820, %v3819
    %v3913 = vpack.c.b16 %v3822, %v3821
    %v3914 = vpack.c.b16 %v3824, %v3823
    %v3915 = vpack.c.b16 %v3826, %v3825
    %v3916 = vpack.c.b16 %v3828, %v3827
    %v3917 = vpack.c.b16 %v3830, %v3829
    %v3918 = vpack.c.b16 %v3832, %v3831
    %v3919 = vpack.c.b16 %v3834, %v3833
    %v3920 = vpack.c.b16 %v3836, %v3835
    %v3921 = vpack.c.b16 %v3838, %v3837
    %v3922 = vpack.c.b16 %v3840, %v3839
    %v3923 = vpack.c.b16 %v3842, %v3841
    %v3924 = vpack.c.b16 %v3844, %v3843
    %v3925 = vpack.c.b16 %v3846, %v3845
    %v3926 = vpack.c.b16 %v3848, %v3847
    %v3927 = vpack.c.b16 %v3850, %v3849
    %v3928 = vpack.c.b16 %v3852, %v3851
    %v3929 = vpack.c.b16 %v3854, %v3853
    %v3930 = vpack.c.b16 %v3856, %v3855
    %v3931 = vpack.c.b16 %v3858, %v3857
    %v3932 = vpack.c.b16 %v3860, %v3859
    %v3933 = vpack.c.b16 %v3862, %v3861
    %v3934 = vpack.c.b16 %v3864, %v3863
    %v3935 = vpack.c.b16 %v3866, %v3865
    %v3936 = vpack.c.b16 %v3868, %v3867
    %v3937 = vpack.c.b16 %v3870, %v3869
    %v3938 = vpack.c.b16 %v3872, %v3871
    %v3939 = vpack.c.b16 %v3874, %v3873
    %v3940 = vpack.c.b16 %v3876, %v3875
    %4005 = vmatprep.subr.bf16.mxu0 0
    %4006 = vmatpush1.bf16.msra.mxu0 %v3877
    %4007 = vmatprep.subr.bf16.mxu0 0
    %4008 = vmatpush1.bf16.msra.mxu0 %v3878
    %4009 = vmatprep.subr.bf16.mxu0 0
    %4010 = vmatpush1.bf16.msra.mxu0 %v3879
    %4011 = vmatprep.subr.bf16.mxu0 0
    %4012 = vmatpush1.bf16.msra.mxu0 %v3880
    %4013 = vmatprep.subr.bf16.mxu0 0
    %4014 = vmatpush1.bf16.msra.mxu0 %v3881
    %4015 = vmatprep.subr.bf16.mxu0 0
    %4016 = vmatpush1.bf16.msra.mxu0 %v3882
    %4017 = vmatprep.subr.bf16.mxu0 0
    %4018 = vmatpush1.bf16.msra.mxu0 %v3883
    %4019 = vmatprep.subr.bf16.mxu0 0
    %4020 = vmatpush1.bf16.msra.mxu0 %v3884
    %4021 = vmatprep.subr.bf16.mxu0 0
    %4022 = vmatpush1.bf16.msra.mxu0 %v3885
    %4023 = vmatprep.subr.bf16.mxu0 0
    %4024 = vmatpush1.bf16.msra.mxu0 %v3886
    %4025 = vmatprep.subr.bf16.mxu0 0
    %4026 = vmatpush1.bf16.msra.mxu0 %v3887
    %4027 = vmatprep.subr.bf16.mxu0 0
    %4028 = vmatpush1.bf16.msra.mxu0 %v3888
    %4029 = vmatprep.subr.bf16.mxu0 0
    %4030 = vmatpush1.bf16.msra.mxu0 %v3889
    %4031 = vmatprep.subr.bf16.mxu0 0
    %4032 = vmatpush1.bf16.msra.mxu0 %v3890
    %4033 = vmatprep.subr.bf16.mxu0 0
    %4034 = vmatpush1.bf16.msra.mxu0 %v3891
    %4035 = vmatprep.subr.bf16.mxu0 0
    %4036 = vmatpush1.bf16.msra.mxu0 %v3892
    %4037 = vmatprep.mubr.bf16.mxu0 %v3479
    %4038 = vmatmul.mubr.bf16.gmra.mrb[0].mxu0 %v3478
    %v4039 = vpop.f32.mrb[0].mxu0
    %v4040 = vadd.f32 %v3619, %v4039
    %v4041 = vpop.f32.mrb[0].mxu0
    %v4042 = vpop.f32.mrb[0].mxu0
    %v4043 = vpop.f32.mrb[0].mxu0
    %4044 = vdwg.mxu0
    %4045 = vmatprep.subr.bf16.mxu0 0
    %4046 = vmatpush1.bf16.msra.mxu0 %v3893
    %4047 = vmatprep.subr.bf16.mxu0 0
    %4048 = vmatpush1.bf16.msra.mxu0 %v3894
    %4049 = vmatprep.subr.bf16.mxu0 0
    %4050 = vmatpush1.bf16.msra.mxu0 %v3895
    %4051 = vmatprep.subr.bf16.mxu0 0
    %4052 = vmatpush1.bf16.msra.mxu0 %v3896
    %4053 = vmatprep.subr.bf16.mxu0 0
    %4054 = vmatpush1.bf16.msra.mxu0 %v3897
    %4055 = vmatprep.subr.bf16.mxu0 0
    %4056 = vmatpush1.bf16.msra.mxu0 %v3898
    %4057 = vmatprep.subr.bf16.mxu0 0
    %4058 = vmatpush1.bf16.msra.mxu0 %v3899
    %4059 = vmatprep.subr.bf16.mxu0 0
    %4060 = vmatpush1.bf16.msra.mxu0 %v3900
    %4061 = vmatprep.subr.bf16.mxu0 0
    %4062 = vmatpush1.bf16.msra.mxu0 %v3901
    %4063 = vmatprep.subr.bf16.mxu0 0
    %4064 = vmatpush1.bf16.msra.mxu0 %v3902
    %4065 = vmatprep.subr.bf16.mxu0 0
    %4066 = vmatpush1.bf16.msra.mxu0 %v3903
    %4067 = vmatprep.subr.bf16.mxu0 0
    %4068 = vmatpush1.bf16.msra.mxu0 %v3904
    %4069 = vmatprep.subr.bf16.mxu0 0
    %4070 = vmatpush1.bf16.msra.mxu0 %v3905
    %4071 = vmatprep.subr.bf16.mxu0 0
    %4072 = vmatpush1.bf16.msra.mxu0 %v3906
    %4073 = vmatprep.subr.bf16.mxu0 0
    %4074 = vmatpush1.bf16.msra.mxu0 %v3907
    %4075 = vmatprep.subr.bf16.mxu0 0
    %4076 = vmatpush1.bf16.msra.mxu0 %v3908
    %4077 = vmatprep.mubr.bf16.mxu0 %v3481
    %4078 = vmatmul.mubr.bf16.gmra.mrb[0].mxu0 %v3480
    %v4079 = vpop.f32.mrb[0].mxu0
    %v4080 = vadd.f32 %v4040, %v4079
    %v4081 = vpop.f32.mrb[0].mxu0
    %v4082 = vpop.f32.mrb[0].mxu0
    %v4083 = vpop.f32.mrb[0].mxu0
    %4084 = vdwg.mxu0
    %4085 = vmatprep.subr.bf16.mxu0 0
    %4086 = vmatpush1.bf16.msra.mxu0 %v3909
    %4087 = vmatprep.subr.bf16.mxu0 0
    %4088 = vmatpush1.bf16.msra.mxu0 %v3910
    %4089 = vmatprep.subr.bf16.mxu0 0
    %4090 = vmatpush1.bf16.msra.mxu0 %v3911
    %4091 = vmatprep.subr.bf16.mxu0 0
    %4092 = vmatpush1.bf16.msra.mxu0 %v3912
    %4093 = vmatprep.subr.bf16.mxu0 0
    %4094 = vmatpush1.bf16.msra.mxu0 %v3913
    %4095 = vmatprep.subr.bf16.mxu0 0
    %4096 = vmatpush1.bf16.msra.mxu0 %v3914
    %4097 = vmatprep.subr.bf16.mxu0 0
    %4098 = vmatpush1.bf16.msra.mxu0 %v3915
    %4099 = vmatprep.subr.bf16.mxu0 0
    %4100 = vmatpush1.bf16.msra.mxu0 %v3916
    %4101 = vmatprep.subr.bf16.mxu0 0
    %4102 = vmatpush1.bf16.msra.mxu0 %v3917
    %4103 = vmatprep.subr.bf16.mxu0 0
    %4104 = vmatpush1.bf16.msra.mxu0 %v3918
    %4105 = vmatprep.subr.bf16.mxu0 0
    %4106 = vmatpush1.bf16.msra.mxu0 %v3919
    %4107 = vmatprep.subr.bf16.mxu0 0
    %4108 = vmatpush1.bf16.msra.mxu0 %v3920
    %4109 = vmatprep.subr.bf16.mxu0 0
    %4110 = vmatpush1.bf16.msra.mxu0 %v3921
    %4111 = vmatprep.subr.bf16.mxu0 0
    %4112 = vmatpush1.bf16.msra.mxu0 %v3922
    %4113 = vmatprep.subr.bf16.mxu0 0
    %4114 = vmatpush1.bf16.msra.mxu0 %v3923
    %4115 = vmatprep.subr.bf16.mxu0 0
    %4116 = vmatpush1.bf16.msra.mxu0 %v3924
    %4117 = vmatprep.mubr.bf16.mxu0 %v3483
    %4118 = vmatmul.mubr.bf16.gmra.mrb[0].mxu0 %v3482
    %v4119 = vpop.f32.mrb[0].mxu0
    %v4120 = vadd.f32 %v4080, %v4119
    %v4121 = vpop.f32.mrb[0].mxu0
    %v4122 = vpop.f32.mrb[0].mxu0
    %v4123 = vpop.f32.mrb[0].mxu0
    %4124 = vdwg.mxu0
    %4125 = vmatprep.subr.bf16.mxu0 0
    %4126 = vmatpush1.bf16.msra.mxu0 %v3925
    %4127 = vmatprep.subr.bf16.mxu0 0
    %4128 = vmatpush1.bf16.msra.mxu0 %v3926
    %4129 = vmatprep.subr.bf16.mxu0 0
    %4130 = vmatpush1.bf16.msra.mxu0 %v3927
    %4131 = vmatprep.subr.bf16.mxu0 0
    %4132 = vmatpush1.bf16.msra.mxu0 %v3928
    %4133 = vmatprep.subr.bf16.mxu0 0
    %4134 = vmatpush1.bf16.msra.mxu0 %v3929
    %4135 = vmatprep.subr.bf16.mxu0 0
    %4136 = vmatpush1.bf16.msra.mxu0 %v3930
    %4137 = vmatprep.subr.bf16.mxu0 0
    %4138 = vmatpush1.bf16.msra.mxu0 %v3931
    %4139 = vmatprep.subr.bf16.mxu0 0
    %4140 = vmatpush1.bf16.msra.mxu0 %v3932
    %4141 = vmatprep.subr.bf16.mxu0 0
    %4142 = vmatpush1.bf16.msra.mxu0 %v3933
    %4143 = vmatprep.subr.bf16.mxu0 0
    %4144 = vmatpush1.bf16.msra.mxu0 %v3934
    %4145 = vmatprep.subr.bf16.mxu0 0
    %4146 = vmatpush1.bf16.msra.mxu0 %v3935
    %4147 = vmatprep.subr.bf16.mxu0 0
    %4148 = vmatpush1.bf16.msra.mxu0 %v3936
    %4149 = vmatprep.subr.bf16.mxu0 0
    %4150 = vmatpush1.bf16.msra.mxu0 %v3937
    %4151 = vmatprep.subr.bf16.mxu0 0
    %4152 = vmatpush1.bf16.msra.mxu0 %v3938
    %4153 = vmatprep.subr.bf16.mxu0 0
    %4154 = vmatpush1.bf16.msra.mxu0 %v3939
    %4155 = vmatprep.subr.bf16.mxu0 0
    %4156 = vmatpush1.bf16.msra.mxu0 %v3940
    %4157 = vmatprep.mubr.bf16.mxu0 %v3485
    %4158 = vmatmul.mubr.bf16.gmra.mrb[0].mxu0 %v3484
    %v4159 = vpop.f32.mrb[0].mxu0
    %v4160 = vadd.f32 %v4120, %v4159
    %v4161 = vpop.f32.mrb[0].mxu0
    %v4162 = vpop.f32.mrb[0].mxu0
    %v4163 = vpop.f32.mrb[0].mxu0
    %4164 = vdwg.mxu0
    %v4165 = vtanh.pop %v4160
    %4166 = vst [vmem:[%s7] sm:$0xff] %v4165
    // Predicated region
    $region50: #{generator_forward.1} parent=1 // pred_check
      _
    $region51: #{generator_forward.1} parent=1 // pred_check_branch
      %4168 = sbr.rel (0) target = $region53
    $region52: #{generator_forward.1} parent=1 // pred_region
      _
    $region53: #{generator_forward.1} parent=1 // pred_fallthru
      _
    // Predicated region
    $region54: #{generator_forward.1} parent=1 // pred_check
      _
    $region55: #{generator_forward.1} parent=1 // pred_check_branch
      %4170 = sbr.rel (0) target = $region57
    $region56: #{generator_forward.1} parent=1 // pred_region
      _
    $region57: #{generator_forward.1} parent=1 // pred_fallthru
      _
    %4171 = vsyncpa [#allocation3], 1
    %4172 = vsyncpa [#allocation5], 1
    %4173 = vsyncpa [#allocation8], 1

</llo_original>
